<compile_context>
chip_gen: v7x
topology: tpu7x:2x2x1
jax: 0.10.0
libtpu: 0.0.40
codegen_flags: <defaults>
</compile_context>

<pallas_src>
import functools

import jax
import jax.numpy as jnp
import numpy as np
from jax import lax
from jax.experimental import pallas as pl
from jax.experimental.pallas import tpu as pltpu


def _round_up(x, m):
    return ((x + m - 1) // m) * m


def _modconv_kernel(wmod_ref, x_hbm, o_ref, xshift_ref, acc_ref, dma_sem, *,
                    H, W, K, ICp, OCp, TH, pad, compute_dtype):
    # wmod_ref  : (K*K, ICp, OCp)    per-batch modulated weight (compute_dtype)
    # x_hbm     : (B, H, W, ICp)     activation, left in HBM (memory_space=ANY)
    # o_ref     : (TH, W, OCp)       output row tile for this batch
    # xshift_ref: (K, H+2p, W, ICp)  scratch: K width-shifted, height-padded slabs
    # acc_ref   : (TH*W, OCp)        scratch: f32 accumulator
    # dma_sem   : (K,)               DMA semaphores
    b = pl.program_id(0)
    t = pl.program_id(1)
    Hp = H + 2 * pad

    # ---- once per batch: stage the activation into K width-shifted slabs ----
    # slab[kx][h, w, :] == zero-padded-x[h, w + kx, :], so every tap below is a
    # contiguous leading-axis slice (no per-tap relayout copies).
    @pl.when(t == 0)
    def _():
        # zero only the thin halo border; the interior is overwritten by the DMAs.
        # (done per batch because each core of a megacore grid owns its own scratch)
        if pad > 0:
            zrow = jnp.zeros((pad, W, ICp), compute_dtype)
            for kx in range(K):
                xshift_ref[kx, 0:pad, :, :] = zrow
                xshift_ref[kx, pad + H:pad + H + pad, :, :] = zrow
                lz = max(0, pad - kx)          # left zero strip width
                rz = max(0, kx - pad)          # right zero strip width
                if lz:
                    xshift_ref[kx, :, 0:lz, :] = jnp.zeros((Hp, lz, ICp), compute_dtype)
                if rz:
                    xshift_ref[kx, :, W - rz:W, :] = jnp.zeros((Hp, rz, ICp), compute_dtype)

        # K direct HBM -> VMEM DMAs: no intermediate VMEM image, no VMEM->VMEM
        # pad-copy pass.  Source/destination column windows implement the shift.
        copies = []
        for kx in range(K):
            shift = kx - pad
            wv = W - abs(shift)
            s0 = max(0, shift)                 # source column start
            d0 = max(0, -shift)                # destination column start
            cp = pltpu.make_async_copy(
                x_hbm.at[pl.ds(b, 1), :, pl.ds(s0, wv), :],
                xshift_ref.at[pl.ds(kx, 1), pl.ds(pad, H), pl.ds(d0, wv), :],
                dma_sem.at[kx])
            cp.start()
            copies.append(cp)
        for cp in copies:
            cp.wait()

    # ---- per row tile: K*K shifted-window MXU matmuls, f32 VMEM accumulator ----
    r0 = pl.multiple_of(t * TH, TH)
    first = True
    for ky in range(K):
        for kx in range(K):
            # contiguous view: full (W, ICp) trailing dims -> free reshape
            patch = xshift_ref[kx, pl.ds(r0 + ky, TH), :, :].reshape(TH * W, ICp)
            contrib = jnp.dot(patch, wmod_ref[ky * K + kx],
                              preferred_element_type=jnp.float32)
            if first:
                acc_ref[...] = contrib
                first = False
            else:
                acc_ref[...] += contrib
    o_ref[...] = acc_ref[...].reshape(TH, W, OCp).astype(o_ref.dtype)


def modulated_conv2d(x_nchw, style, weight, mod_w, mod_b, *,
                     demodulate=True, compute_dtype=jnp.bfloat16, row_tile=None):
    """x_nchw: (B, IC, H, W); style: (B, SD).
    weight: (1, OC, IC, K, K) torch-style base weight.
    mod_w: (IC, SD) torch-style Linear weight; mod_b: (IC,).
    Returns (B, OC, H, W) in x_nchw.dtype."""
    B, IC, H, W = x_nchw.shape
    _, OC, IC_w, K, K2 = weight.shape
    assert IC_w == IC and K == K2
    assert K % 2 == 1, "even kernel sizes change the output size; only odd K supported"
    pad = K // 2
    scale = 1.0 / np.sqrt(IC * K * K)

    ICp = _round_up(IC, 128)        # lane-pad channels: full-width MXU, dense stores
    OCp = _round_up(OC, 128)
    Wa = _round_up(W, 8)            # sublane-align the image width
    Hp = H + 2 * pad

    # ---- pre-pass (hoisted out of the hot kernel, tiny f32 work):
    #      style linear -> per-batch modulated (+demodulated) weight. ----
    s = jnp.dot(style.astype(jnp.float32), mod_w.astype(jnp.float32).T,
                precision=lax.Precision.HIGHEST) + mod_b.astype(jnp.float32)      # (B, IC)
    w = scale * weight[0].astype(jnp.float32)                                     # (OC, IC, K, K)
    wmod = w[None] * s[:, None, :, None, None]                                    # (B, OC, IC, K, K)
    if demodulate:
        demod = lax.rsqrt(jnp.sum(wmod * wmod, axis=(2, 3, 4), keepdims=True) + 1e-8)
        wmod = wmod * demod
    wmod = jnp.transpose(wmod, (0, 3, 4, 2, 1))                                   # (B, K, K, IC, OC)
    wmod = jnp.pad(wmod, ((0, 0), (0, 0), (0, 0), (0, ICp - IC), (0, OCp - OC)))
    wmod_taps = wmod.reshape(B, K * K, ICp, OCp).astype(compute_dtype)

    # ---- activation layout: NHWC, lane-pad IC, sublane-align W (zero fill). ----
    x_nhwc = jnp.transpose(x_nchw, (0, 2, 3, 1)).astype(compute_dtype)
    x_nhwc = jnp.pad(x_nhwc, ((0, 0), (0, 0), (0, Wa - W), (0, ICp - IC)))        # (B, H, Wa, ICp)

    # ---- row-tile height: target MXU M-dim ~512 (v6e/v7x) with a capped f32 acc.
    # TODO(synk): on v5e an M of ~128 already fills the 128-wide MXU; a per-chip
    #             target would shrink the accumulator there.
    if row_tile is None:
        acc_cap = max(1, (2 * 2 ** 20) // (Wa * OCp * 4))
        row_tile = max(1, min(max(1, 512 // Wa), acc_cap))
    TH = max(1, min(row_tile, H))
    while H % TH:
        TH -= 1
    n_tiles = H // TH

    kernel = functools.partial(_modconv_kernel, H=H, W=Wa, K=K, ICp=ICp, OCp=OCp,
                               TH=TH, pad=pad, compute_dtype=compute_dtype)

    # ---- VMEM budget (single activation staging copy, compute-dtype weights),
    #      clamped to the chip's physical VMEM (v7x: 64 MiB / TensorCore). ----
    cdb = jnp.dtype(compute_dtype).itemsize
    odb = jnp.dtype(x_nchw.dtype).itemsize
    est = (2 * K * K * ICp * OCp * cdb       # modulated-weight blocks (double-buffered)
           + 2 * TH * Wa * OCp * odb         # output row-tile blocks
           + K * Hp * Wa * ICp * cdb         # shifted activation slabs (scratch)
           + TH * Wa * OCp * 4)              # f32 accumulator (scratch)
    try:
        phys = pltpu.get_tpu_info().vmem_capacity_bytes
    except Exception:
        phys = 64 * 2 ** 20
    vmem_limit = int(min(int(0.75 * phys), max(32 * 2 ** 20, 2 * est)))

    out_nhwc = pl.pallas_call(
        kernel,
        out_shape=jax.ShapeDtypeStruct((B, H, Wa, OCp), x_nchw.dtype),
        grid_spec=pltpu.PrefetchScalarGridSpec(
            num_scalar_prefetch=0,
            grid=(B, n_tiles),
            in_specs=[
                pl.BlockSpec((None, K * K, ICp, OCp), lambda b, t: (b, 0, 0, 0)),
                pl.BlockSpec(memory_space=pl.ANY),        # activation stays in HBM
            ],
            out_specs=pl.BlockSpec((None, TH, Wa, OCp), lambda b, t: (b, t, 0, 0)),
            scratch_shapes=[
                pltpu.VMEM((K, Hp, Wa, ICp), compute_dtype),   # width-shifted slabs
                pltpu.VMEM((TH * Wa, OCp), jnp.float32),       # f32 accumulator
                pltpu.SemaphoreType.DMA((K,)),
            ],
        ),
        compiler_params=pltpu.CompilerParams(
            dimension_semantics=("parallel", "arbitrary"),
            vmem_limit_bytes=vmem_limit),
    )(wmod_taps, x_nhwc)

    # drop width/lane padding, back to NCHW to match the PyTorch convention
    return jnp.transpose(out_nhwc[:, :, :W, :OC], (0, 3, 1, 2))


def _reference(x_nchw, style, weight, mod_w, mod_b, *, demodulate=True):
    """Pure-JAX reference mirroring the PyTorch forward (grouped conv)."""
    B, IC, H, W = x_nchw.shape
    _, OC, _, K, _ = weight.shape
    pad = K // 2
    scale = 1.0 / np.sqrt(IC * K * K)
    s = jnp.dot(style, mod_w.T, precision=lax.Precision.HIGHEST) + mod_b        # (B, IC)
    w = scale * weight * s.reshape(B, 1, IC, 1, 1)                              # (B,OC,IC,K,K)
    if demodulate:
        demod = lax.rsqrt(jnp.sum(w * w, axis=(2, 3, 4)) + 1e-8)                # (B, OC)
        w = w * demod.reshape(B, OC, 1, 1, 1)
    outs = []
    for b in range(B):
        o = lax.conv_general_dilated(
            x_nchw[b:b + 1], w[b], window_strides=(1, 1),
            padding=((pad, pad), (pad, pad)),
            dimension_numbers=("NCHW", "OIHW", "NCHW"),
            precision=lax.Precision.HIGHEST)
        outs.append(o)
    return jnp.concatenate(outs, axis=0)


if __name__ == "__main__":
    B, IC, OC, K, SD, H, W = 2, 4, 8, 3, 8, 16, 16

    key = jax.random.PRNGKey(0)
    k1, k2, k3, k4, k5 = jax.random.split(key, 5)
    x = jax.random.normal(k1, (B, IC, H, W), jnp.float32)            # NCHW, like PyTorch
    style = jax.random.normal(k2, (B, SD), jnp.float32)
    weight = jax.random.normal(k3, (1, OC, IC, K, K), jnp.float32)   # torch.randn init
    mod_w = jax.random.normal(k4, (IC, SD), jnp.float32) * (1.0 / np.sqrt(SD))
    mod_b = jax.random.normal(k5, (IC,), jnp.float32) * 0.01

    ref = _reference(x, style, weight, mod_w, mod_b, demodulate=True)

    # 1) f32 compute path, explicit row_tile=8 so the multi-tile path is exercised.
    out_f32 = modulated_conv2d(x, style, weight, mod_w, mod_b,
                               demodulate=True, compute_dtype=jnp.float32,
                               row_tile=8)
    out_f32 = jax.block_until_ready(out_f32)
    np.testing.assert_allclose(np.asarray(out_f32), np.asarray(ref),
                               rtol=2e-2, atol=2e-2)

    # 2) fast path: bf16 MXU feed, f32 modulation/demod/accumulation, auto tile.
    out_bf16 = modulated_conv2d(x, style, weight, mod_w, mod_b,
                                demodulate=True, compute_dtype=jnp.bfloat16)
    out_bf16 = jax.block_until_ready(out_bf16)
    np.testing.assert_allclose(np.asarray(out_bf16), np.asarray(ref),
                               rtol=6e-2, atol=6e-2)

    print("KERNEL_OK")
</pallas_src>

<mosaic_0001>
module attributes {stable_mosaic.version = 11 : i64} {
  func.func @_modconv_kernel(%arg0: i32, %arg1: i32, %arg2: memref<1x9x128x128xf32, #tpu.memory_space<vmem>>, %arg3: memref<2x16x16x128xf32, #tpu.memory_space<any>>, %arg4: memref<1x8x16x128xf32, #tpu.memory_space<vmem>>, %arg5: memref<3x18x16x128xf32, #tpu.memory_space<vmem>>, %arg6: memref<128x128xf32, #tpu.memory_space<vmem>>, %arg7: memref<3x!tpu.dma_semaphore, #tpu.memory_space<semaphore_mem>>) attributes {dimension_semantics = [#tpu.dimension_semantics<parallel>, #tpu.dimension_semantics<arbitrary>], iteration_bounds = array<i64: 2, 2>, scalar_prefetch = 0 : i64, scratch_operands = 3 : i64, tpu.core_type = #tpu.core_type<tc>, window_params = [{transform_indices = @transform_0, window_bounds = array<i64: 1, 9, 128, 128>}, {}, {transform_indices = @transform_2, window_bounds = array<i64: 1, 8, 16, 128>}]} {
    %c0_i32 = arith.constant 0 : i32
    %0 = arith.cmpi eq, %arg1, %c0_i32 : i32
    %1 = arith.extui %0 : i1 to i32
    %c0_i32_0 = arith.constant 0 : i32
    %2 = arith.cmpi ne, %1, %c0_i32_0 : i32
    scf.if %2 {
      %cst_110 = arith.constant 0.000000e+00 : f32
      %107 = vector.broadcast %cst_110 : f32 to vector<1x16x128xf32>
      %c0_111 = arith.constant 0 : index
      %c0_112 = arith.constant 0 : index
      %c0_113 = arith.constant 0 : index
      %c0_114 = arith.constant 0 : index
      %108 = vector.load %arg5[%c0_111, %c0_112, %c0_113, %c0_114] : memref<3x18x16x128xf32, #tpu.memory_space<vmem>>, vector<1x1x16x128xf32>
      %109 = vector.shape_cast %108 : vector<1x1x16x128xf32> to vector<1x16x128xf32>
      %110 = vector.shape_cast %107 : vector<1x16x128xf32> to vector<1x1x16x128xf32>
      tpu.vector_store %arg5[%c0_111, %c0_112, %c0_113, %c0_114], %110 {strides = array<i32>} : memref<3x18x16x128xf32, #tpu.memory_space<vmem>>, vector<1x1x16x128xf32>,
      %c0_115 = arith.constant 0 : index
      %c17 = arith.constant 17 : index
      %c0_116 = arith.constant 0 : index
      %c0_117 = arith.constant 0 : index
      %111 = vector.load %arg5[%c0_115, %c17, %c0_116, %c0_117] : memref<3x18x16x128xf32, #tpu.memory_space<vmem>>, vector<1x1x16x128xf32>
      %112 = vector.shape_cast %111 : vector<1x1x16x128xf32> to vector<1x16x128xf32>
      %113 = vector.shape_cast %107 : vector<1x16x128xf32> to vector<1x1x16x128xf32>
      tpu.vector_store %arg5[%c0_115, %c17, %c0_116, %c0_117], %113 {strides = array<i32>} : memref<3x18x16x128xf32, #tpu.memory_space<vmem>>, vector<1x1x16x128xf32>,
      %cst_118 = arith.constant 0.000000e+00 : f32
      %114 = vector.broadcast %cst_118 : f32 to vector<18x1x128xf32>
      %c0_119 = arith.constant 0 : index
      %c0_120 = arith.constant 0 : index
      %c0_121 = arith.constant 0 : index
      %c0_122 = arith.constant 0 : index
      %115 = vector.load %arg5[%c0_119, %c0_120, %c0_121, %c0_122] : memref<3x18x16x128xf32, #tpu.memory_space<vmem>>, vector<1x18x1x128xf32>
      %116 = vector.shape_cast %115 : vector<1x18x1x128xf32> to vector<18x1x128xf32>
      %117 = vector.shape_cast %114 : vector<18x1x128xf32> to vector<1x18x1x128xf32>
      tpu.vector_store %arg5[%c0_119, %c0_120, %c0_121, %c0_122], %117 {strides = array<i32>} : memref<3x18x16x128xf32, #tpu.memory_space<vmem>>, vector<1x18x1x128xf32>,
      %c1_123 = arith.constant 1 : index
      %c0_124 = arith.constant 0 : index
      %c0_125 = arith.constant 0 : index
      %c0_126 = arith.constant 0 : index
      %118 = vector.load %arg5[%c1_123, %c0_124, %c0_125, %c0_126] : memref<3x18x16x128xf32, #tpu.memory_space<vmem>>, vector<1x1x16x128xf32>
      %119 = vector.shape_cast %118 : vector<1x1x16x128xf32> to vector<1x16x128xf32>
      %120 = vector.shape_cast %107 : vector<1x16x128xf32> to vector<1x1x16x128xf32>
      tpu.vector_store %arg5[%c1_123, %c0_124, %c0_125, %c0_126], %120 {strides = array<i32>} : memref<3x18x16x128xf32, #tpu.memory_space<vmem>>, vector<1x1x16x128xf32>,
      %c1_127 = arith.constant 1 : index
      %c17_128 = arith.constant 17 : index
      %c0_129 = arith.constant 0 : index
      %c0_130 = arith.constant 0 : index
      %121 = vector.load %arg5[%c1_127, %c17_128, %c0_129, %c0_130] : memref<3x18x16x128xf32, #tpu.memory_space<vmem>>, vector<1x1x16x128xf32>
      %122 = vector.shape_cast %121 : vector<1x1x16x128xf32> to vector<1x16x128xf32>
      %123 = vector.shape_cast %107 : vector<1x16x128xf32> to vector<1x1x16x128xf32>
      tpu.vector_store %arg5[%c1_127, %c17_128, %c0_129, %c0_130], %123 {strides = array<i32>} : memref<3x18x16x128xf32, #tpu.memory_space<vmem>>, vector<1x1x16x128xf32>,
      %c2_131 = arith.constant 2 : index
      %c0_132 = arith.constant 0 : index
      %c0_133 = arith.constant 0 : index
      %c0_134 = arith.constant 0 : index
      %124 = vector.load %arg5[%c2_131, %c0_132, %c0_133, %c0_134] : memref<3x18x16x128xf32, #tpu.memory_space<vmem>>, vector<1x1x16x128xf32>
      %125 = vector.shape_cast %124 : vector<1x1x16x128xf32> to vector<1x16x128xf32>
      %126 = vector.shape_cast %107 : vector<1x16x128xf32> to vector<1x1x16x128xf32>
      tpu.vector_store %arg5[%c2_131, %c0_132, %c0_133, %c0_134], %126 {strides = array<i32>} : memref<3x18x16x128xf32, #tpu.memory_space<vmem>>, vector<1x1x16x128xf32>,
      %c2_135 = arith.constant 2 : index
      %c17_136 = arith.constant 17 : index
      %c0_137 = arith.constant 0 : index
      %c0_138 = arith.constant 0 : index
      %127 = vector.load %arg5[%c2_135, %c17_136, %c0_137, %c0_138] : memref<3x18x16x128xf32, #tpu.memory_space<vmem>>, vector<1x1x16x128xf32>
      %128 = vector.shape_cast %127 : vector<1x1x16x128xf32> to vector<1x16x128xf32>
      %129 = vector.shape_cast %107 : vector<1x16x128xf32> to vector<1x1x16x128xf32>
      tpu.vector_store %arg5[%c2_135, %c17_136, %c0_137, %c0_138], %129 {strides = array<i32>} : memref<3x18x16x128xf32, #tpu.memory_space<vmem>>, vector<1x1x16x128xf32>,
      %cst_139 = arith.constant 0.000000e+00 : f32
      %130 = vector.broadcast %cst_139 : f32 to vector<18x1x128xf32>
      %c2_140 = arith.constant 2 : index
      %c0_141 = arith.constant 0 : index
      %c15 = arith.constant 15 : index
      %c0_142 = arith.constant 0 : index
      %131 = vector.load %arg5[%c2_140, %c0_141, %c15, %c0_142] : memref<3x18x16x128xf32, #tpu.memory_space<vmem>>, vector<1x18x1x128xf32>
      %132 = vector.shape_cast %131 : vector<1x18x1x128xf32> to vector<18x1x128xf32>
      %133 = vector.shape_cast %130 : vector<18x1x128xf32> to vector<1x18x1x128xf32>
      tpu.vector_store %arg5[%c2_140, %c0_141, %c15, %c0_142], %133 {strides = array<i32>} : memref<3x18x16x128xf32, #tpu.memory_space<vmem>>, vector<1x18x1x128xf32>,
      %c0_i32_143 = arith.constant 0 : i32
      %c0_i32_144 = arith.constant 0 : i32
      %c0_i32_145 = arith.constant 0 : i32
      %c0_i32_146 = arith.constant 0 : i32
      %134 = tpu.memref_slice %arg3[%arg0, %c0_i32_144, %c0_i32_145, %c0_i32_146] : memref<2x16x16x128xf32, #tpu.memory_space<any>> -> memref<1x16x15x128xf32, #tpu.memory_space<any>>
      %c0_i32_147 = arith.constant 0 : i32
      %c1_i32_148 = arith.constant 1 : i32
      %c1_i32_149 = arith.constant 1 : i32
      %c0_i32_150 = arith.constant 0 : i32
      %135 = tpu.memref_slice %arg5[%c0_i32_147, %c1_i32_148, %c1_i32_149, %c0_i32_150] : memref<3x18x16x128xf32, #tpu.memory_space<vmem>> -> memref<1x16x15x128xf32, #tpu.memory_space<vmem>>
      %136 = tpu.memref_slice %arg7[%c0_i32_143] : memref<3x!tpu.dma_semaphore, #tpu.memory_space<semaphore_mem>> -> memref<1x!tpu.dma_semaphore, #tpu.memory_space<semaphore_mem>>
      %137 = tpu.memref_squeeze %136 : memref<1x!tpu.dma_semaphore, #tpu.memory_space<semaphore_mem>> -> memref<!tpu.dma_semaphore, #tpu.memory_space<semaphore_mem>>
      tpu.enqueue_dma source(%134 : memref<1x16x15x128xf32, #tpu.memory_space<any>>) target(%135 : memref<1x16x15x128xf32, #tpu.memory_space<vmem>>) target_semaphore(%137 : memref<!tpu.dma_semaphore, #tpu.memory_space<semaphore_mem>>)
      %c1_i32_151 = arith.constant 1 : i32
      %c0_i32_152 = arith.constant 0 : i32
      %c0_i32_153 = arith.constant 0 : i32
      %c0_i32_154 = arith.constant 0 : i32
      %138 = tpu.memref_slice %arg3[%arg0, %c0_i32_152, %c0_i32_153, %c0_i32_154] : memref<2x16x16x128xf32, #tpu.memory_space<any>> -> memref<1x16x16x128xf32, #tpu.memory_space<any>>
      %c1_i32_155 = arith.constant 1 : i32
      %c1_i32_156 = arith.constant 1 : i32
      %c0_i32_157 = arith.constant 0 : i32
      %c0_i32_158 = arith.constant 0 : i32
      %139 = tpu.memref_slice %arg5[%c1_i32_155, %c1_i32_156, %c0_i32_157, %c0_i32_158] : memref<3x18x16x128xf32, #tpu.memory_space<vmem>> -> memref<1x16x16x128xf32, #tpu.memory_space<vmem>>
      %140 = tpu.memref_slice %arg7[%c1_i32_151] : memref<3x!tpu.dma_semaphore, #tpu.memory_space<semaphore_mem>> -> memref<1x!tpu.dma_semaphore, #tpu.memory_space<semaphore_mem>>
      %141 = tpu.memref_squeeze %140 : memref<1x!tpu.dma_semaphore, #tpu.memory_space<semaphore_mem>> -> memref<!tpu.dma_semaphore, #tpu.memory_space<semaphore_mem>>
      tpu.enqueue_dma source(%138 : memref<1x16x16x128xf32, #tpu.memory_space<any>>) target(%139 : memref<1x16x16x128xf32, #tpu.memory_space<vmem>>) target_semaphore(%141 : memref<!tpu.dma_semaphore, #tpu.memory_space<semaphore_mem>>)
      %c2_i32_159 = arith.constant 2 : i32
      %c0_i32_160 = arith.constant 0 : i32
      %c1_i32_161 = arith.constant 1 : i32
      %c0_i32_162 = arith.constant 0 : i32
      %142 = tpu.memref_slice %arg3[%arg0, %c0_i32_160, %c1_i32_161, %c0_i32_162] : memref<2x16x16x128xf32, #tpu.memory_space<any>> -> memref<1x16x15x128xf32, #tpu.memory_space<any>>
      %c2_i32_163 = arith.constant 2 : i32
      %c1_i32_164 = arith.constant 1 : i32
      %c0_i32_165 = arith.constant 0 : i32
      %c0_i32_166 = arith.constant 0 : i32
      %143 = tpu.memref_slice %arg5[%c2_i32_163, %c1_i32_164, %c0_i32_165, %c0_i32_166] : memref<3x18x16x128xf32, #tpu.memory_space<vmem>> -> memref<1x16x15x128xf32, #tpu.memory_space<vmem>>
      %144 = tpu.memref_slice %arg7[%c2_i32_159] : memref<3x!tpu.dma_semaphore, #tpu.memory_space<semaphore_mem>> -> memref<1x!tpu.dma_semaphore, #tpu.memory_space<semaphore_mem>>
      %145 = tpu.memref_squeeze %144 : memref<1x!tpu.dma_semaphore, #tpu.memory_space<semaphore_mem>> -> memref<!tpu.dma_semaphore, #tpu.memory_space<semaphore_mem>>
      tpu.enqueue_dma source(%142 : memref<1x16x15x128xf32, #tpu.memory_space<any>>) target(%143 : memref<1x16x15x128xf32, #tpu.memory_space<vmem>>) target_semaphore(%145 : memref<!tpu.dma_semaphore, #tpu.memory_space<semaphore_mem>>)
      %c0_i32_167 = arith.constant 0 : i32
      %c0_i32_168 = arith.constant 0 : i32
      %c0_i32_169 = arith.constant 0 : i32
      %c0_i32_170 = arith.constant 0 : i32
      %146 = tpu.memref_slice %arg3[%arg0, %c0_i32_168, %c0_i32_169, %c0_i32_170] : memref<2x16x16x128xf32, #tpu.memory_space<any>> -> memref<1x16x15x128xf32, #tpu.memory_space<any>>
      %c0_i32_171 = arith.constant 0 : i32
      %c1_i32_172 = arith.constant 1 : i32
      %c1_i32_173 = arith.constant 1 : i32
      %c0_i32_174 = arith.constant 0 : i32
      %147 = tpu.memref_slice %arg5[%c0_i32_171, %c1_i32_172, %c1_i32_173, %c0_i32_174] : memref<3x18x16x128xf32, #tpu.memory_space<vmem>> -> memref<1x16x15x128xf32, #tpu.memory_space<vmem>>
      %148 = tpu.memref_slice %arg7[%c0_i32_167] : memref<3x!tpu.dma_semaphore, #tpu.memory_space<semaphore_mem>> -> memref<1x!tpu.dma_semaphore, #tpu.memory_space<semaphore_mem>>
      %149 = tpu.memref_squeeze %148 : memref<1x!tpu.dma_semaphore, #tpu.memory_space<semaphore_mem>> -> memref<!tpu.dma_semaphore, #tpu.memory_space<semaphore_mem>>
      tpu.wait_dma2 semaphore(%149 : memref<!tpu.dma_semaphore, #tpu.memory_space<semaphore_mem>>) src(%146 : memref<1x16x15x128xf32, #tpu.memory_space<any>>) dst(%147 : memref<1x16x15x128xf32, #tpu.memory_space<vmem>>)
      %c1_i32_175 = arith.constant 1 : i32
      %c0_i32_176 = arith.constant 0 : i32
      %c0_i32_177 = arith.constant 0 : i32
      %c0_i32_178 = arith.constant 0 : i32
      %150 = tpu.memref_slice %arg3[%arg0, %c0_i32_176, %c0_i32_177, %c0_i32_178] : memref<2x16x16x128xf32, #tpu.memory_space<any>> -> memref<1x16x16x128xf32, #tpu.memory_space<any>>
      %c1_i32_179 = arith.constant 1 : i32
      %c1_i32_180 = arith.constant 1 : i32
      %c0_i32_181 = arith.constant 0 : i32
      %c0_i32_182 = arith.constant 0 : i32
      %151 = tpu.memref_slice %arg5[%c1_i32_179, %c1_i32_180, %c0_i32_181, %c0_i32_182] : memref<3x18x16x128xf32, #tpu.memory_space<vmem>> -> memref<1x16x16x128xf32, #tpu.memory_space<vmem>>
      %152 = tpu.memref_slice %arg7[%c1_i32_175] : memref<3x!tpu.dma_semaphore, #tpu.memory_space<semaphore_mem>> -> memref<1x!tpu.dma_semaphore, #tpu.memory_space<semaphore_mem>>
      %153 = tpu.memref_squeeze %152 : memref<1x!tpu.dma_semaphore, #tpu.memory_space<semaphore_mem>> -> memref<!tpu.dma_semaphore, #tpu.memory_space<semaphore_mem>>
      tpu.wait_dma2 semaphore(%153 : memref<!tpu.dma_semaphore, #tpu.memory_space<semaphore_mem>>) src(%150 : memref<1x16x16x128xf32, #tpu.memory_space<any>>) dst(%151 : memref<1x16x16x128xf32, #tpu.memory_space<vmem>>)
      %c2_i32_183 = arith.constant 2 : i32
      %c0_i32_184 = arith.constant 0 : i32
      %c1_i32_185 = arith.constant 1 : i32
      %c0_i32_186 = arith.constant 0 : i32
      %154 = tpu.memref_slice %arg3[%arg0, %c0_i32_184, %c1_i32_185, %c0_i32_186] : memref<2x16x16x128xf32, #tpu.memory_space<any>> -> memref<1x16x15x128xf32, #tpu.memory_space<any>>
      %c2_i32_187 = arith.constant 2 : i32
      %c1_i32_188 = arith.constant 1 : i32
      %c0_i32_189 = arith.constant 0 : i32
      %c0_i32_190 = arith.constant 0 : i32
      %155 = tpu.memref_slice %arg5[%c2_i32_187, %c1_i32_188, %c0_i32_189, %c0_i32_190] : memref<3x18x16x128xf32, #tpu.memory_space<vmem>> -> memref<1x16x15x128xf32, #tpu.memory_space<vmem>>
      %156 = tpu.memref_slice %arg7[%c2_i32_183] : memref<3x!tpu.dma_semaphore, #tpu.memory_space<semaphore_mem>> -> memref<1x!tpu.dma_semaphore, #tpu.memory_space<semaphore_mem>>
      %157 = tpu.memref_squeeze %156 : memref<1x!tpu.dma_semaphore, #tpu.memory_space<semaphore_mem>> -> memref<!tpu.dma_semaphore, #tpu.memory_space<semaphore_mem>>
      tpu.wait_dma2 semaphore(%157 : memref<!tpu.dma_semaphore, #tpu.memory_space<semaphore_mem>>) src(%154 : memref<1x16x15x128xf32, #tpu.memory_space<any>>) dst(%155 : memref<1x16x15x128xf32, #tpu.memory_space<vmem>>)
    } else {
    }
    %c8_i32 = arith.constant 8 : i32
    %3 = arith.muli %arg1, %c8_i32 : i32
    %4 = tpu.assume_multiple %3, 8 : i32
    %c0_i32_1 = arith.constant 0 : i32
    %5 = arith.addi %4, %c0_i32_1 : i32
    %c0 = arith.constant 0 : index
    %6 = arith.index_cast %5 : i32 to index
    %c0_2 = arith.constant 0 : index
    %c0_3 = arith.constant 0 : index
    %7 = vector.load %arg5[%c0, %6, %c0_2, %c0_3] : memref<3x18x16x128xf32, #tpu.memory_space<vmem>>, vector<1x8x16x128xf32>
    %8 = vector.shape_cast %7 : vector<1x8x16x128xf32> to vector<8x16x128xf32>
    %9 = vector.shape_cast %8 : vector<8x16x128xf32> to vector<128x128xf32>
    %c0_4 = arith.constant 0 : index
    %c0_5 = arith.constant 0 : index
    %c0_6 = arith.constant 0 : index
    %c0_7 = arith.constant 0 : index
    %10 = vector.load %arg2[%c0_4, %c0_5, %c0_6, %c0_7] : memref<1x9x128x128xf32, #tpu.memory_space<vmem>>, vector<1x1x128x128xf32>
    %11 = vector.shape_cast %10 : vector<1x1x128x128xf32> to vector<128x128xf32>
    %cst = arith.constant dense<0.000000e+00> : vector<128x128xf32>
    %12 = tpu.matmul %9, %11, %cst {dimension_numbers = #tpu.dot_dimension_numbers<[1], [0], [0], [1], [0, 0, 1, 1], [], []>} : vector<128x128xf32>, vector<128x128xf32>, vector<128x128xf32> -> vector<128x128xf32>
    %c0_8 = arith.constant 0 : index
    %c0_9 = arith.constant 0 : index
    %13 = vector.load %arg6[%c0_8, %c0_9] : memref<128x128xf32, #tpu.memory_space<vmem>>, vector<128x128xf32>
    tpu.vector_store %arg6[%c0_8, %c0_9], %12 {strides = array<i32>} : memref<128x128xf32, #tpu.memory_space<vmem>>, vector<128x128xf32>,
    %c0_i32_10 = arith.constant 0 : i32
    %14 = arith.addi %4, %c0_i32_10 : i32
    %c1 = arith.constant 1 : index
    %15 = arith.index_cast %14 : i32 to index
    %c0_11 = arith.constant 0 : index
    %c0_12 = arith.constant 0 : index
    %16 = vector.load %arg5[%c1, %15, %c0_11, %c0_12] : memref<3x18x16x128xf32, #tpu.memory_space<vmem>>, vector<1x8x16x128xf32>
    %17 = vector.shape_cast %16 : vector<1x8x16x128xf32> to vector<8x16x128xf32>
    %18 = vector.shape_cast %17 : vector<8x16x128xf32> to vector<128x128xf32>
    %c0_13 = arith.constant 0 : index
    %c1_14 = arith.constant 1 : index
    %c0_15 = arith.constant 0 : index
    %c0_16 = arith.constant 0 : index
    %19 = vector.load %arg2[%c0_13, %c1_14, %c0_15, %c0_16] : memref<1x9x128x128xf32, #tpu.memory_space<vmem>>, vector<1x1x128x128xf32>
    %20 = vector.shape_cast %19 : vector<1x1x128x128xf32> to vector<128x128xf32>
    %cst_17 = arith.constant dense<0.000000e+00> : vector<128x128xf32>
    %21 = tpu.matmul %18, %20, %cst_17 {dimension_numbers = #tpu.dot_dimension_numbers<[1], [0], [0], [1], [0, 0, 1, 1], [], []>} : vector<128x128xf32>, vector<128x128xf32>, vector<128x128xf32> -> vector<128x128xf32>
    %c0_18 = arith.constant 0 : index
    %c0_19 = arith.constant 0 : index
    %22 = vector.load %arg6[%c0_18, %c0_19] : memref<128x128xf32, #tpu.memory_space<vmem>>, vector<128x128xf32>
    %23 = arith.addf %22, %21 : vector<128x128xf32>
    %c0_20 = arith.constant 0 : index
    %c0_21 = arith.constant 0 : index
    %24 = vector.load %arg6[%c0_20, %c0_21] : memref<128x128xf32, #tpu.memory_space<vmem>>, vector<128x128xf32>
    tpu.vector_store %arg6[%c0_20, %c0_21], %23 {strides = array<i32>} : memref<128x128xf32, #tpu.memory_space<vmem>>, vector<128x128xf32>,
    %c0_i32_22 = arith.constant 0 : i32
    %25 = arith.addi %4, %c0_i32_22 : i32
    %c2 = arith.constant 2 : index
    %26 = arith.index_cast %25 : i32 to index
    %c0_23 = arith.constant 0 : index
    %c0_24 = arith.constant 0 : index
    %27 = vector.load %arg5[%c2, %26, %c0_23, %c0_24] : memref<3x18x16x128xf32, #tpu.memory_space<vmem>>, vector<1x8x16x128xf32>
    %28 = vector.shape_cast %27 : vector<1x8x16x128xf32> to vector<8x16x128xf32>
    %29 = vector.shape_cast %28 : vector<8x16x128xf32> to vector<128x128xf32>
    %c0_25 = arith.constant 0 : index
    %c2_26 = arith.constant 2 : index
    %c0_27 = arith.constant 0 : index
    %c0_28 = arith.constant 0 : index
    %30 = vector.load %arg2[%c0_25, %c2_26, %c0_27, %c0_28] : memref<1x9x128x128xf32, #tpu.memory_space<vmem>>, vector<1x1x128x128xf32>
    %31 = vector.shape_cast %30 : vector<1x1x128x128xf32> to vector<128x128xf32>
    %cst_29 = arith.constant dense<0.000000e+00> : vector<128x128xf32>
    %32 = tpu.matmul %29, %31, %cst_29 {dimension_numbers = #tpu.dot_dimension_numbers<[1], [0], [0], [1], [0, 0, 1, 1], [], []>} : vector<128x128xf32>, vector<128x128xf32>, vector<128x128xf32> -> vector<128x128xf32>
    %c0_30 = arith.constant 0 : index
    %c0_31 = arith.constant 0 : index
    %33 = vector.load %arg6[%c0_30, %c0_31] : memref<128x128xf32, #tpu.memory_space<vmem>>, vector<128x128xf32>
    %34 = arith.addf %33, %32 : vector<128x128xf32>
    %c0_32 = arith.constant 0 : index
    %c0_33 = arith.constant 0 : index
    %35 = vector.load %arg6[%c0_32, %c0_33] : memref<128x128xf32, #tpu.memory_space<vmem>>, vector<128x128xf32>
    tpu.vector_store %arg6[%c0_32, %c0_33], %34 {strides = array<i32>} : memref<128x128xf32, #tpu.memory_space<vmem>>, vector<128x128xf32>,
    %c1_i32 = arith.constant 1 : i32
    %36 = arith.addi %4, %c1_i32 : i32
    %c0_34 = arith.constant 0 : index
    %37 = arith.index_cast %36 : i32 to index
    %c0_35 = arith.constant 0 : index
    %c0_36 = arith.constant 0 : index
    %38 = vector.load %arg5[%c0_34, %37, %c0_35, %c0_36] : memref<3x18x16x128xf32, #tpu.memory_space<vmem>>, vector<1x8x16x128xf32>
    %39 = vector.shape_cast %38 : vector<1x8x16x128xf32> to vector<8x16x128xf32>
    %40 = vector.shape_cast %39 : vector<8x16x128xf32> to vector<128x128xf32>
    %c0_37 = arith.constant 0 : index
    %c3 = arith.constant 3 : index
    %c0_38 = arith.constant 0 : index
    %c0_39 = arith.constant 0 : index
    %41 = vector.load %arg2[%c0_37, %c3, %c0_38, %c0_39] : memref<1x9x128x128xf32, #tpu.memory_space<vmem>>, vector<1x1x128x128xf32>
    %42 = vector.shape_cast %41 : vector<1x1x128x128xf32> to vector<128x128xf32>
    %cst_40 = arith.constant dense<0.000000e+00> : vector<128x128xf32>
    %43 = tpu.matmul %40, %42, %cst_40 {dimension_numbers = #tpu.dot_dimension_numbers<[1], [0], [0], [1], [0, 0, 1, 1], [], []>} : vector<128x128xf32>, vector<128x128xf32>, vector<128x128xf32> -> vector<128x128xf32>
    %c0_41 = arith.constant 0 : index
    %c0_42 = arith.constant 0 : index
    %44 = vector.load %arg6[%c0_41, %c0_42] : memref<128x128xf32, #tpu.memory_space<vmem>>, vector<128x128xf32>
    %45 = arith.addf %44, %43 : vector<128x128xf32>
    %c0_43 = arith.constant 0 : index
    %c0_44 = arith.constant 0 : index
    %46 = vector.load %arg6[%c0_43, %c0_44] : memref<128x128xf32, #tpu.memory_space<vmem>>, vector<128x128xf32>
    tpu.vector_store %arg6[%c0_43, %c0_44], %45 {strides = array<i32>} : memref<128x128xf32, #tpu.memory_space<vmem>>, vector<128x128xf32>,
    %c1_i32_45 = arith.constant 1 : i32
    %47 = arith.addi %4, %c1_i32_45 : i32
    %c1_46 = arith.constant 1 : index
    %48 = arith.index_cast %47 : i32 to index
    %c0_47 = arith.constant 0 : index
    %c0_48 = arith.constant 0 : index
    %49 = vector.load %arg5[%c1_46, %48, %c0_47, %c0_48] : memref<3x18x16x128xf32, #tpu.memory_space<vmem>>, vector<1x8x16x128xf32>
    %50 = vector.shape_cast %49 : vector<1x8x16x128xf32> to vector<8x16x128xf32>
    %51 = vector.shape_cast %50 : vector<8x16x128xf32> to vector<128x128xf32>
    %c0_49 = arith.constant 0 : index
    %c4 = arith.constant 4 : index
    %c0_50 = arith.constant 0 : index
    %c0_51 = arith.constant 0 : index
    %52 = vector.load %arg2[%c0_49, %c4, %c0_50, %c0_51] : memref<1x9x128x128xf32, #tpu.memory_space<vmem>>, vector<1x1x128x128xf32>
    %53 = vector.shape_cast %52 : vector<1x1x128x128xf32> to vector<128x128xf32>
    %cst_52 = arith.constant dense<0.000000e+00> : vector<128x128xf32>
    %54 = tpu.matmul %51, %53, %cst_52 {dimension_numbers = #tpu.dot_dimension_numbers<[1], [0], [0], [1], [0, 0, 1, 1], [], []>} : vector<128x128xf32>, vector<128x128xf32>, vector<128x128xf32> -> vector<128x128xf32>
    %c0_53 = arith.constant 0 : index
    %c0_54 = arith.constant 0 : index
    %55 = vector.load %arg6[%c0_53, %c0_54] : memref<128x128xf32, #tpu.memory_space<vmem>>, vector<128x128xf32>
    %56 = arith.addf %55, %54 : vector<128x128xf32>
    %c0_55 = arith.constant 0 : index
    %c0_56 = arith.constant 0 : index
    %57 = vector.load %arg6[%c0_55, %c0_56] : memref<128x128xf32, #tpu.memory_space<vmem>>, vector<128x128xf32>
    tpu.vector_store %arg6[%c0_55, %c0_56], %56 {strides = array<i32>} : memref<128x128xf32, #tpu.memory_space<vmem>>, vector<128x128xf32>,
    %c1_i32_57 = arith.constant 1 : i32
    %58 = arith.addi %4, %c1_i32_57 : i32
    %c2_58 = arith.constant 2 : index
    %59 = arith.index_cast %58 : i32 to index
    %c0_59 = arith.constant 0 : index
    %c0_60 = arith.constant 0 : index
    %60 = vector.load %arg5[%c2_58, %59, %c0_59, %c0_60] : memref<3x18x16x128xf32, #tpu.memory_space<vmem>>, vector<1x8x16x128xf32>
    %61 = vector.shape_cast %60 : vector<1x8x16x128xf32> to vector<8x16x128xf32>
    %62 = vector.shape_cast %61 : vector<8x16x128xf32> to vector<128x128xf32>
    %c0_61 = arith.constant 0 : index
    %c5 = arith.constant 5 : index
    %c0_62 = arith.constant 0 : index
    %c0_63 = arith.constant 0 : index
    %63 = vector.load %arg2[%c0_61, %c5, %c0_62, %c0_63] : memref<1x9x128x128xf32, #tpu.memory_space<vmem>>, vector<1x1x128x128xf32>
    %64 = vector.shape_cast %63 : vector<1x1x128x128xf32> to vector<128x128xf32>
    %cst_64 = arith.constant dense<0.000000e+00> : vector<128x128xf32>
    %65 = tpu.matmul %62, %64, %cst_64 {dimension_numbers = #tpu.dot_dimension_numbers<[1], [0], [0], [1], [0, 0, 1, 1], [], []>} : vector<128x128xf32>, vector<128x128xf32>, vector<128x128xf32> -> vector<128x128xf32>
    %c0_65 = arith.constant 0 : index
    %c0_66 = arith.constant 0 : index
    %66 = vector.load %arg6[%c0_65, %c0_66] : memref<128x128xf32, #tpu.memory_space<vmem>>, vector<128x128xf32>
    %67 = arith.addf %66, %65 : vector<128x128xf32>
    %c0_67 = arith.constant 0 : index
    %c0_68 = arith.constant 0 : index
    %68 = vector.load %arg6[%c0_67, %c0_68] : memref<128x128xf32, #tpu.memory_space<vmem>>, vector<128x128xf32>
    tpu.vector_store %arg6[%c0_67, %c0_68], %67 {strides = array<i32>} : memref<128x128xf32, #tpu.memory_space<vmem>>, vector<128x128xf32>,
    %c2_i32 = arith.constant 2 : i32
    %69 = arith.addi %4, %c2_i32 : i32
    %c0_69 = arith.constant 0 : index
    %70 = arith.index_cast %69 : i32 to index
    %c0_70 = arith.constant 0 : index
    %c0_71 = arith.constant 0 : index
    %71 = vector.load %arg5[%c0_69, %70, %c0_70, %c0_71] : memref<3x18x16x128xf32, #tpu.memory_space<vmem>>, vector<1x8x16x128xf32>
    %72 = vector.shape_cast %71 : vector<1x8x16x128xf32> to vector<8x16x128xf32>
    %73 = vector.shape_cast %72 : vector<8x16x128xf32> to vector<128x128xf32>
    %c0_72 = arith.constant 0 : index
    %c6 = arith.constant 6 : index
    %c0_73 = arith.constant 0 : index
    %c0_74 = arith.constant 0 : index
    %74 = vector.load %arg2[%c0_72, %c6, %c0_73, %c0_74] : memref<1x9x128x128xf32, #tpu.memory_space<vmem>>, vector<1x1x128x128xf32>
    %75 = vector.shape_cast %74 : vector<1x1x128x128xf32> to vector<128x128xf32>
    %cst_75 = arith.constant dense<0.000000e+00> : vector<128x128xf32>
    %76 = tpu.matmul %73, %75, %cst_75 {dimension_numbers = #tpu.dot_dimension_numbers<[1], [0], [0], [1], [0, 0, 1, 1], [], []>} : vector<128x128xf32>, vector<128x128xf32>, vector<128x128xf32> -> vector<128x128xf32>
    %c0_76 = arith.constant 0 : index
    %c0_77 = arith.constant 0 : index
    %77 = vector.load %arg6[%c0_76, %c0_77] : memref<128x128xf32, #tpu.memory_space<vmem>>, vector<128x128xf32>
    %78 = arith.addf %77, %76 : vector<128x128xf32>
    %c0_78 = arith.constant 0 : index
    %c0_79 = arith.constant 0 : index
    %79 = vector.load %arg6[%c0_78, %c0_79] : memref<128x128xf32, #tpu.memory_space<vmem>>, vector<128x128xf32>
    tpu.vector_store %arg6[%c0_78, %c0_79], %78 {strides = array<i32>} : memref<128x128xf32, #tpu.memory_space<vmem>>, vector<128x128xf32>,
    %c2_i32_80 = arith.constant 2 : i32
    %80 = arith.addi %4, %c2_i32_80 : i32
    %c1_81 = arith.constant 1 : index
    %81 = arith.index_cast %80 : i32 to index
    %c0_82 = arith.constant 0 : index
    %c0_83 = arith.constant 0 : index
    %82 = vector.load %arg5[%c1_81, %81, %c0_82, %c0_83] : memref<3x18x16x128xf32, #tpu.memory_space<vmem>>, vector<1x8x16x128xf32>
    %83 = vector.shape_cast %82 : vector<1x8x16x128xf32> to vector<8x16x128xf32>
    %84 = vector.shape_cast %83 : vector<8x16x128xf32> to vector<128x128xf32>
    %c0_84 = arith.constant 0 : index
    %c7 = arith.constant 7 : index
    %c0_85 = arith.constant 0 : index
    %c0_86 = arith.constant 0 : index
    %85 = vector.load %arg2[%c0_84, %c7, %c0_85, %c0_86] : memref<1x9x128x128xf32, #tpu.memory_space<vmem>>, vector<1x1x128x128xf32>
    %86 = vector.shape_cast %85 : vector<1x1x128x128xf32> to vector<128x128xf32>
    %cst_87 = arith.constant dense<0.000000e+00> : vector<128x128xf32>
    %87 = tpu.matmul %84, %86, %cst_87 {dimension_numbers = #tpu.dot_dimension_numbers<[1], [0], [0], [1], [0, 0, 1, 1], [], []>} : vector<128x128xf32>, vector<128x128xf32>, vector<128x128xf32> -> vector<128x128xf32>
    %c0_88 = arith.constant 0 : index
    %c0_89 = arith.constant 0 : index
    %88 = vector.load %arg6[%c0_88, %c0_89] : memref<128x128xf32, #tpu.memory_space<vmem>>, vector<128x128xf32>
    %89 = arith.addf %88, %87 : vector<128x128xf32>
    %c0_90 = arith.constant 0 : index
    %c0_91 = arith.constant 0 : index
    %90 = vector.load %arg6[%c0_90, %c0_91] : memref<128x128xf32, #tpu.memory_space<vmem>>, vector<128x128xf32>
    tpu.vector_store %arg6[%c0_90, %c0_91], %89 {strides = array<i32>} : memref<128x128xf32, #tpu.memory_space<vmem>>, vector<128x128xf32>,
    %c2_i32_92 = arith.constant 2 : i32
    %91 = arith.addi %4, %c2_i32_92 : i32
    %c2_93 = arith.constant 2 : index
    %92 = arith.index_cast %91 : i32 to index
    %c0_94 = arith.constant 0 : index
    %c0_95 = arith.constant 0 : index
    %93 = vector.load %arg5[%c2_93, %92, %c0_94, %c0_95] : memref<3x18x16x128xf32, #tpu.memory_space<vmem>>, vector<1x8x16x128xf32>
    %94 = vector.shape_cast %93 : vector<1x8x16x128xf32> to vector<8x16x128xf32>
    %95 = vector.shape_cast %94 : vector<8x16x128xf32> to vector<128x128xf32>
    %c0_96 = arith.constant 0 : index
    %c8 = arith.constant 8 : index
    %c0_97 = arith.constant 0 : index
    %c0_98 = arith.constant 0 : index
    %96 = vector.load %arg2[%c0_96, %c8, %c0_97, %c0_98] : memref<1x9x128x128xf32, #tpu.memory_space<vmem>>, vector<1x1x128x128xf32>
    %97 = vector.shape_cast %96 : vector<1x1x128x128xf32> to vector<128x128xf32>
    %cst_99 = arith.constant dense<0.000000e+00> : vector<128x128xf32>
    %98 = tpu.matmul %95, %97, %cst_99 {dimension_numbers = #tpu.dot_dimension_numbers<[1], [0], [0], [1], [0, 0, 1, 1], [], []>} : vector<128x128xf32>, vector<128x128xf32>, vector<128x128xf32> -> vector<128x128xf32>
    %c0_100 = arith.constant 0 : index
    %c0_101 = arith.constant 0 : index
    %99 = vector.load %arg6[%c0_100, %c0_101] : memref<128x128xf32, #tpu.memory_space<vmem>>, vector<128x128xf32>
    %100 = arith.addf %99, %98 : vector<128x128xf32>
    %c0_102 = arith.constant 0 : index
    %c0_103 = arith.constant 0 : index
    %101 = vector.load %arg6[%c0_102, %c0_103] : memref<128x128xf32, #tpu.memory_space<vmem>>, vector<128x128xf32>
    tpu.vector_store %arg6[%c0_102, %c0_103], %100 {strides = array<i32>} : memref<128x128xf32, #tpu.memory_space<vmem>>, vector<128x128xf32>,
    %c0_104 = arith.constant 0 : index
    %c0_105 = arith.constant 0 : index
    %102 = vector.load %arg6[%c0_104, %c0_105] : memref<128x128xf32, #tpu.memory_space<vmem>>, vector<128x128xf32>
    %103 = vector.shape_cast %102 : vector<128x128xf32> to vector<8x16x128xf32>
    %c0_106 = arith.constant 0 : index
    %c0_107 = arith.constant 0 : index
    %c0_108 = arith.constant 0 : index
    %c0_109 = arith.constant 0 : index
    %104 = vector.load %arg4[%c0_106, %c0_107, %c0_108, %c0_109] : memref<1x8x16x128xf32, #tpu.memory_space<vmem>>, vector<1x8x16x128xf32>
    %105 = vector.shape_cast %104 : vector<1x8x16x128xf32> to vector<8x16x128xf32>
    %106 = vector.shape_cast %103 : vector<8x16x128xf32> to vector<1x8x16x128xf32>
    tpu.vector_store %arg4[%c0_106, %c0_107, %c0_108, %c0_109], %106 {strides = array<i32>} : memref<1x8x16x128xf32, #tpu.memory_space<vmem>>, vector<1x8x16x128xf32>,
    return
  }
  func.func @transform_0(%arg0: i32, %arg1: i32) -> (i32, i32, i32, i32) {
    %c0_i32 = arith.constant 0 : i32
    %c0_i32_0 = arith.constant 0 : i32
    %c0_i32_1 = arith.constant 0 : i32
    %c0_i32_2 = arith.constant 0 : i32
    return %arg0, %c0_i32, %c0_i32_0, %c0_i32_1 : i32, i32, i32, i32
  }
  func.func @transform_2(%arg0: i32, %arg1: i32) -> (i32, i32, i32, i32) {
    %c0_i32 = arith.constant 0 : i32
    %c0_i32_0 = arith.constant 0 : i32
    %c0_i32_1 = arith.constant 0 : i32
    return %arg0, %arg1, %c0_i32, %c0_i32_0 : i32, i32, i32, i32
  }
}

</mosaic_0001>

<llo_original>
// kernel: tpu_custom_call.1
$region0: #{tpu_custom_call.1}
  #allocation0 [shape = 'u32[]', space=smem, size = 0x4, offset = 0x4, fixed_abs, tag = 'smem constant byte address 0x4 - core index']
  #allocation1 [shape = 'u32[144,128]{1,0:T(1,128)}', space=vmem, size = 0x12000, scoped, tag = 'internal scratch']
  #allocation2 [shape = 'f32[3,18,16,128]{3,2,1,0:T(8,128)}', space=vmem, size = 0x6c000, scoped, tag = 'scratch operand']
  #allocation3 [shape = 'f32[128,128]{1,0:T(8,128)}', space=vmem, size = 0x10000, scoped, tag = 'scratch operand']
  #allocation4 [shape = 's32[3]{0}', space=sflag, size = 0xc, scoped, tag = 'scratch operand']
  #allocation9 [shape = 's32[]', space=sflag, size = 0x4, offset = 0, fixed_abs, tag = 'sflag constant byte address 0x0 - dummy sync flag']
  #allocation10 [shape = 's32[]', space=sflag, size = 0x4, offset = 0, fixed_abs, tag = 'sflag constant byte address 0x0 - dummy sync flag']
  #allocation11 [shape = 's32[]', space=sflag, size = 0x4, offset = 0, fixed_abs, tag = 'sflag constant byte address 0x0 - dummy sync flag']
  #allocation12 [shape = 'u32[]', space=smem, size = 0x4, offset = 0x44, fixed_abs, tag = 'smem constant byte address 0x44 - assertion arg 0']
  #allocation13 [shape = 'u32[]', space=smem, size = 0x4, offset = 0x48, fixed_abs, tag = 'smem constant byte address 0x48 - assertion arg 1']
  #allocation14 [shape = 's32[]', space=sflag, size = 0x4, offset = 0, fixed_abs, tag = 'sflag constant byte address 0x0 - dummy sync flag']
  %s0 = inlined_call_operand.hbm [shape: f32[2,9,128,128], index: 0, kind: input, shape index: {}]
  %s1 = inlined_call_operand.hbm [shape: f32[2,16,16,128], index: 1, kind: input, shape index: {}]
  %s2 = inlined_call_operand.hbm [shape: f32[2,16,16,128], index: 2, kind: output, shape index: {}]
  %s3 = sld [smem:[#allocation0]]
  $region49: #{tpu_custom_call.1} parent=0
    _
  %s5 = ssub.s32 1, %s3
  %s6 = scalar_select 0, %s5, %s3
  $region1: #{tpu_custom_call.1} parent=0
    #allocation5 [shape = 'u8[1179648]{0}', space=vmem, size = 0x120000, scoped, tag = 'input window, operand 0']
    #allocation6 [shape = 's32[2]{0}', space=sflag, size = 0x8, scoped, tag = 'scoped memory for tpu_custom_call.1']
    #allocation7 [shape = 's32[2]{0}', space=sflag, size = 0x8, scoped, tag = 'scoped memory for tpu_custom_call.1']
    #allocation8 [shape = 'u8[131072]{0}', space=vmem, size = 0x20000, scoped, tag = 'output window, operand 0']
    %7 = vsyncpa [#allocation6], 0
    %s8 = scalar_lea.sflag [#allocation6], 1
    %9 = vsyncpa %s8, 0
    %10 = vsyncpa [#allocation7], 0
    %s11 = scalar_lea.sflag [#allocation7], 1
    %12 = vsyncpa %s11, 0
    loop: start=0, step=1, limit=6
    $region2: #{tpu_custom_call.1} parent=1 // loop_pre_header
      _
    $region3: #{tpu_custom_call.1} parent=1 // loop_header
      %s14 = sphi 0, %s18
      %p15 = scmp.ge.s32.totalorder %s14, 6
      %s21 = sphi 0, %s33
      %s22 = sphi 0, %s29
      %s23 = sphi 0, %s21
      %s24 = sphi 0, %s22
      %s25 = sphi 0, %s23
      %s26 = sphi 0, %s24
      %s36 = sphi 0, %s38
      %s39 = sphi 0, %s36
      %s40 = sphi 0, %s39
      %s56 = sphi 0, %s40
      %s64 = sphi 0, %s66
      %s67 = sphi 0, %s64
      %s68 = sphi 0, %s67
      %s84 = sphi 0, %s68
    $region4: #{tpu_custom_call.1} parent=1 // loop_header_branch
      %17 = sbr.rel (%p15) target = $region8
    $region5: #{tpu_custom_call.1} parent=1 // loop_body
      %s19 = ssub.s32 %s14, 1
      %s20 = ssub.s32 %s14, 2
      %s27 = sadd.s32 1, %s22
      %p28 = scmp.ge.s32.totalorder %s27, 2
      %s29 = scalar_select %p28, 0, %s27
      %s30 = sadd.s32 1, %s21
      %s31 = scalar_select %p28, %s30, %s21
      %p32 = scmp.ge.s32.totalorder %s31, 2
      %s33 = scalar_select %p32, 0, %s31
      %s34 = ssub.s32 %s21, %s33
      %p35 = scmp.eq.s32.totalorder %s34, 0
      %s37 = sadd.s32 %s36, 1
      %s38 = scalar_select %p35, %s36, %s37
      %p41 = pneg %p35
      %p42 = scmp.eq.s32.totalorder %s14, 3
      %p43 = por %p41, %p42
      %p44 = scmp.ne.s32.totalorder %s36, %s39
      %p45 = scmp.eq.s32.totalorder %s14, 0
      %p46 = por %p44, %p45
      %p47 = scmp.ne.s32.totalorder %s36, %s39
      %p48 = scmp.eq.s32.totalorder %s19, 3
      %p49 = por %p47, %p48
      %p50 = scmp.ne.s32.totalorder %s39, %s40
      %p51 = scmp.eq.s32.totalorder %s19, 0
      %p52 = por %p50, %p51
      %p53 = scmp.ne.s32.totalorder %s39, %s40
      %p54 = scmp.eq.s32.totalorder %s20, 3
      %p55 = por %p53, %p54
      %p57 = scmp.ne.s32.totalorder %s40, %s56
      %p58 = scmp.eq.s32.totalorder %s20, 0
      %p59 = por %p57, %p58
      %s60 = ssub.s32 %s21, %s33
      %s61 = ssub.s32 %s22, %s29
      %s62 = sor.u32 %s60, %s61
      %p63 = scmp.eq.s32.totalorder %s62, 0
      %s65 = sadd.s32 %s64, 1
      %s66 = scalar_select %p63, %s64, %s65
      %p69 = pneg %p63
      %p70 = scmp.eq.s32.totalorder %s14, 3
      %p71 = por %p69, %p70
      %p72 = scmp.ne.s32.totalorder %s64, %s67
      %p73 = scmp.eq.s32.totalorder %s14, 0
      %p74 = por %p72, %p73
      %p75 = scmp.ne.s32.totalorder %s64, %s67
      %p76 = scmp.eq.s32.totalorder %s19, 3
      %p77 = por %p75, %p76
      %p78 = scmp.ne.s32.totalorder %s67, %s68
      %p79 = scmp.eq.s32.totalorder %s19, 0
      %p80 = por %p78, %p79
      %p81 = scmp.ne.s32.totalorder %s67, %s68
      %p82 = scmp.eq.s32.totalorder %s20, 3
      %p83 = por %p81, %p82
      %p85 = scmp.ne.s32.totalorder %s68, %s84
      %p86 = scmp.eq.s32.totalorder %s20, 0
      %p87 = por %p85, %p86
      %p88 = scmp.le.s32.totalorder 1, %s14
      %p89 = scmp.lt.s32.totalorder %s14, 5
      %p90 = pnand %p88, %p89
      %p91 = pneg %p90
      // Predicated region
      $region9: #{tpu_custom_call.1} parent=5 // pred_check
        _
      $region10: #{tpu_custom_call.1} parent=5 // pred_check_branch
        %93 = sbr.rel (%p90) target = $region12
      $region11: #{tpu_custom_call.1} parent=5 // pred_region
        %s94 = ssub.s32 %s14, 1
      $region12: #{tpu_custom_call.1} parent=5 // pred_fallthru
        _
      %p95 = scmp.lt.s32.totalorder %s14, 4
      // Predicated region
      $region13: #{tpu_custom_call.1} parent=5 // pred_check
        %p96 = pneg %p95
      $region14: #{tpu_custom_call.1} parent=5 // pred_check_branch
        %98 = sbr.rel (%p96) target = $region16
      $region15: #{tpu_custom_call.1} parent=5 // pred_region
        // Predicated region
        $region17: #{tpu_custom_call.1} parent=15 // pred_check
          %p99 = pneg %p46
        $region18: #{tpu_custom_call.1} parent=15 // pred_check_branch
          %101 = sbr.rel (%p99) target = $region20
        $region19: #{tpu_custom_call.1} parent=15 // pred_region
          %s102 = sand.u32 %s36, 1
          %s103 = scalar_lea.sflag [#allocation6], %s102
          %s104 = sand.u32 %s36, 1
          %s105 = smul.addr %s104, 1152
          %s106 = scalar_lea.vmem [#allocation5], %s105
          %s108 = ssub.s32 18432, 18432
          %109 = vsyncadd %s103, %s108
          %s110 = smul.addr %s21, 144
          %s111 = smul.addr %s110, 128
          %s112 = scalar_lea.hbm %s0, %s111
          %s113 = sshll.u32 %s106, 4
          %s114 = int_to_ptr.vmem [resolvable:$true] %s113
          %119 = dma.hbm_to_vmem [thread:$0]  %s112, 18432, %s114, %s103, 128, 128, 8
        $region20: #{tpu_custom_call.1} parent=15 // pred_fallthru
          _
      $region16: #{tpu_custom_call.1} parent=5 // pred_fallthru
        _
      %p120 = scmp.le.s32.totalorder 1, %s14
      %p121 = scmp.lt.s32.totalorder %s14, 5
      %p122 = pnand %p120, %p121
      %p123 = pneg %p122
      // Predicated region
      $region21: #{tpu_custom_call.1} parent=5 // pred_check
        _
      $region22: #{tpu_custom_call.1} parent=5 // pred_check_branch
        %125 = sbr.rel (%p122) target = $region24
      $region23: #{tpu_custom_call.1} parent=5 // pred_region
        %s126 = ssub.s32 %s14, 1
        %s127 = sand.u32 %s39, 1
        %s128 = scalar_lea.sflag [#allocation6], %s127
        %s129 = sand.u32 %s39, 1
        %s130 = smul.addr %s129, 1152
        %s131 = scalar_lea.vmem [#allocation5], %s130
        // Predicated region
        $region25: #{tpu_custom_call.1} parent=23 // pred_check
          %p132 = pneg %p52
        $region26: #{tpu_custom_call.1} parent=23 // pred_check_branch
          %134 = sbr.rel (%p132) target = $region28
        $region27: #{tpu_custom_call.1} parent=23 // pred_region
          %135 = dma.done %s128, 18432
        $region28: #{tpu_custom_call.1} parent=23 // pred_fallthru
          _
        %s136 = sand.u32 %s39, 1
        %s137 = scalar_lea.sflag [#allocation6], %s136
        %s138 = sand.u32 %s39, 1
        %s139 = smul.addr %s138, 1152
        %s140 = scalar_lea.vmem [#allocation5], %s139
        %p141 = pneg %p52
        %p142 = pneg %p49
        %p143 = pneg %p80
        %p144 = pneg %p77
        %s145 = sand.u32 %s67, 1
        %s146 = scalar_lea.sflag [#allocation7], %s145
        %s147 = sand.u32 %s67, 1
        %s148 = smul.addr %s147, 128
        %s149 = scalar_lea.vmem [#allocation8], %s148
        %s150 = smul.u32 8, %s24
        %p151 = scmp.eq.s32.totalorder %s24, 0
        // Predicated region
        $region29: #{tpu_custom_call.1} parent=23 // pred_check
          %p152 = pneg %p151
        $region30: #{tpu_custom_call.1} parent=23 // pred_check_branch
          %154 = sbr.rel (%p152) target = $region32
        $region31: #{tpu_custom_call.1} parent=23 // pred_region
          %155 = vst [vmem:[#allocation2] sm:$0xff] 0.0
          %156 = vst [vmem:[#allocation2 + $0x8] sm:$0xff] 0.0
          %s157 = scalar_lea.vmem [#allocation2], 272
          %158 = vst [vmem:[%s157] sm:$0xff] 0.0
          %159 = vst [vmem:[%s157 + $0x8] sm:$0xff] 0.0
          %160 = vst [vmem:[#allocation2] sm:$0x1] 0.0
          %161 = vst [vmem:[#allocation2 + $0x10] sm:$0x1] 0.0
          %162 = vst [vmem:[#allocation2 + $0x20] sm:$0x1] 0.0
          %163 = vst [vmem:[#allocation2 + $0x30] sm:$0x1] 0.0
          %164 = vst [vmem:[#allocation2 + $0x40] sm:$0x1] 0.0
          %165 = vst [vmem:[#allocation2 + $0x50] sm:$0x1] 0.0
          %166 = vst [vmem:[#allocation2 + $0x60] sm:$0x1] 0.0
          %167 = vst [vmem:[#allocation2 + $0x70] sm:$0x1] 0.0
          %168 = vst [vmem:[#allocation2 + $0x80] sm:$0x1] 0.0
          %169 = vst [vmem:[#allocation2 + $0x90] sm:$0x1] 0.0
          %170 = vst [vmem:[#allocation2 + $0xa0] sm:$0x1] 0.0
          %171 = vst [vmem:[#allocation2 + $0xb0] sm:$0x1] 0.0
          %172 = vst [vmem:[#allocation2 + $0xc0] sm:$0x1] 0.0
          %173 = vst [vmem:[#allocation2 + $0xd0] sm:$0x1] 0.0
          %174 = vst [vmem:[#allocation2 + $0xe0] sm:$0x1] 0.0
          %175 = vst [vmem:[#allocation2 + $0xf0] sm:$0x1] 0.0
          %176 = vst [vmem:[#allocation2 + $0x100] sm:$0x1] 0.0
          %177 = vst [vmem:[#allocation2 + $0x110] sm:$0x1] 0.0
          %s178 = scalar_lea.vmem [#allocation2], 288
          %179 = vst [vmem:[%s178] sm:$0xff] 0.0
          %180 = vst [vmem:[%s178 + $0x8] sm:$0xff] 0.0
          %s181 = scalar_lea.vmem [#allocation2], 560
          %182 = vst [vmem:[%s181] sm:$0xff] 0.0
          %183 = vst [vmem:[%s181 + $0x8] sm:$0xff] 0.0
          %s184 = scalar_lea.vmem [#allocation2], 576
          %185 = vst [vmem:[%s184] sm:$0xff] 0.0
          %186 = vst [vmem:[%s184 + $0x8] sm:$0xff] 0.0
          %s187 = scalar_lea.vmem [#allocation2], 848
          %188 = vst [vmem:[%s187] sm:$0xff] 0.0
          %189 = vst [vmem:[%s187 + $0x8] sm:$0xff] 0.0
          %190 = vst [vmem:[%s184 + $0xf] sm:$0x1] 0.0
          %191 = vst [vmem:[%s184 + $0x1f] sm:$0x1] 0.0
          %192 = vst [vmem:[%s184 + $0x2f] sm:$0x1] 0.0
          %193 = vst [vmem:[%s184 + $0x3f] sm:$0x1] 0.0
          %194 = vst [vmem:[%s184 + $0x4f] sm:$0x1] 0.0
          %195 = vst [vmem:[%s184 + $0x5f] sm:$0x1] 0.0
          %196 = vst [vmem:[%s184 + $0x6f] sm:$0x1] 0.0
          %197 = vst [vmem:[%s184 + $0x7f] sm:$0x1] 0.0
          %198 = vst [vmem:[%s184 + $0x8f] sm:$0x1] 0.0
          %199 = vst [vmem:[%s184 + $0x9f] sm:$0x1] 0.0
          %200 = vst [vmem:[%s184 + $0xaf] sm:$0x1] 0.0
          %201 = vst [vmem:[%s184 + $0xbf] sm:$0x1] 0.0
          %202 = vst [vmem:[%s184 + $0xcf] sm:$0x1] 0.0
          %203 = vst [vmem:[%s184 + $0xdf] sm:$0x1] 0.0
          %204 = vst [vmem:[%s184 + $0xef] sm:$0x1] 0.0
          %205 = vst [vmem:[%s184 + $0xff] sm:$0x1] 0.0
          %206 = vst [vmem:[%s184 + $0x10f] sm:$0x1] 0.0
          %207 = vst [vmem:[%s184 + $0x11f] sm:$0x1] 0.0
          %s208 = smul.u32 %s23, 256
          %s209 = smul.addr %s208, 16
          %s210 = scalar_lea.hbm %s1, %s209
          %s211 = scalar_lea.vmem [#allocation2], 17
          %s213 = sshll.u32 %s211, 4
          %s214 = int_to_ptr.vmem [resolvable:$true] %s213
          %216 = dma.hbm_to_vmem [thread:$0]  %s210, 3840, %s214, [#allocation4], 256, 256, 15
          %s217 = scalar_lea.vmem [#allocation2], 304
          %s218 = scalar_lea.sflag [#allocation4], 1
          // Predicated region
          $region33: #{tpu_custom_call.1} parent=31 // pred_check
            _
          $region34: #{tpu_custom_call.1} parent=31 // pred_check_branch
            %220 = sbr.rel target = $region36
          $region35: #{tpu_custom_call.1} parent=31 // pred_region
            %221 = sst [smem:[#allocation12]] [#allocation11]
            %222 = sst [smem:[#allocation13]] [#allocation10]
          $region36: #{tpu_custom_call.1} parent=31 // pred_fallthru
            _
          %224 = shalt.err (0)
          %s226 = sshll.u32 %s217, 4
          %s227 = int_to_ptr.vmem [resolvable:$true] %s226
          %229 = dma.hbm_to_vmem [thread:$0]  %s210, 4096, %s227, %s218
          %s230 = sadd.s32 1, %s208
          %s231 = smul.addr %s230, 16
          %s232 = scalar_lea.hbm %s1, %s231
          %s233 = scalar_lea.vmem [#allocation2], 592
          %s234 = scalar_lea.sflag [#allocation4], 2
          %s236 = sshll.u32 %s233, 4
          %s237 = int_to_ptr.vmem [resolvable:$true] %s236
          %239 = dma.hbm_to_vmem [thread:$0]  %s232, 3840, %s237, %s234, 256, 256, 15
          %s240 = smul.u32 1, 16
          %s241 = smul.u32 %s240, 15
          %s242 = smul.u32 %s241, 1
          %s243 = sshll.u32 %s242, 4
          %244 = dma.done [#allocation4], %s243
          %s245 = smul.u32 %s240, 16
          %s246 = smul.u32 %s245, 1
          %s247 = sshll.u32 %s246, 4
          %248 = dma.done %s218, %s247
          %s249 = sshll.u32 %s242, 4
          %250 = dma.done %s234, %s249
        $region32: #{tpu_custom_call.1} parent=23 // pred_fallthru
          _
        %s251 = smul.u32 %s24, 8
        %s252 = smul.u32 %s251, 16
        %s253 = scalar_lea.vmem [#allocation2], %s252
        %v254 = vld [vmem:[%s253] sm:$0xff]
        %v255 = vld [vmem:[%s253 + $0x8] sm:$0xff]
        %v256 = vld [vmem:[%s253 + $0x10] sm:$0xff]
        %v257 = vld [vmem:[%s253 + $0x18] sm:$0xff]
        %v258 = vld [vmem:[%s253 + $0x20] sm:$0xff]
        %v259 = vld [vmem:[%s253 + $0x28] sm:$0xff]
        %v260 = vld [vmem:[%s253 + $0x30] sm:$0xff]
        %v261 = vld [vmem:[%s253 + $0x38] sm:$0xff]
        %v262 = vld [vmem:[%s253 + $0x40] sm:$0xff]
        %v263 = vld [vmem:[%s253 + $0x48] sm:$0xff]
        %v264 = vld [vmem:[%s253 + $0x50] sm:$0xff]
        %v265 = vld [vmem:[%s253 + $0x58] sm:$0xff]
        %v266 = vld [vmem:[%s253 + $0x60] sm:$0xff]
        %v267 = vld [vmem:[%s253 + $0x68] sm:$0xff]
        %v268 = vld [vmem:[%s253 + $0x70] sm:$0xff]
        %v269 = vld [vmem:[%s253 + $0x78] sm:$0xff]
        %v270 = vld [vmem:[%s131] sm:$0xff]
        %v271 = vld [vmem:[%s131 + $0x8] sm:$0xff]
        %v272 = vld [vmem:[%s131 + $0x10] sm:$0xff]
        %v273 = vld [vmem:[%s131 + $0x18] sm:$0xff]
        %v274 = vld [vmem:[%s131 + $0x20] sm:$0xff]
        %v275 = vld [vmem:[%s131 + $0x28] sm:$0xff]
        %v276 = vld [vmem:[%s131 + $0x30] sm:$0xff]
        %v277 = vld [vmem:[%s131 + $0x38] sm:$0xff]
        %v278 = vld [vmem:[%s131 + $0x40] sm:$0xff]
        %v279 = vld [vmem:[%s131 + $0x48] sm:$0xff]
        %v280 = vld [vmem:[%s131 + $0x50] sm:$0xff]
        %v281 = vld [vmem:[%s131 + $0x58] sm:$0xff]
        %v282 = vld [vmem:[%s131 + $0x60] sm:$0xff]
        %v283 = vld [vmem:[%s131 + $0x68] sm:$0xff]
        %v284 = vld [vmem:[%s131 + $0x70] sm:$0xff]
        %v285 = vld [vmem:[%s131 + $0x78] sm:$0xff]
        %286 = vmatprep.subr.mxu0 0.0
        %287 = vmatpush1.msra.mxu0 %v270
        %288 = vmatprep.subr.mxu0 0.0
        %289 = vmatpush1.msra.mxu0 %v271
        %290 = vmatprep.subr.mxu0 0.0
        %291 = vmatpush1.msra.mxu0 %v272
        %292 = vmatprep.subr.mxu0 0.0
        %293 = vmatpush1.msra.mxu0 %v273
        %294 = vmatprep.subr.mxu0 0.0
        %295 = vmatpush1.msra.mxu0 %v274
        %296 = vmatprep.subr.mxu0 0.0
        %297 = vmatpush1.msra.mxu0 %v275
        %298 = vmatprep.subr.mxu0 0.0
        %299 = vmatpush1.msra.mxu0 %v276
        %300 = vmatprep.subr.mxu0 0.0
        %301 = vmatpush1.msra.mxu0 %v277
        %302 = vmatprep.subr.mxu0 0.0
        %303 = vmatpush1.msra.mxu0 %v278
        %304 = vmatprep.subr.mxu0 0.0
        %305 = vmatpush1.msra.mxu0 %v279
        %306 = vmatprep.subr.mxu0 0.0
        %307 = vmatpush1.msra.mxu0 %v280
        %308 = vmatprep.subr.mxu0 0.0
        %309 = vmatpush1.msra.mxu0 %v281
        %310 = vmatprep.subr.mxu0 0.0
        %311 = vmatpush1.msra.mxu0 %v282
        %312 = vmatprep.subr.mxu0 0.0
        %313 = vmatpush1.msra.mxu0 %v283
        %314 = vmatprep.subr.mxu0 0.0
        %315 = vmatpush1.msra.mxu0 %v284
        %316 = vmatprep.subr.mxu0 0.0
        %317 = vmatpush1.msra.mxu0 %v285
        %318 = vmatprep.subr.mxu0 0.0
        %319 = vmatpush1.msra.mxu0 0.0
        %320 = vmatprep.subr.mxu0 0.0
        %321 = vmatpush1.msra.mxu0 0.0
        %322 = vmatprep.subr.mxu0 0.0
        %323 = vmatpush1.msra.mxu0 0.0
        %324 = vmatprep.subr.mxu0 0.0
        %325 = vmatpush1.msra.mxu0 0.0
        %326 = vmatprep.subr.mxu0 0.0
        %327 = vmatpush1.msra.mxu0 0.0
        %328 = vmatprep.subr.mxu0 0.0
        %329 = vmatpush1.msra.mxu0 0.0
        %330 = vmatprep.subr.mxu0 0.0
        %331 = vmatpush1.msra.mxu0 0.0
        %332 = vmatprep.subr.mxu0 0.0
        %333 = vmatpush1.msra.mxu0 0.0
        %334 = vmatprep.subr.mxu0 0.0
        %335 = vmatpush1.msra.mxu0 0.0
        %336 = vmatprep.subr.mxu0 0.0
        %337 = vmatpush1.msra.mxu0 0.0
        %338 = vmatprep.subr.mxu0 0.0
        %339 = vmatpush1.msra.mxu0 0.0
        %340 = vmatprep.subr.mxu0 0.0
        %341 = vmatpush1.msra.mxu0 0.0
        %342 = vmatprep.subr.mxu0 0.0
        %343 = vmatpush1.msra.mxu0 0.0
        %344 = vmatprep.subr.mxu0 0.0
        %345 = vmatpush1.msra.mxu0 0.0
        %346 = vmatprep.subr.mxu0 0.0
        %347 = vmatpush1.msra.mxu0 0.0
        %348 = vmatprep.subr.mxu0 0.0
        %349 = vmatpush1.msra.mxu0 0.0
        %350 = vmatprep.mubr.f32.mxu0 0.0
        %351 = vmatmul.mubr.f32.gmra.mrb[0].mxu0 %v254
        %v352 = vpop.f32.mrb[0].mxu0
        %v353 = vadd.f32 0.0, %v352
        %v354 = vpop.f32.mrb[0].mxu0
        %355 = vmatprep.mubr.f32.mxu0 0.0
        %356 = vmatmul.mubr.f32.gmra.mrb[0].mxu0 %v255
        %v357 = vpop.f32.mrb[0].mxu0
        %v358 = vadd.f32 0.0, %v357
        %v359 = vpop.f32.mrb[0].mxu0
        %360 = vmatprep.mubr.f32.mxu0 0.0
        %361 = vmatmul.mubr.f32.gmra.mrb[0].mxu0 %v256
        %v362 = vpop.f32.mrb[0].mxu0
        %v363 = vadd.f32 0.0, %v362
        %v364 = vpop.f32.mrb[0].mxu0
        %365 = vmatprep.mubr.f32.mxu0 0.0
        %366 = vmatmul.mubr.f32.gmra.mrb[0].mxu0 %v257
        %v367 = vpop.f32.mrb[0].mxu0
        %v368 = vadd.f32 0.0, %v367
        %v369 = vpop.f32.mrb[0].mxu0
        %370 = vmatprep.mubr.f32.mxu0 0.0
        %371 = vmatmul.mubr.f32.gmra.mrb[0].mxu0 %v258
        %v372 = vpop.f32.mrb[0].mxu0
        %v373 = vadd.f32 0.0, %v372
        %v374 = vpop.f32.mrb[0].mxu0
        %375 = vmatprep.mubr.f32.mxu0 0.0
        %376 = vmatmul.mubr.f32.gmra.mrb[0].mxu0 %v259
        %v377 = vpop.f32.mrb[0].mxu0
        %v378 = vadd.f32 0.0, %v377
        %v379 = vpop.f32.mrb[0].mxu0
        %380 = vmatprep.mubr.f32.mxu0 0.0
        %381 = vmatmul.mubr.f32.gmra.mrb[0].mxu0 %v260
        %v382 = vpop.f32.mrb[0].mxu0
        %v383 = vadd.f32 0.0, %v382
        %v384 = vpop.f32.mrb[0].mxu0
        %385 = vmatprep.mubr.f32.mxu0 0.0
        %386 = vmatmul.mubr.f32.gmra.mrb[0].mxu0 %v261
        %v387 = vpop.f32.mrb[0].mxu0
        %v388 = vadd.f32 0.0, %v387
        %v389 = vpop.f32.mrb[0].mxu0
        %390 = vmatprep.mubr.f32.mxu0 0.0
        %391 = vmatmul.mubr.f32.gmra.mrb[0].mxu0 %v262
        %v392 = vpop.f32.mrb[0].mxu0
        %v393 = vadd.f32 0.0, %v392
        %v394 = vpop.f32.mrb[0].mxu0
        %395 = vmatprep.mubr.f32.mxu0 0.0
        %396 = vmatmul.mubr.f32.gmra.mrb[0].mxu0 %v263
        %v397 = vpop.f32.mrb[0].mxu0
        %v398 = vadd.f32 0.0, %v397
        %v399 = vpop.f32.mrb[0].mxu0
        %400 = vmatprep.mubr.f32.mxu0 0.0
        %401 = vmatmul.mubr.f32.gmra.mrb[0].mxu0 %v264
        %v402 = vpop.f32.mrb[0].mxu0
        %v403 = vadd.f32 0.0, %v402
        %v404 = vpop.f32.mrb[0].mxu0
        %405 = vmatprep.mubr.f32.mxu0 0.0
        %406 = vmatmul.mubr.f32.gmra.mrb[0].mxu0 %v265
        %v407 = vpop.f32.mrb[0].mxu0
        %v408 = vadd.f32 0.0, %v407
        %v409 = vpop.f32.mrb[0].mxu0
        %410 = vmatprep.mubr.f32.mxu0 0.0
        %411 = vmatmul.mubr.f32.gmra.mrb[0].mxu0 %v266
        %v412 = vpop.f32.mrb[0].mxu0
        %v413 = vadd.f32 0.0, %v412
        %v414 = vpop.f32.mrb[0].mxu0
        %415 = vmatprep.mubr.f32.mxu0 0.0
        %416 = vmatmul.mubr.f32.gmra.mrb[0].mxu0 %v267
        %v417 = vpop.f32.mrb[0].mxu0
        %v418 = vadd.f32 0.0, %v417
        %v419 = vpop.f32.mrb[0].mxu0
        %420 = vmatprep.mubr.f32.mxu0 0.0
        %421 = vmatmul.mubr.f32.gmra.mrb[0].mxu0 %v268
        %v422 = vpop.f32.mrb[0].mxu0
        %v423 = vadd.f32 0.0, %v422
        %v424 = vpop.f32.mrb[0].mxu0
        %425 = vmatprep.mubr.f32.mxu0 0.0
        %426 = vmatmul.mubr.f32.gmra.mrb[0].mxu0 %v269
        %v427 = vpop.f32.mrb[0].mxu0
        %v428 = vadd.f32 0.0, %v427
        %v429 = vpop.f32.mrb[0].mxu0
        %430 = vdwg.mxu0
        %431 = vst [vmem:[#allocation3] sm:$0xff] %v353
        %432 = vst [vmem:[#allocation3 + $0x8] sm:$0xff] %v358
        %433 = vst [vmem:[#allocation3 + $0x10] sm:$0xff] %v363
        %434 = vst [vmem:[#allocation3 + $0x18] sm:$0xff] %v368
        %435 = vst [vmem:[#allocation3 + $0x20] sm:$0xff] %v373
        %436 = vst [vmem:[#allocation3 + $0x28] sm:$0xff] %v378
        %437 = vst [vmem:[#allocation3 + $0x30] sm:$0xff] %v383
        %438 = vst [vmem:[#allocation3 + $0x38] sm:$0xff] %v388
        %439 = vst [vmem:[#allocation3 + $0x40] sm:$0xff] %v393
        %440 = vst [vmem:[#allocation3 + $0x48] sm:$0xff] %v398
        %441 = vst [vmem:[#allocation3 + $0x50] sm:$0xff] %v403
        %442 = vst [vmem:[#allocation3 + $0x58] sm:$0xff] %v408
        %443 = vst [vmem:[#allocation3 + $0x60] sm:$0xff] %v413
        %444 = vst [vmem:[#allocation3 + $0x68] sm:$0xff] %v418
        %445 = vst [vmem:[#allocation3 + $0x70] sm:$0xff] %v423
        %446 = vst [vmem:[#allocation3 + $0x78] sm:$0xff] %v428
        %s447 = sadd.s32 %s252, 288
        %s448 = scalar_lea.vmem [#allocation2], %s447
        %v449 = vld [vmem:[%s448] sm:$0xff]
        %v450 = vld [vmem:[%s448 + $0x8] sm:$0xff]
        %v451 = vld [vmem:[%s448 + $0x10] sm:$0xff]
        %v452 = vld [vmem:[%s448 + $0x18] sm:$0xff]
        %v453 = vld [vmem:[%s448 + $0x20] sm:$0xff]
        %v454 = vld [vmem:[%s448 + $0x28] sm:$0xff]
        %v455 = vld [vmem:[%s448 + $0x30] sm:$0xff]
        %v456 = vld [vmem:[%s448 + $0x38] sm:$0xff]
        %v457 = vld [vmem:[%s448 + $0x40] sm:$0xff]
        %v458 = vld [vmem:[%s448 + $0x48] sm:$0xff]
        %v459 = vld [vmem:[%s448 + $0x50] sm:$0xff]
        %v460 = vld [vmem:[%s448 + $0x58] sm:$0xff]
        %v461 = vld [vmem:[%s448 + $0x60] sm:$0xff]
        %v462 = vld [vmem:[%s448 + $0x68] sm:$0xff]
        %v463 = vld [vmem:[%s448 + $0x70] sm:$0xff]
        %v464 = vld [vmem:[%s448 + $0x78] sm:$0xff]
        %s465 = scalar_lea.vmem %s131, 128 [#allocation5]
        %v466 = vld [vmem:[%s465] sm:$0xff]
        %v467 = vld [vmem:[%s465 + $0x8] sm:$0xff]
        %v468 = vld [vmem:[%s465 + $0x10] sm:$0xff]
        %v469 = vld [vmem:[%s465 + $0x18] sm:$0xff]
        %v470 = vld [vmem:[%s465 + $0x20] sm:$0xff]
        %v471 = vld [vmem:[%s465 + $0x28] sm:$0xff]
        %v472 = vld [vmem:[%s465 + $0x30] sm:$0xff]
        %v473 = vld [vmem:[%s465 + $0x38] sm:$0xff]
        %v474 = vld [vmem:[%s465 + $0x40] sm:$0xff]
        %v475 = vld [vmem:[%s465 + $0x48] sm:$0xff]
        %v476 = vld [vmem:[%s465 + $0x50] sm:$0xff]
        %v477 = vld [vmem:[%s465 + $0x58] sm:$0xff]
        %v478 = vld [vmem:[%s465 + $0x60] sm:$0xff]
        %v479 = vld [vmem:[%s465 + $0x68] sm:$0xff]
        %v480 = vld [vmem:[%s465 + $0x70] sm:$0xff]
        %v481 = vld [vmem:[%s465 + $0x78] sm:$0xff]
        %482 = vmatprep.subr.mxu0 0.0
        %483 = vmatpush1.msra.mxu0 %v466
        %484 = vmatprep.subr.mxu0 0.0
        %485 = vmatpush1.msra.mxu0 %v467
        %486 = vmatprep.subr.mxu0 0.0
        %487 = vmatpush1.msra.mxu0 %v468
        %488 = vmatprep.subr.mxu0 0.0
        %489 = vmatpush1.msra.mxu0 %v469
        %490 = vmatprep.subr.mxu0 0.0
        %491 = vmatpush1.msra.mxu0 %v470
        %492 = vmatprep.subr.mxu0 0.0
        %493 = vmatpush1.msra.mxu0 %v471
        %494 = vmatprep.subr.mxu0 0.0
        %495 = vmatpush1.msra.mxu0 %v472
        %496 = vmatprep.subr.mxu0 0.0
        %497 = vmatpush1.msra.mxu0 %v473
        %498 = vmatprep.subr.mxu0 0.0
        %499 = vmatpush1.msra.mxu0 %v474
        %500 = vmatprep.subr.mxu0 0.0
        %501 = vmatpush1.msra.mxu0 %v475
        %502 = vmatprep.subr.mxu0 0.0
        %503 = vmatpush1.msra.mxu0 %v476
        %504 = vmatprep.subr.mxu0 0.0
        %505 = vmatpush1.msra.mxu0 %v477
        %506 = vmatprep.subr.mxu0 0.0
        %507 = vmatpush1.msra.mxu0 %v478
        %508 = vmatprep.subr.mxu0 0.0
        %509 = vmatpush1.msra.mxu0 %v479
        %510 = vmatprep.subr.mxu0 0.0
        %511 = vmatpush1.msra.mxu0 %v480
        %512 = vmatprep.subr.mxu0 0.0
        %513 = vmatpush1.msra.mxu0 %v481
        %514 = vmatprep.subr.mxu0 0.0
        %515 = vmatpush1.msra.mxu0 0.0
        %516 = vmatprep.subr.mxu0 0.0
        %517 = vmatpush1.msra.mxu0 0.0
        %518 = vmatprep.subr.mxu0 0.0
        %519 = vmatpush1.msra.mxu0 0.0
        %520 = vmatprep.subr.mxu0 0.0
        %521 = vmatpush1.msra.mxu0 0.0
        %522 = vmatprep.subr.mxu0 0.0
        %523 = vmatpush1.msra.mxu0 0.0
        %524 = vmatprep.subr.mxu0 0.0
        %525 = vmatpush1.msra.mxu0 0.0
        %526 = vmatprep.subr.mxu0 0.0
        %527 = vmatpush1.msra.mxu0 0.0
        %528 = vmatprep.subr.mxu0 0.0
        %529 = vmatpush1.msra.mxu0 0.0
        %530 = vmatprep.subr.mxu0 0.0
        %531 = vmatpush1.msra.mxu0 0.0
        %532 = vmatprep.subr.mxu0 0.0
        %533 = vmatpush1.msra.mxu0 0.0
        %534 = vmatprep.subr.mxu0 0.0
        %535 = vmatpush1.msra.mxu0 0.0
        %536 = vmatprep.subr.mxu0 0.0
        %537 = vmatpush1.msra.mxu0 0.0
        %538 = vmatprep.subr.mxu0 0.0
        %539 = vmatpush1.msra.mxu0 0.0
        %540 = vmatprep.subr.mxu0 0.0
        %541 = vmatpush1.msra.mxu0 0.0
        %542 = vmatprep.subr.mxu0 0.0
        %543 = vmatpush1.msra.mxu0 0.0
        %544 = vmatprep.subr.mxu0 0.0
        %545 = vmatpush1.msra.mxu0 0.0
        %546 = vmatprep.mubr.f32.mxu0 0.0
        %547 = vmatmul.mubr.f32.gmra.mrb[0].mxu0 %v449
        %v548 = vpop.f32.mrb[0].mxu0
        %v549 = vadd.f32 0.0, %v548
        %v550 = vpop.f32.mrb[0].mxu0
        %551 = vmatprep.mubr.f32.mxu0 0.0
        %552 = vmatmul.mubr.f32.gmra.mrb[0].mxu0 %v450
        %v553 = vpop.f32.mrb[0].mxu0
        %v554 = vadd.f32 0.0, %v553
        %v555 = vpop.f32.mrb[0].mxu0
        %556 = vmatprep.mubr.f32.mxu0 0.0
        %557 = vmatmul.mubr.f32.gmra.mrb[0].mxu0 %v451
        %v558 = vpop.f32.mrb[0].mxu0
        %v559 = vadd.f32 0.0, %v558
        %v560 = vpop.f32.mrb[0].mxu0
        %561 = vmatprep.mubr.f32.mxu0 0.0
        %562 = vmatmul.mubr.f32.gmra.mrb[0].mxu0 %v452
        %v563 = vpop.f32.mrb[0].mxu0
        %v564 = vadd.f32 0.0, %v563
        %v565 = vpop.f32.mrb[0].mxu0
        %566 = vmatprep.mubr.f32.mxu0 0.0
        %567 = vmatmul.mubr.f32.gmra.mrb[0].mxu0 %v453
        %v568 = vpop.f32.mrb[0].mxu0
        %v569 = vadd.f32 0.0, %v568
        %v570 = vpop.f32.mrb[0].mxu0
        %571 = vmatprep.mubr.f32.mxu0 0.0
        %572 = vmatmul.mubr.f32.gmra.mrb[0].mxu0 %v454
        %v573 = vpop.f32.mrb[0].mxu0
        %v574 = vadd.f32 0.0, %v573
        %v575 = vpop.f32.mrb[0].mxu0
        %576 = vmatprep.mubr.f32.mxu0 0.0
        %577 = vmatmul.mubr.f32.gmra.mrb[0].mxu0 %v455
        %v578 = vpop.f32.mrb[0].mxu0
        %v579 = vadd.f32 0.0, %v578
        %v580 = vpop.f32.mrb[0].mxu0
        %581 = vmatprep.mubr.f32.mxu0 0.0
        %582 = vmatmul.mubr.f32.gmra.mrb[0].mxu0 %v456
        %v583 = vpop.f32.mrb[0].mxu0
        %v584 = vadd.f32 0.0, %v583
        %v585 = vpop.f32.mrb[0].mxu0
        %586 = vmatprep.mubr.f32.mxu0 0.0
        %587 = vmatmul.mubr.f32.gmra.mrb[0].mxu0 %v457
        %v588 = vpop.f32.mrb[0].mxu0
        %v589 = vadd.f32 0.0, %v588
        %v590 = vpop.f32.mrb[0].mxu0
        %591 = vmatprep.mubr.f32.mxu0 0.0
        %592 = vmatmul.mubr.f32.gmra.mrb[0].mxu0 %v458
        %v593 = vpop.f32.mrb[0].mxu0
        %v594 = vadd.f32 0.0, %v593
        %v595 = vpop.f32.mrb[0].mxu0
        %596 = vmatprep.mubr.f32.mxu0 0.0
        %597 = vmatmul.mubr.f32.gmra.mrb[0].mxu0 %v459
        %v598 = vpop.f32.mrb[0].mxu0
        %v599 = vadd.f32 0.0, %v598
        %v600 = vpop.f32.mrb[0].mxu0
        %601 = vmatprep.mubr.f32.mxu0 0.0
        %602 = vmatmul.mubr.f32.gmra.mrb[0].mxu0 %v460
        %v603 = vpop.f32.mrb[0].mxu0
        %v604 = vadd.f32 0.0, %v603
        %v605 = vpop.f32.mrb[0].mxu0
        %606 = vmatprep.mubr.f32.mxu0 0.0
        %607 = vmatmul.mubr.f32.gmra.mrb[0].mxu0 %v461
        %v608 = vpop.f32.mrb[0].mxu0
        %v609 = vadd.f32 0.0, %v608
        %v610 = vpop.f32.mrb[0].mxu0
        %611 = vmatprep.mubr.f32.mxu0 0.0
        %612 = vmatmul.mubr.f32.gmra.mrb[0].mxu0 %v462
        %v613 = vpop.f32.mrb[0].mxu0
        %v614 = vadd.f32 0.0, %v613
        %v615 = vpop.f32.mrb[0].mxu0
        %616 = vmatprep.mubr.f32.mxu0 0.0
        %617 = vmatmul.mubr.f32.gmra.mrb[0].mxu0 %v463
        %v618 = vpop.f32.mrb[0].mxu0
        %v619 = vadd.f32 0.0, %v618
        %v620 = vpop.f32.mrb[0].mxu0
        %621 = vmatprep.mubr.f32.mxu0 0.0
        %622 = vmatmul.mubr.f32.gmra.mrb[0].mxu0 %v464
        %v623 = vpop.f32.mrb[0].mxu0
        %v624 = vadd.f32 0.0, %v623
        %v625 = vpop.f32.mrb[0].mxu0
        %626 = vdwg.mxu0
        %v627 = vld [vmem:[#allocation3] sm:$0xff]
        %v628 = vld [vmem:[#allocation3 + $0x8] sm:$0xff]
        %v629 = vld [vmem:[#allocation3 + $0x10] sm:$0xff]
        %v630 = vld [vmem:[#allocation3 + $0x18] sm:$0xff]
        %v631 = vld [vmem:[#allocation3 + $0x20] sm:$0xff]
        %v632 = vld [vmem:[#allocation3 + $0x28] sm:$0xff]
        %v633 = vld [vmem:[#allocation3 + $0x30] sm:$0xff]
        %v634 = vld [vmem:[#allocation3 + $0x38] sm:$0xff]
        %v635 = vld [vmem:[#allocation3 + $0x40] sm:$0xff]
        %v636 = vld [vmem:[#allocation3 + $0x48] sm:$0xff]
        %v637 = vld [vmem:[#allocation3 + $0x50] sm:$0xff]
        %v638 = vld [vmem:[#allocation3 + $0x58] sm:$0xff]
        %v639 = vld [vmem:[#allocation3 + $0x60] sm:$0xff]
        %v640 = vld [vmem:[#allocation3 + $0x68] sm:$0xff]
        %v641 = vld [vmem:[#allocation3 + $0x70] sm:$0xff]
        %v642 = vld [vmem:[#allocation3 + $0x78] sm:$0xff]
        %v643 = vadd.f32 %v627, %v549
        %v644 = vadd.f32 %v628, %v554
        %v645 = vadd.f32 %v629, %v559
        %v646 = vadd.f32 %v630, %v564
        %v647 = vadd.f32 %v631, %v569
        %v648 = vadd.f32 %v632, %v574
        %v649 = vadd.f32 %v633, %v579
        %v650 = vadd.f32 %v634, %v584
        %v651 = vadd.f32 %v635, %v589
        %v652 = vadd.f32 %v636, %v594
        %v653 = vadd.f32 %v637, %v599
        %v654 = vadd.f32 %v638, %v604
        %v655 = vadd.f32 %v639, %v609
        %v656 = vadd.f32 %v640, %v614
        %v657 = vadd.f32 %v641, %v619
        %v658 = vadd.f32 %v642, %v624
        %659 = vst [vmem:[#allocation3] sm:$0xff] %v643
        %660 = vst [vmem:[#allocation3 + $0x8] sm:$0xff] %v644
        %661 = vst [vmem:[#allocation3 + $0x10] sm:$0xff] %v645
        %662 = vst [vmem:[#allocation3 + $0x18] sm:$0xff] %v646
        %663 = vst [vmem:[#allocation3 + $0x20] sm:$0xff] %v647
        %664 = vst [vmem:[#allocation3 + $0x28] sm:$0xff] %v648
        %665 = vst [vmem:[#allocation3 + $0x30] sm:$0xff] %v649
        %666 = vst [vmem:[#allocation3 + $0x38] sm:$0xff] %v650
        %667 = vst [vmem:[#allocation3 + $0x40] sm:$0xff] %v651
        %668 = vst [vmem:[#allocation3 + $0x48] sm:$0xff] %v652
        %669 = vst [vmem:[#allocation3 + $0x50] sm:$0xff] %v653
        %670 = vst [vmem:[#allocation3 + $0x58] sm:$0xff] %v654
        %671 = vst [vmem:[#allocation3 + $0x60] sm:$0xff] %v655
        %672 = vst [vmem:[#allocation3 + $0x68] sm:$0xff] %v656
        %673 = vst [vmem:[#allocation3 + $0x70] sm:$0xff] %v657
        %674 = vst [vmem:[#allocation3 + $0x78] sm:$0xff] %v658
        %s675 = sadd.s32 %s252, 576
        %s676 = scalar_lea.vmem [#allocation2], %s675
        %v677 = vld [vmem:[%s676] sm:$0xff]
        %v678 = vld [vmem:[%s676 + $0x8] sm:$0xff]
        %v679 = vld [vmem:[%s676 + $0x10] sm:$0xff]
        %v680 = vld [vmem:[%s676 + $0x18] sm:$0xff]
        %v681 = vld [vmem:[%s676 + $0x20] sm:$0xff]
        %v682 = vld [vmem:[%s676 + $0x28] sm:$0xff]
        %v683 = vld [vmem:[%s676 + $0x30] sm:$0xff]
        %v684 = vld [vmem:[%s676 + $0x38] sm:$0xff]
        %v685 = vld [vmem:[%s676 + $0x40] sm:$0xff]
        %v686 = vld [vmem:[%s676 + $0x48] sm:$0xff]
        %v687 = vld [vmem:[%s676 + $0x50] sm:$0xff]
        %v688 = vld [vmem:[%s676 + $0x58] sm:$0xff]
        %v689 = vld [vmem:[%s676 + $0x60] sm:$0xff]
        %v690 = vld [vmem:[%s676 + $0x68] sm:$0xff]
        %v691 = vld [vmem:[%s676 + $0x70] sm:$0xff]
        %v692 = vld [vmem:[%s676 + $0x78] sm:$0xff]
        %s693 = scalar_lea.vmem %s131, 256 [#allocation5]
        %v694 = vld [vmem:[%s693] sm:$0xff]
        %v695 = vld [vmem:[%s693 + $0x8] sm:$0xff]
        %v696 = vld [vmem:[%s693 + $0x10] sm:$0xff]
        %v697 = vld [vmem:[%s693 + $0x18] sm:$0xff]
        %v698 = vld [vmem:[%s693 + $0x20] sm:$0xff]
        %v699 = vld [vmem:[%s693 + $0x28] sm:$0xff]
        %v700 = vld [vmem:[%s693 + $0x30] sm:$0xff]
        %v701 = vld [vmem:[%s693 + $0x38] sm:$0xff]
        %v702 = vld [vmem:[%s693 + $0x40] sm:$0xff]
        %v703 = vld [vmem:[%s693 + $0x48] sm:$0xff]
        %v704 = vld [vmem:[%s693 + $0x50] sm:$0xff]
        %v705 = vld [vmem:[%s693 + $0x58] sm:$0xff]
        %v706 = vld [vmem:[%s693 + $0x60] sm:$0xff]
        %v707 = vld [vmem:[%s693 + $0x68] sm:$0xff]
        %v708 = vld [vmem:[%s693 + $0x70] sm:$0xff]
        %v709 = vld [vmem:[%s693 + $0x78] sm:$0xff]
        %710 = vmatprep.subr.mxu0 0.0
        %711 = vmatpush1.msra.mxu0 %v694
        %712 = vmatprep.subr.mxu0 0.0
        %713 = vmatpush1.msra.mxu0 %v695
        %714 = vmatprep.subr.mxu0 0.0
        %715 = vmatpush1.msra.mxu0 %v696
        %716 = vmatprep.subr.mxu0 0.0
        %717 = vmatpush1.msra.mxu0 %v697
        %718 = vmatprep.subr.mxu0 0.0
        %719 = vmatpush1.msra.mxu0 %v698
        %720 = vmatprep.subr.mxu0 0.0
        %721 = vmatpush1.msra.mxu0 %v699
        %722 = vmatprep.subr.mxu0 0.0
        %723 = vmatpush1.msra.mxu0 %v700
        %724 = vmatprep.subr.mxu0 0.0
        %725 = vmatpush1.msra.mxu0 %v701
        %726 = vmatprep.subr.mxu0 0.0
        %727 = vmatpush1.msra.mxu0 %v702
        %728 = vmatprep.subr.mxu0 0.0
        %729 = vmatpush1.msra.mxu0 %v703
        %730 = vmatprep.subr.mxu0 0.0
        %731 = vmatpush1.msra.mxu0 %v704
        %732 = vmatprep.subr.mxu0 0.0
        %733 = vmatpush1.msra.mxu0 %v705
        %734 = vmatprep.subr.mxu0 0.0
        %735 = vmatpush1.msra.mxu0 %v706
        %736 = vmatprep.subr.mxu0 0.0
        %737 = vmatpush1.msra.mxu0 %v707
        %738 = vmatprep.subr.mxu0 0.0
        %739 = vmatpush1.msra.mxu0 %v708
        %740 = vmatprep.subr.mxu0 0.0
        %741 = vmatpush1.msra.mxu0 %v709
        %742 = vmatprep.subr.mxu0 0.0
        %743 = vmatpush1.msra.mxu0 0.0
        %744 = vmatprep.subr.mxu0 0.0
        %745 = vmatpush1.msra.mxu0 0.0
        %746 = vmatprep.subr.mxu0 0.0
        %747 = vmatpush1.msra.mxu0 0.0
        %748 = vmatprep.subr.mxu0 0.0
        %749 = vmatpush1.msra.mxu0 0.0
        %750 = vmatprep.subr.mxu0 0.0
        %751 = vmatpush1.msra.mxu0 0.0
        %752 = vmatprep.subr.mxu0 0.0
        %753 = vmatpush1.msra.mxu0 0.0
        %754 = vmatprep.subr.mxu0 0.0
        %755 = vmatpush1.msra.mxu0 0.0
        %756 = vmatprep.subr.mxu0 0.0
        %757 = vmatpush1.msra.mxu0 0.0
        %758 = vmatprep.subr.mxu0 0.0
        %759 = vmatpush1.msra.mxu0 0.0
        %760 = vmatprep.subr.mxu0 0.0
        %761 = vmatpush1.msra.mxu0 0.0
        %762 = vmatprep.subr.mxu0 0.0
        %763 = vmatpush1.msra.mxu0 0.0
        %764 = vmatprep.subr.mxu0 0.0
        %765 = vmatpush1.msra.mxu0 0.0
        %766 = vmatprep.subr.mxu0 0.0
        %767 = vmatpush1.msra.mxu0 0.0
        %768 = vmatprep.subr.mxu0 0.0
        %769 = vmatpush1.msra.mxu0 0.0
        %770 = vmatprep.subr.mxu0 0.0
        %771 = vmatpush1.msra.mxu0 0.0
        %772 = vmatprep.subr.mxu0 0.0
        %773 = vmatpush1.msra.mxu0 0.0
        %774 = vmatprep.mubr.f32.mxu0 0.0
        %775 = vmatmul.mubr.f32.gmra.mrb[0].mxu0 %v677
        %v776 = vpop.f32.mrb[0].mxu0
        %v777 = vadd.f32 0.0, %v776
        %v778 = vpop.f32.mrb[0].mxu0
        %779 = vmatprep.mubr.f32.mxu0 0.0
        %780 = vmatmul.mubr.f32.gmra.mrb[0].mxu0 %v678
        %v781 = vpop.f32.mrb[0].mxu0
        %v782 = vadd.f32 0.0, %v781
        %v783 = vpop.f32.mrb[0].mxu0
        %784 = vmatprep.mubr.f32.mxu0 0.0
        %785 = vmatmul.mubr.f32.gmra.mrb[0].mxu0 %v679
        %v786 = vpop.f32.mrb[0].mxu0
        %v787 = vadd.f32 0.0, %v786
        %v788 = vpop.f32.mrb[0].mxu0
        %789 = vmatprep.mubr.f32.mxu0 0.0
        %790 = vmatmul.mubr.f32.gmra.mrb[0].mxu0 %v680
        %v791 = vpop.f32.mrb[0].mxu0
        %v792 = vadd.f32 0.0, %v791
        %v793 = vpop.f32.mrb[0].mxu0
        %794 = vmatprep.mubr.f32.mxu0 0.0
        %795 = vmatmul.mubr.f32.gmra.mrb[0].mxu0 %v681
        %v796 = vpop.f32.mrb[0].mxu0
        %v797 = vadd.f32 0.0, %v796
        %v798 = vpop.f32.mrb[0].mxu0
        %799 = vmatprep.mubr.f32.mxu0 0.0
        %800 = vmatmul.mubr.f32.gmra.mrb[0].mxu0 %v682
        %v801 = vpop.f32.mrb[0].mxu0
        %v802 = vadd.f32 0.0, %v801
        %v803 = vpop.f32.mrb[0].mxu0
        %804 = vmatprep.mubr.f32.mxu0 0.0
        %805 = vmatmul.mubr.f32.gmra.mrb[0].mxu0 %v683
        %v806 = vpop.f32.mrb[0].mxu0
        %v807 = vadd.f32 0.0, %v806
        %v808 = vpop.f32.mrb[0].mxu0
        %809 = vmatprep.mubr.f32.mxu0 0.0
        %810 = vmatmul.mubr.f32.gmra.mrb[0].mxu0 %v684
        %v811 = vpop.f32.mrb[0].mxu0
        %v812 = vadd.f32 0.0, %v811
        %v813 = vpop.f32.mrb[0].mxu0
        %814 = vmatprep.mubr.f32.mxu0 0.0
        %815 = vmatmul.mubr.f32.gmra.mrb[0].mxu0 %v685
        %v816 = vpop.f32.mrb[0].mxu0
        %v817 = vadd.f32 0.0, %v816
        %v818 = vpop.f32.mrb[0].mxu0
        %819 = vmatprep.mubr.f32.mxu0 0.0
        %820 = vmatmul.mubr.f32.gmra.mrb[0].mxu0 %v686
        %v821 = vpop.f32.mrb[0].mxu0
        %v822 = vadd.f32 0.0, %v821
        %v823 = vpop.f32.mrb[0].mxu0
        %824 = vmatprep.mubr.f32.mxu0 0.0
        %825 = vmatmul.mubr.f32.gmra.mrb[0].mxu0 %v687
        %v826 = vpop.f32.mrb[0].mxu0
        %v827 = vadd.f32 0.0, %v826
        %v828 = vpop.f32.mrb[0].mxu0
        %829 = vmatprep.mubr.f32.mxu0 0.0
        %830 = vmatmul.mubr.f32.gmra.mrb[0].mxu0 %v688
        %v831 = vpop.f32.mrb[0].mxu0
        %v832 = vadd.f32 0.0, %v831
        %v833 = vpop.f32.mrb[0].mxu0
        %834 = vmatprep.mubr.f32.mxu0 0.0
        %835 = vmatmul.mubr.f32.gmra.mrb[0].mxu0 %v689
        %v836 = vpop.f32.mrb[0].mxu0
        %v837 = vadd.f32 0.0, %v836
        %v838 = vpop.f32.mrb[0].mxu0
        %839 = vmatprep.mubr.f32.mxu0 0.0
        %840 = vmatmul.mubr.f32.gmra.mrb[0].mxu0 %v690
        %v841 = vpop.f32.mrb[0].mxu0
        %v842 = vadd.f32 0.0, %v841
        %v843 = vpop.f32.mrb[0].mxu0
        %844 = vmatprep.mubr.f32.mxu0 0.0
        %845 = vmatmul.mubr.f32.gmra.mrb[0].mxu0 %v691
        %v846 = vpop.f32.mrb[0].mxu0
        %v847 = vadd.f32 0.0, %v846
        %v848 = vpop.f32.mrb[0].mxu0
        %849 = vmatprep.mubr.f32.mxu0 0.0
        %850 = vmatmul.mubr.f32.gmra.mrb[0].mxu0 %v692
        %v851 = vpop.f32.mrb[0].mxu0
        %v852 = vadd.f32 0.0, %v851
        %v853 = vpop.f32.mrb[0].mxu0
        %854 = vdwg.mxu0
        %v855 = vld [vmem:[#allocation3] sm:$0xff]
        %v856 = vld [vmem:[#allocation3 + $0x8] sm:$0xff]
        %v857 = vld [vmem:[#allocation3 + $0x10] sm:$0xff]
        %v858 = vld [vmem:[#allocation3 + $0x18] sm:$0xff]
        %v859 = vld [vmem:[#allocation3 + $0x20] sm:$0xff]
        %v860 = vld [vmem:[#allocation3 + $0x28] sm:$0xff]
        %v861 = vld [vmem:[#allocation3 + $0x30] sm:$0xff]
        %v862 = vld [vmem:[#allocation3 + $0x38] sm:$0xff]
        %v863 = vld [vmem:[#allocation3 + $0x40] sm:$0xff]
        %v864 = vld [vmem:[#allocation3 + $0x48] sm:$0xff]
        %v865 = vld [vmem:[#allocation3 + $0x50] sm:$0xff]
        %v866 = vld [vmem:[#allocation3 + $0x58] sm:$0xff]
        %v867 = vld [vmem:[#allocation3 + $0x60] sm:$0xff]
        %v868 = vld [vmem:[#allocation3 + $0x68] sm:$0xff]
        %v869 = vld [vmem:[#allocation3 + $0x70] sm:$0xff]
        %v870 = vld [vmem:[#allocation3 + $0x78] sm:$0xff]
        %v871 = vadd.f32 %v855, %v777
        %v872 = vadd.f32 %v856, %v782
        %v873 = vadd.f32 %v857, %v787
        %v874 = vadd.f32 %v858, %v792
        %v875 = vadd.f32 %v859, %v797
        %v876 = vadd.f32 %v860, %v802
        %v877 = vadd.f32 %v861, %v807
        %v878 = vadd.f32 %v862, %v812
        %v879 = vadd.f32 %v863, %v817
        %v880 = vadd.f32 %v864, %v822
        %v881 = vadd.f32 %v865, %v827
        %v882 = vadd.f32 %v866, %v832
        %v883 = vadd.f32 %v867, %v837
        %v884 = vadd.f32 %v868, %v842
        %v885 = vadd.f32 %v869, %v847
        %v886 = vadd.f32 %v870, %v852
        %887 = vst [vmem:[#allocation3] sm:$0xff] %v871
        %888 = vst [vmem:[#allocation3 + $0x8] sm:$0xff] %v872
        %889 = vst [vmem:[#allocation3 + $0x10] sm:$0xff] %v873
        %890 = vst [vmem:[#allocation3 + $0x18] sm:$0xff] %v874
        %891 = vst [vmem:[#allocation3 + $0x20] sm:$0xff] %v875
        %892 = vst [vmem:[#allocation3 + $0x28] sm:$0xff] %v876
        %893 = vst [vmem:[#allocation3 + $0x30] sm:$0xff] %v877
        %894 = vst [vmem:[#allocation3 + $0x38] sm:$0xff] %v878
        %895 = vst [vmem:[#allocation3 + $0x40] sm:$0xff] %v879
        %896 = vst [vmem:[#allocation3 + $0x48] sm:$0xff] %v880
        %897 = vst [vmem:[#allocation3 + $0x50] sm:$0xff] %v881
        %898 = vst [vmem:[#allocation3 + $0x58] sm:$0xff] %v882
        %899 = vst [vmem:[#allocation3 + $0x60] sm:$0xff] %v883
        %900 = vst [vmem:[#allocation3 + $0x68] sm:$0xff] %v884
        %901 = vst [vmem:[#allocation3 + $0x70] sm:$0xff] %v885
        %902 = vst [vmem:[#allocation3 + $0x78] sm:$0xff] %v886
        %s903 = sadd.s32 %s251, 1
        %s904 = smul.u32 %s903, 16
        %s905 = scalar_lea.vmem [#allocation2], %s904
        %v906 = vld [vmem:[%s905] sm:$0xff]
        %v907 = vld [vmem:[%s905 + $0x8] sm:$0xff]
        %v908 = vld [vmem:[%s905 + $0x10] sm:$0xff]
        %v909 = vld [vmem:[%s905 + $0x18] sm:$0xff]
        %v910 = vld [vmem:[%s905 + $0x20] sm:$0xff]
        %v911 = vld [vmem:[%s905 + $0x28] sm:$0xff]
        %v912 = vld [vmem:[%s905 + $0x30] sm:$0xff]
        %v913 = vld [vmem:[%s905 + $0x38] sm:$0xff]
        %v914 = vld [vmem:[%s905 + $0x40] sm:$0xff]
        %v915 = vld [vmem:[%s905 + $0x48] sm:$0xff]
        %v916 = vld [vmem:[%s905 + $0x50] sm:$0xff]
        %v917 = vld [vmem:[%s905 + $0x58] sm:$0xff]
        %v918 = vld [vmem:[%s905 + $0x60] sm:$0xff]
        %v919 = vld [vmem:[%s905 + $0x68] sm:$0xff]
        %v920 = vld [vmem:[%s905 + $0x70] sm:$0xff]
        %v921 = vld [vmem:[%s905 + $0x78] sm:$0xff]
        %s922 = scalar_lea.vmem %s131, 384 [#allocation5]
        %v923 = vld [vmem:[%s922] sm:$0xff]
        %v924 = vld [vmem:[%s922 + $0x8] sm:$0xff]
        %v925 = vld [vmem:[%s922 + $0x10] sm:$0xff]
        %v926 = vld [vmem:[%s922 + $0x18] sm:$0xff]
        %v927 = vld [vmem:[%s922 + $0x20] sm:$0xff]
        %v928 = vld [vmem:[%s922 + $0x28] sm:$0xff]
        %v929 = vld [vmem:[%s922 + $0x30] sm:$0xff]
        %v930 = vld [vmem:[%s922 + $0x38] sm:$0xff]
        %v931 = vld [vmem:[%s922 + $0x40] sm:$0xff]
        %v932 = vld [vmem:[%s922 + $0x48] sm:$0xff]
        %v933 = vld [vmem:[%s922 + $0x50] sm:$0xff]
        %v934 = vld [vmem:[%s922 + $0x58] sm:$0xff]
        %v935 = vld [vmem:[%s922 + $0x60] sm:$0xff]
        %v936 = vld [vmem:[%s922 + $0x68] sm:$0xff]
        %v937 = vld [vmem:[%s922 + $0x70] sm:$0xff]
        %v938 = vld [vmem:[%s922 + $0x78] sm:$0xff]
        %939 = vmatprep.subr.mxu0 0.0
        %940 = vmatpush1.msra.mxu0 %v923
        %941 = vmatprep.subr.mxu0 0.0
        %942 = vmatpush1.msra.mxu0 %v924
        %943 = vmatprep.subr.mxu0 0.0
        %944 = vmatpush1.msra.mxu0 %v925
        %945 = vmatprep.subr.mxu0 0.0
        %946 = vmatpush1.msra.mxu0 %v926
        %947 = vmatprep.subr.mxu0 0.0
        %948 = vmatpush1.msra.mxu0 %v927
        %949 = vmatprep.subr.mxu0 0.0
        %950 = vmatpush1.msra.mxu0 %v928
        %951 = vmatprep.subr.mxu0 0.0
        %952 = vmatpush1.msra.mxu0 %v929
        %953 = vmatprep.subr.mxu0 0.0
        %954 = vmatpush1.msra.mxu0 %v930
        %955 = vmatprep.subr.mxu0 0.0
        %956 = vmatpush1.msra.mxu0 %v931
        %957 = vmatprep.subr.mxu0 0.0
        %958 = vmatpush1.msra.mxu0 %v932
        %959 = vmatprep.subr.mxu0 0.0
        %960 = vmatpush1.msra.mxu0 %v933
        %961 = vmatprep.subr.mxu0 0.0
        %962 = vmatpush1.msra.mxu0 %v934
        %963 = vmatprep.subr.mxu0 0.0
        %964 = vmatpush1.msra.mxu0 %v935
        %965 = vmatprep.subr.mxu0 0.0
        %966 = vmatpush1.msra.mxu0 %v936
        %967 = vmatprep.subr.mxu0 0.0
        %968 = vmatpush1.msra.mxu0 %v937
        %969 = vmatprep.subr.mxu0 0.0
        %970 = vmatpush1.msra.mxu0 %v938
        %971 = vmatprep.subr.mxu0 0.0
        %972 = vmatpush1.msra.mxu0 0.0
        %973 = vmatprep.subr.mxu0 0.0
        %974 = vmatpush1.msra.mxu0 0.0
        %975 = vmatprep.subr.mxu0 0.0
        %976 = vmatpush1.msra.mxu0 0.0
        %977 = vmatprep.subr.mxu0 0.0
        %978 = vmatpush1.msra.mxu0 0.0
        %979 = vmatprep.subr.mxu0 0.0
        %980 = vmatpush1.msra.mxu0 0.0
        %981 = vmatprep.subr.mxu0 0.0
        %982 = vmatpush1.msra.mxu0 0.0
        %983 = vmatprep.subr.mxu0 0.0
        %984 = vmatpush1.msra.mxu0 0.0
        %985 = vmatprep.subr.mxu0 0.0
        %986 = vmatpush1.msra.mxu0 0.0
        %987 = vmatprep.subr.mxu0 0.0
        %988 = vmatpush1.msra.mxu0 0.0
        %989 = vmatprep.subr.mxu0 0.0
        %990 = vmatpush1.msra.mxu0 0.0
        %991 = vmatprep.subr.mxu0 0.0
        %992 = vmatpush1.msra.mxu0 0.0
        %993 = vmatprep.subr.mxu0 0.0
        %994 = vmatpush1.msra.mxu0 0.0
        %995 = vmatprep.subr.mxu0 0.0
        %996 = vmatpush1.msra.mxu0 0.0
        %997 = vmatprep.subr.mxu0 0.0
        %998 = vmatpush1.msra.mxu0 0.0
        %999 = vmatprep.subr.mxu0 0.0
        %1000 = vmatpush1.msra.mxu0 0.0
        %1001 = vmatprep.subr.mxu0 0.0
        %1002 = vmatpush1.msra.mxu0 0.0
        %1003 = vmatprep.mubr.f32.mxu0 0.0
        %1004 = vmatmul.mubr.f32.gmra.mrb[0].mxu0 %v906
        %v1005 = vpop.f32.mrb[0].mxu0
        %v1006 = vadd.f32 0.0, %v1005
        %v1007 = vpop.f32.mrb[0].mxu0
        %1008 = vmatprep.mubr.f32.mxu0 0.0
        %1009 = vmatmul.mubr.f32.gmra.mrb[0].mxu0 %v907
        %v1010 = vpop.f32.mrb[0].mxu0
        %v1011 = vadd.f32 0.0, %v1010
        %v1012 = vpop.f32.mrb[0].mxu0
        %1013 = vmatprep.mubr.f32.mxu0 0.0
        %1014 = vmatmul.mubr.f32.gmra.mrb[0].mxu0 %v908
        %v1015 = vpop.f32.mrb[0].mxu0
        %v1016 = vadd.f32 0.0, %v1015
        %v1017 = vpop.f32.mrb[0].mxu0
        %1018 = vmatprep.mubr.f32.mxu0 0.0
        %1019 = vmatmul.mubr.f32.gmra.mrb[0].mxu0 %v909
        %v1020 = vpop.f32.mrb[0].mxu0
        %v1021 = vadd.f32 0.0, %v1020
        %v1022 = vpop.f32.mrb[0].mxu0
        %1023 = vmatprep.mubr.f32.mxu0 0.0
        %1024 = vmatmul.mubr.f32.gmra.mrb[0].mxu0 %v910
        %v1025 = vpop.f32.mrb[0].mxu0
        %v1026 = vadd.f32 0.0, %v1025
        %v1027 = vpop.f32.mrb[0].mxu0
        %1028 = vmatprep.mubr.f32.mxu0 0.0
        %1029 = vmatmul.mubr.f32.gmra.mrb[0].mxu0 %v911
        %v1030 = vpop.f32.mrb[0].mxu0
        %v1031 = vadd.f32 0.0, %v1030
        %v1032 = vpop.f32.mrb[0].mxu0
        %1033 = vmatprep.mubr.f32.mxu0 0.0
        %1034 = vmatmul.mubr.f32.gmra.mrb[0].mxu0 %v912
        %v1035 = vpop.f32.mrb[0].mxu0
        %v1036 = vadd.f32 0.0, %v1035
        %v1037 = vpop.f32.mrb[0].mxu0
        %1038 = vmatprep.mubr.f32.mxu0 0.0
        %1039 = vmatmul.mubr.f32.gmra.mrb[0].mxu0 %v913
        %v1040 = vpop.f32.mrb[0].mxu0
        %v1041 = vadd.f32 0.0, %v1040
        %v1042 = vpop.f32.mrb[0].mxu0
        %1043 = vmatprep.mubr.f32.mxu0 0.0
        %1044 = vmatmul.mubr.f32.gmra.mrb[0].mxu0 %v914
        %v1045 = vpop.f32.mrb[0].mxu0
        %v1046 = vadd.f32 0.0, %v1045
        %v1047 = vpop.f32.mrb[0].mxu0
        %1048 = vmatprep.mubr.f32.mxu0 0.0
        %1049 = vmatmul.mubr.f32.gmra.mrb[0].mxu0 %v915
        %v1050 = vpop.f32.mrb[0].mxu0
        %v1051 = vadd.f32 0.0, %v1050
        %v1052 = vpop.f32.mrb[0].mxu0
        %1053 = vmatprep.mubr.f32.mxu0 0.0
        %1054 = vmatmul.mubr.f32.gmra.mrb[0].mxu0 %v916
        %v1055 = vpop.f32.mrb[0].mxu0
        %v1056 = vadd.f32 0.0, %v1055
        %v1057 = vpop.f32.mrb[0].mxu0
        %1058 = vmatprep.mubr.f32.mxu0 0.0
        %1059 = vmatmul.mubr.f32.gmra.mrb[0].mxu0 %v917
        %v1060 = vpop.f32.mrb[0].mxu0
        %v1061 = vadd.f32 0.0, %v1060
        %v1062 = vpop.f32.mrb[0].mxu0
        %1063 = vmatprep.mubr.f32.mxu0 0.0
        %1064 = vmatmul.mubr.f32.gmra.mrb[0].mxu0 %v918
        %v1065 = vpop.f32.mrb[0].mxu0
        %v1066 = vadd.f32 0.0, %v1065
        %v1067 = vpop.f32.mrb[0].mxu0
        %1068 = vmatprep.mubr.f32.mxu0 0.0
        %1069 = vmatmul.mubr.f32.gmra.mrb[0].mxu0 %v919
        %v1070 = vpop.f32.mrb[0].mxu0
        %v1071 = vadd.f32 0.0, %v1070
        %v1072 = vpop.f32.mrb[0].mxu0
        %1073 = vmatprep.mubr.f32.mxu0 0.0
        %1074 = vmatmul.mubr.f32.gmra.mrb[0].mxu0 %v920
        %v1075 = vpop.f32.mrb[0].mxu0
        %v1076 = vadd.f32 0.0, %v1075
        %v1077 = vpop.f32.mrb[0].mxu0
        %1078 = vmatprep.mubr.f32.mxu0 0.0
        %1079 = vmatmul.mubr.f32.gmra.mrb[0].mxu0 %v921
        %v1080 = vpop.f32.mrb[0].mxu0
        %v1081 = vadd.f32 0.0, %v1080
        %v1082 = vpop.f32.mrb[0].mxu0
        %1083 = vdwg.mxu0
        %v1084 = vld [vmem:[#allocation3] sm:$0xff]
        %v1085 = vld [vmem:[#allocation3 + $0x8] sm:$0xff]
        %v1086 = vld [vmem:[#allocation3 + $0x10] sm:$0xff]
        %v1087 = vld [vmem:[#allocation3 + $0x18] sm:$0xff]
        %v1088 = vld [vmem:[#allocation3 + $0x20] sm:$0xff]
        %v1089 = vld [vmem:[#allocation3 + $0x28] sm:$0xff]
        %v1090 = vld [vmem:[#allocation3 + $0x30] sm:$0xff]
        %v1091 = vld [vmem:[#allocation3 + $0x38] sm:$0xff]
        %v1092 = vld [vmem:[#allocation3 + $0x40] sm:$0xff]
        %v1093 = vld [vmem:[#allocation3 + $0x48] sm:$0xff]
        %v1094 = vld [vmem:[#allocation3 + $0x50] sm:$0xff]
        %v1095 = vld [vmem:[#allocation3 + $0x58] sm:$0xff]
        %v1096 = vld [vmem:[#allocation3 + $0x60] sm:$0xff]
        %v1097 = vld [vmem:[#allocation3 + $0x68] sm:$0xff]
        %v1098 = vld [vmem:[#allocation3 + $0x70] sm:$0xff]
        %v1099 = vld [vmem:[#allocation3 + $0x78] sm:$0xff]
        %v1100 = vadd.f32 %v1084, %v1006
        %v1101 = vadd.f32 %v1085, %v1011
        %v1102 = vadd.f32 %v1086, %v1016
        %v1103 = vadd.f32 %v1087, %v1021
        %v1104 = vadd.f32 %v1088, %v1026
        %v1105 = vadd.f32 %v1089, %v1031
        %v1106 = vadd.f32 %v1090, %v1036
        %v1107 = vadd.f32 %v1091, %v1041
        %v1108 = vadd.f32 %v1092, %v1046
        %v1109 = vadd.f32 %v1093, %v1051
        %v1110 = vadd.f32 %v1094, %v1056
        %v1111 = vadd.f32 %v1095, %v1061
        %v1112 = vadd.f32 %v1096, %v1066
        %v1113 = vadd.f32 %v1097, %v1071
        %v1114 = vadd.f32 %v1098, %v1076
        %v1115 = vadd.f32 %v1099, %v1081
        %1116 = vst [vmem:[#allocation3] sm:$0xff] %v1100
        %1117 = vst [vmem:[#allocation3 + $0x8] sm:$0xff] %v1101
        %1118 = vst [vmem:[#allocation3 + $0x10] sm:$0xff] %v1102
        %1119 = vst [vmem:[#allocation3 + $0x18] sm:$0xff] %v1103
        %1120 = vst [vmem:[#allocation3 + $0x20] sm:$0xff] %v1104
        %1121 = vst [vmem:[#allocation3 + $0x28] sm:$0xff] %v1105
        %1122 = vst [vmem:[#allocation3 + $0x30] sm:$0xff] %v1106
        %1123 = vst [vmem:[#allocation3 + $0x38] sm:$0xff] %v1107
        %1124 = vst [vmem:[#allocation3 + $0x40] sm:$0xff] %v1108
        %1125 = vst [vmem:[#allocation3 + $0x48] sm:$0xff] %v1109
        %1126 = vst [vmem:[#allocation3 + $0x50] sm:$0xff] %v1110
        %1127 = vst [vmem:[#allocation3 + $0x58] sm:$0xff] %v1111
        %1128 = vst [vmem:[#allocation3 + $0x60] sm:$0xff] %v1112
        %1129 = vst [vmem:[#allocation3 + $0x68] sm:$0xff] %v1113
        %1130 = vst [vmem:[#allocation3 + $0x70] sm:$0xff] %v1114
        %1131 = vst [vmem:[#allocation3 + $0x78] sm:$0xff] %v1115
        %s1132 = sadd.s32 %s904, 288
        %s1133 = scalar_lea.vmem [#allocation2], %s1132
        %v1134 = vld [vmem:[%s1133] sm:$0xff]
        %v1135 = vld [vmem:[%s1133 + $0x8] sm:$0xff]
        %v1136 = vld [vmem:[%s1133 + $0x10] sm:$0xff]
        %v1137 = vld [vmem:[%s1133 + $0x18] sm:$0xff]
        %v1138 = vld [vmem:[%s1133 + $0x20] sm:$0xff]
        %v1139 = vld [vmem:[%s1133 + $0x28] sm:$0xff]
        %v1140 = vld [vmem:[%s1133 + $0x30] sm:$0xff]
        %v1141 = vld [vmem:[%s1133 + $0x38] sm:$0xff]
        %v1142 = vld [vmem:[%s1133 + $0x40] sm:$0xff]
        %v1143 = vld [vmem:[%s1133 + $0x48] sm:$0xff]
        %v1144 = vld [vmem:[%s1133 + $0x50] sm:$0xff]
        %v1145 = vld [vmem:[%s1133 + $0x58] sm:$0xff]
        %v1146 = vld [vmem:[%s1133 + $0x60] sm:$0xff]
        %v1147 = vld [vmem:[%s1133 + $0x68] sm:$0xff]
        %v1148 = vld [vmem:[%s1133 + $0x70] sm:$0xff]
        %v1149 = vld [vmem:[%s1133 + $0x78] sm:$0xff]
        %s1150 = scalar_lea.vmem %s131, 512 [#allocation5]
        %v1151 = vld [vmem:[%s1150] sm:$0xff]
        %v1152 = vld [vmem:[%s1150 + $0x8] sm:$0xff]
        %v1153 = vld [vmem:[%s1150 + $0x10] sm:$0xff]
        %v1154 = vld [vmem:[%s1150 + $0x18] sm:$0xff]
        %v1155 = vld [vmem:[%s1150 + $0x20] sm:$0xff]
        %v1156 = vld [vmem:[%s1150 + $0x28] sm:$0xff]
        %v1157 = vld [vmem:[%s1150 + $0x30] sm:$0xff]
        %v1158 = vld [vmem:[%s1150 + $0x38] sm:$0xff]
        %v1159 = vld [vmem:[%s1150 + $0x40] sm:$0xff]
        %v1160 = vld [vmem:[%s1150 + $0x48] sm:$0xff]
        %v1161 = vld [vmem:[%s1150 + $0x50] sm:$0xff]
        %v1162 = vld [vmem:[%s1150 + $0x58] sm:$0xff]
        %v1163 = vld [vmem:[%s1150 + $0x60] sm:$0xff]
        %v1164 = vld [vmem:[%s1150 + $0x68] sm:$0xff]
        %v1165 = vld [vmem:[%s1150 + $0x70] sm:$0xff]
        %v1166 = vld [vmem:[%s1150 + $0x78] sm:$0xff]
        %1167 = vmatprep.subr.mxu0 0.0
        %1168 = vmatpush1.msra.mxu0 %v1151
        %1169 = vmatprep.subr.mxu0 0.0
        %1170 = vmatpush1.msra.mxu0 %v1152
        %1171 = vmatprep.subr.mxu0 0.0
        %1172 = vmatpush1.msra.mxu0 %v1153
        %1173 = vmatprep.subr.mxu0 0.0
        %1174 = vmatpush1.msra.mxu0 %v1154
        %1175 = vmatprep.subr.mxu0 0.0
        %1176 = vmatpush1.msra.mxu0 %v1155
        %1177 = vmatprep.subr.mxu0 0.0
        %1178 = vmatpush1.msra.mxu0 %v1156
        %1179 = vmatprep.subr.mxu0 0.0
        %1180 = vmatpush1.msra.mxu0 %v1157
        %1181 = vmatprep.subr.mxu0 0.0
        %1182 = vmatpush1.msra.mxu0 %v1158
        %1183 = vmatprep.subr.mxu0 0.0
        %1184 = vmatpush1.msra.mxu0 %v1159
        %1185 = vmatprep.subr.mxu0 0.0
        %1186 = vmatpush1.msra.mxu0 %v1160
        %1187 = vmatprep.subr.mxu0 0.0
        %1188 = vmatpush1.msra.mxu0 %v1161
        %1189 = vmatprep.subr.mxu0 0.0
        %1190 = vmatpush1.msra.mxu0 %v1162
        %1191 = vmatprep.subr.mxu0 0.0
        %1192 = vmatpush1.msra.mxu0 %v1163
        %1193 = vmatprep.subr.mxu0 0.0
        %1194 = vmatpush1.msra.mxu0 %v1164
        %1195 = vmatprep.subr.mxu0 0.0
        %1196 = vmatpush1.msra.mxu0 %v1165
        %1197 = vmatprep.subr.mxu0 0.0
        %1198 = vmatpush1.msra.mxu0 %v1166
        %1199 = vmatprep.subr.mxu0 0.0
        %1200 = vmatpush1.msra.mxu0 0.0
        %1201 = vmatprep.subr.mxu0 0.0
        %1202 = vmatpush1.msra.mxu0 0.0
        %1203 = vmatprep.subr.mxu0 0.0
        %1204 = vmatpush1.msra.mxu0 0.0
        %1205 = vmatprep.subr.mxu0 0.0
        %1206 = vmatpush1.msra.mxu0 0.0
        %1207 = vmatprep.subr.mxu0 0.0
        %1208 = vmatpush1.msra.mxu0 0.0
        %1209 = vmatprep.subr.mxu0 0.0
        %1210 = vmatpush1.msra.mxu0 0.0
        %1211 = vmatprep.subr.mxu0 0.0
        %1212 = vmatpush1.msra.mxu0 0.0
        %1213 = vmatprep.subr.mxu0 0.0
        %1214 = vmatpush1.msra.mxu0 0.0
        %1215 = vmatprep.subr.mxu0 0.0
        %1216 = vmatpush1.msra.mxu0 0.0
        %1217 = vmatprep.subr.mxu0 0.0
        %1218 = vmatpush1.msra.mxu0 0.0
        %1219 = vmatprep.subr.mxu0 0.0
        %1220 = vmatpush1.msra.mxu0 0.0
        %1221 = vmatprep.subr.mxu0 0.0
        %1222 = vmatpush1.msra.mxu0 0.0
        %1223 = vmatprep.subr.mxu0 0.0
        %1224 = vmatpush1.msra.mxu0 0.0
        %1225 = vmatprep.subr.mxu0 0.0
        %1226 = vmatpush1.msra.mxu0 0.0
        %1227 = vmatprep.subr.mxu0 0.0
        %1228 = vmatpush1.msra.mxu0 0.0
        %1229 = vmatprep.subr.mxu0 0.0
        %1230 = vmatpush1.msra.mxu0 0.0
        %1231 = vmatprep.mubr.f32.mxu0 0.0
        %1232 = vmatmul.mubr.f32.gmra.mrb[0].mxu0 %v1134
        %v1233 = vpop.f32.mrb[0].mxu0
        %v1234 = vadd.f32 0.0, %v1233
        %v1235 = vpop.f32.mrb[0].mxu0
        %1236 = vmatprep.mubr.f32.mxu0 0.0
        %1237 = vmatmul.mubr.f32.gmra.mrb[0].mxu0 %v1135
        %v1238 = vpop.f32.mrb[0].mxu0
        %v1239 = vadd.f32 0.0, %v1238
        %v1240 = vpop.f32.mrb[0].mxu0
        %1241 = vmatprep.mubr.f32.mxu0 0.0
        %1242 = vmatmul.mubr.f32.gmra.mrb[0].mxu0 %v1136
        %v1243 = vpop.f32.mrb[0].mxu0
        %v1244 = vadd.f32 0.0, %v1243
        %v1245 = vpop.f32.mrb[0].mxu0
        %1246 = vmatprep.mubr.f32.mxu0 0.0
        %1247 = vmatmul.mubr.f32.gmra.mrb[0].mxu0 %v1137
        %v1248 = vpop.f32.mrb[0].mxu0
        %v1249 = vadd.f32 0.0, %v1248
        %v1250 = vpop.f32.mrb[0].mxu0
        %1251 = vmatprep.mubr.f32.mxu0 0.0
        %1252 = vmatmul.mubr.f32.gmra.mrb[0].mxu0 %v1138
        %v1253 = vpop.f32.mrb[0].mxu0
        %v1254 = vadd.f32 0.0, %v1253
        %v1255 = vpop.f32.mrb[0].mxu0
        %1256 = vmatprep.mubr.f32.mxu0 0.0
        %1257 = vmatmul.mubr.f32.gmra.mrb[0].mxu0 %v1139
        %v1258 = vpop.f32.mrb[0].mxu0
        %v1259 = vadd.f32 0.0, %v1258
        %v1260 = vpop.f32.mrb[0].mxu0
        %1261 = vmatprep.mubr.f32.mxu0 0.0
        %1262 = vmatmul.mubr.f32.gmra.mrb[0].mxu0 %v1140
        %v1263 = vpop.f32.mrb[0].mxu0
        %v1264 = vadd.f32 0.0, %v1263
        %v1265 = vpop.f32.mrb[0].mxu0
        %1266 = vmatprep.mubr.f32.mxu0 0.0
        %1267 = vmatmul.mubr.f32.gmra.mrb[0].mxu0 %v1141
        %v1268 = vpop.f32.mrb[0].mxu0
        %v1269 = vadd.f32 0.0, %v1268
        %v1270 = vpop.f32.mrb[0].mxu0
        %1271 = vmatprep.mubr.f32.mxu0 0.0
        %1272 = vmatmul.mubr.f32.gmra.mrb[0].mxu0 %v1142
        %v1273 = vpop.f32.mrb[0].mxu0
        %v1274 = vadd.f32 0.0, %v1273
        %v1275 = vpop.f32.mrb[0].mxu0
        %1276 = vmatprep.mubr.f32.mxu0 0.0
        %1277 = vmatmul.mubr.f32.gmra.mrb[0].mxu0 %v1143
        %v1278 = vpop.f32.mrb[0].mxu0
        %v1279 = vadd.f32 0.0, %v1278
        %v1280 = vpop.f32.mrb[0].mxu0
        %1281 = vmatprep.mubr.f32.mxu0 0.0
        %1282 = vmatmul.mubr.f32.gmra.mrb[0].mxu0 %v1144
        %v1283 = vpop.f32.mrb[0].mxu0
        %v1284 = vadd.f32 0.0, %v1283
        %v1285 = vpop.f32.mrb[0].mxu0
        %1286 = vmatprep.mubr.f32.mxu0 0.0
        %1287 = vmatmul.mubr.f32.gmra.mrb[0].mxu0 %v1145
        %v1288 = vpop.f32.mrb[0].mxu0
        %v1289 = vadd.f32 0.0, %v1288
        %v1290 = vpop.f32.mrb[0].mxu0
        %1291 = vmatprep.mubr.f32.mxu0 0.0
        %1292 = vmatmul.mubr.f32.gmra.mrb[0].mxu0 %v1146
        %v1293 = vpop.f32.mrb[0].mxu0
        %v1294 = vadd.f32 0.0, %v1293
        %v1295 = vpop.f32.mrb[0].mxu0
        %1296 = vmatprep.mubr.f32.mxu0 0.0
        %1297 = vmatmul.mubr.f32.gmra.mrb[0].mxu0 %v1147
        %v1298 = vpop.f32.mrb[0].mxu0
        %v1299 = vadd.f32 0.0, %v1298
        %v1300 = vpop.f32.mrb[0].mxu0
        %1301 = vmatprep.mubr.f32.mxu0 0.0
        %1302 = vmatmul.mubr.f32.gmra.mrb[0].mxu0 %v1148
        %v1303 = vpop.f32.mrb[0].mxu0
        %v1304 = vadd.f32 0.0, %v1303
        %v1305 = vpop.f32.mrb[0].mxu0
        %1306 = vmatprep.mubr.f32.mxu0 0.0
        %1307 = vmatmul.mubr.f32.gmra.mrb[0].mxu0 %v1149
        %v1308 = vpop.f32.mrb[0].mxu0
        %v1309 = vadd.f32 0.0, %v1308
        %v1310 = vpop.f32.mrb[0].mxu0
        %1311 = vdwg.mxu0
        %v1312 = vld [vmem:[#allocation3] sm:$0xff]
        %v1313 = vld [vmem:[#allocation3 + $0x8] sm:$0xff]
        %v1314 = vld [vmem:[#allocation3 + $0x10] sm:$0xff]
        %v1315 = vld [vmem:[#allocation3 + $0x18] sm:$0xff]
        %v1316 = vld [vmem:[#allocation3 + $0x20] sm:$0xff]
        %v1317 = vld [vmem:[#allocation3 + $0x28] sm:$0xff]
        %v1318 = vld [vmem:[#allocation3 + $0x30] sm:$0xff]
        %v1319 = vld [vmem:[#allocation3 + $0x38] sm:$0xff]
        %v1320 = vld [vmem:[#allocation3 + $0x40] sm:$0xff]
        %v1321 = vld [vmem:[#allocation3 + $0x48] sm:$0xff]
        %v1322 = vld [vmem:[#allocation3 + $0x50] sm:$0xff]
        %v1323 = vld [vmem:[#allocation3 + $0x58] sm:$0xff]
        %v1324 = vld [vmem:[#allocation3 + $0x60] sm:$0xff]
        %v1325 = vld [vmem:[#allocation3 + $0x68] sm:$0xff]
        %v1326 = vld [vmem:[#allocation3 + $0x70] sm:$0xff]
        %v1327 = vld [vmem:[#allocation3 + $0x78] sm:$0xff]
        %v1328 = vadd.f32 %v1312, %v1234
        %v1329 = vadd.f32 %v1313, %v1239
        %v1330 = vadd.f32 %v1314, %v1244
        %v1331 = vadd.f32 %v1315, %v1249
        %v1332 = vadd.f32 %v1316, %v1254
        %v1333 = vadd.f32 %v1317, %v1259
        %v1334 = vadd.f32 %v1318, %v1264
        %v1335 = vadd.f32 %v1319, %v1269
        %v1336 = vadd.f32 %v1320, %v1274
        %v1337 = vadd.f32 %v1321, %v1279
        %v1338 = vadd.f32 %v1322, %v1284
        %v1339 = vadd.f32 %v1323, %v1289
        %v1340 = vadd.f32 %v1324, %v1294
        %v1341 = vadd.f32 %v1325, %v1299
        %v1342 = vadd.f32 %v1326, %v1304
        %v1343 = vadd.f32 %v1327, %v1309
        %1344 = vst [vmem:[#allocation3] sm:$0xff] %v1328
        %1345 = vst [vmem:[#allocation3 + $0x8] sm:$0xff] %v1329
        %1346 = vst [vmem:[#allocation3 + $0x10] sm:$0xff] %v1330
        %1347 = vst [vmem:[#allocation3 + $0x18] sm:$0xff] %v1331
        %1348 = vst [vmem:[#allocation3 + $0x20] sm:$0xff] %v1332
        %1349 = vst [vmem:[#allocation3 + $0x28] sm:$0xff] %v1333
        %1350 = vst [vmem:[#allocation3 + $0x30] sm:$0xff] %v1334
        %1351 = vst [vmem:[#allocation3 + $0x38] sm:$0xff] %v1335
        %1352 = vst [vmem:[#allocation3 + $0x40] sm:$0xff] %v1336
        %1353 = vst [vmem:[#allocation3 + $0x48] sm:$0xff] %v1337
        %1354 = vst [vmem:[#allocation3 + $0x50] sm:$0xff] %v1338
        %1355 = vst [vmem:[#allocation3 + $0x58] sm:$0xff] %v1339
        %1356 = vst [vmem:[#allocation3 + $0x60] sm:$0xff] %v1340
        %1357 = vst [vmem:[#allocation3 + $0x68] sm:$0xff] %v1341
        %1358 = vst [vmem:[#allocation3 + $0x70] sm:$0xff] %v1342
        %1359 = vst [vmem:[#allocation3 + $0x78] sm:$0xff] %v1343
        %s1360 = sadd.s32 %s904, 576
        %s1361 = scalar_lea.vmem [#allocation2], %s1360
        %v1362 = vld [vmem:[%s1361] sm:$0xff]
        %v1363 = vld [vmem:[%s1361 + $0x8] sm:$0xff]
        %v1364 = vld [vmem:[%s1361 + $0x10] sm:$0xff]
        %v1365 = vld [vmem:[%s1361 + $0x18] sm:$0xff]
        %v1366 = vld [vmem:[%s1361 + $0x20] sm:$0xff]
        %v1367 = vld [vmem:[%s1361 + $0x28] sm:$0xff]
        %v1368 = vld [vmem:[%s1361 + $0x30] sm:$0xff]
        %v1369 = vld [vmem:[%s1361 + $0x38] sm:$0xff]
        %v1370 = vld [vmem:[%s1361 + $0x40] sm:$0xff]
        %v1371 = vld [vmem:[%s1361 + $0x48] sm:$0xff]
        %v1372 = vld [vmem:[%s1361 + $0x50] sm:$0xff]
        %v1373 = vld [vmem:[%s1361 + $0x58] sm:$0xff]
        %v1374 = vld [vmem:[%s1361 + $0x60] sm:$0xff]
        %v1375 = vld [vmem:[%s1361 + $0x68] sm:$0xff]
        %v1376 = vld [vmem:[%s1361 + $0x70] sm:$0xff]
        %v1377 = vld [vmem:[%s1361 + $0x78] sm:$0xff]
        %s1378 = scalar_lea.vmem %s131, 640 [#allocation5]
        %v1379 = vld [vmem:[%s1378] sm:$0xff]
        %v1380 = vld [vmem:[%s1378 + $0x8] sm:$0xff]
        %v1381 = vld [vmem:[%s1378 + $0x10] sm:$0xff]
        %v1382 = vld [vmem:[%s1378 + $0x18] sm:$0xff]
        %v1383 = vld [vmem:[%s1378 + $0x20] sm:$0xff]
        %v1384 = vld [vmem:[%s1378 + $0x28] sm:$0xff]
        %v1385 = vld [vmem:[%s1378 + $0x30] sm:$0xff]
        %v1386 = vld [vmem:[%s1378 + $0x38] sm:$0xff]
        %v1387 = vld [vmem:[%s1378 + $0x40] sm:$0xff]
        %v1388 = vld [vmem:[%s1378 + $0x48] sm:$0xff]
        %v1389 = vld [vmem:[%s1378 + $0x50] sm:$0xff]
        %v1390 = vld [vmem:[%s1378 + $0x58] sm:$0xff]
        %v1391 = vld [vmem:[%s1378 + $0x60] sm:$0xff]
        %v1392 = vld [vmem:[%s1378 + $0x68] sm:$0xff]
        %v1393 = vld [vmem:[%s1378 + $0x70] sm:$0xff]
        %v1394 = vld [vmem:[%s1378 + $0x78] sm:$0xff]
        %1395 = vmatprep.subr.mxu0 0.0
        %1396 = vmatpush1.msra.mxu0 %v1379
        %1397 = vmatprep.subr.mxu0 0.0
        %1398 = vmatpush1.msra.mxu0 %v1380
        %1399 = vmatprep.subr.mxu0 0.0
        %1400 = vmatpush1.msra.mxu0 %v1381
        %1401 = vmatprep.subr.mxu0 0.0
        %1402 = vmatpush1.msra.mxu0 %v1382
        %1403 = vmatprep.subr.mxu0 0.0
        %1404 = vmatpush1.msra.mxu0 %v1383
        %1405 = vmatprep.subr.mxu0 0.0
        %1406 = vmatpush1.msra.mxu0 %v1384
        %1407 = vmatprep.subr.mxu0 0.0
        %1408 = vmatpush1.msra.mxu0 %v1385
        %1409 = vmatprep.subr.mxu0 0.0
        %1410 = vmatpush1.msra.mxu0 %v1386
        %1411 = vmatprep.subr.mxu0 0.0
        %1412 = vmatpush1.msra.mxu0 %v1387
        %1413 = vmatprep.subr.mxu0 0.0
        %1414 = vmatpush1.msra.mxu0 %v1388
        %1415 = vmatprep.subr.mxu0 0.0
        %1416 = vmatpush1.msra.mxu0 %v1389
        %1417 = vmatprep.subr.mxu0 0.0
        %1418 = vmatpush1.msra.mxu0 %v1390
        %1419 = vmatprep.subr.mxu0 0.0
        %1420 = vmatpush1.msra.mxu0 %v1391
        %1421 = vmatprep.subr.mxu0 0.0
        %1422 = vmatpush1.msra.mxu0 %v1392
        %1423 = vmatprep.subr.mxu0 0.0
        %1424 = vmatpush1.msra.mxu0 %v1393
        %1425 = vmatprep.subr.mxu0 0.0
        %1426 = vmatpush1.msra.mxu0 %v1394
        %1427 = vmatprep.subr.mxu0 0.0
        %1428 = vmatpush1.msra.mxu0 0.0
        %1429 = vmatprep.subr.mxu0 0.0
        %1430 = vmatpush1.msra.mxu0 0.0
        %1431 = vmatprep.subr.mxu0 0.0
        %1432 = vmatpush1.msra.mxu0 0.0
        %1433 = vmatprep.subr.mxu0 0.0
        %1434 = vmatpush1.msra.mxu0 0.0
        %1435 = vmatprep.subr.mxu0 0.0
        %1436 = vmatpush1.msra.mxu0 0.0
        %1437 = vmatprep.subr.mxu0 0.0
        %1438 = vmatpush1.msra.mxu0 0.0
        %1439 = vmatprep.subr.mxu0 0.0
        %1440 = vmatpush1.msra.mxu0 0.0
        %1441 = vmatprep.subr.mxu0 0.0
        %1442 = vmatpush1.msra.mxu0 0.0
        %1443 = vmatprep.subr.mxu0 0.0
        %1444 = vmatpush1.msra.mxu0 0.0
        %1445 = vmatprep.subr.mxu0 0.0
        %1446 = vmatpush1.msra.mxu0 0.0
        %1447 = vmatprep.subr.mxu0 0.0
        %1448 = vmatpush1.msra.mxu0 0.0
        %1449 = vmatprep.subr.mxu0 0.0
        %1450 = vmatpush1.msra.mxu0 0.0
        %1451 = vmatprep.subr.mxu0 0.0
        %1452 = vmatpush1.msra.mxu0 0.0
        %1453 = vmatprep.subr.mxu0 0.0
        %1454 = vmatpush1.msra.mxu0 0.0
        %1455 = vmatprep.subr.mxu0 0.0
        %1456 = vmatpush1.msra.mxu0 0.0
        %1457 = vmatprep.subr.mxu0 0.0
        %1458 = vmatpush1.msra.mxu0 0.0
        %1459 = vmatprep.mubr.f32.mxu0 0.0
        %1460 = vmatmul.mubr.f32.gmra.mrb[0].mxu0 %v1362
        %v1461 = vpop.f32.mrb[0].mxu0
        %v1462 = vadd.f32 0.0, %v1461
        %v1463 = vpop.f32.mrb[0].mxu0
        %1464 = vmatprep.mubr.f32.mxu0 0.0
        %1465 = vmatmul.mubr.f32.gmra.mrb[0].mxu0 %v1363
        %v1466 = vpop.f32.mrb[0].mxu0
        %v1467 = vadd.f32 0.0, %v1466
        %v1468 = vpop.f32.mrb[0].mxu0
        %1469 = vmatprep.mubr.f32.mxu0 0.0
        %1470 = vmatmul.mubr.f32.gmra.mrb[0].mxu0 %v1364
        %v1471 = vpop.f32.mrb[0].mxu0
        %v1472 = vadd.f32 0.0, %v1471
        %v1473 = vpop.f32.mrb[0].mxu0
        %1474 = vmatprep.mubr.f32.mxu0 0.0
        %1475 = vmatmul.mubr.f32.gmra.mrb[0].mxu0 %v1365
        %v1476 = vpop.f32.mrb[0].mxu0
        %v1477 = vadd.f32 0.0, %v1476
        %v1478 = vpop.f32.mrb[0].mxu0
        %1479 = vmatprep.mubr.f32.mxu0 0.0
        %1480 = vmatmul.mubr.f32.gmra.mrb[0].mxu0 %v1366
        %v1481 = vpop.f32.mrb[0].mxu0
        %v1482 = vadd.f32 0.0, %v1481
        %v1483 = vpop.f32.mrb[0].mxu0
        %1484 = vmatprep.mubr.f32.mxu0 0.0
        %1485 = vmatmul.mubr.f32.gmra.mrb[0].mxu0 %v1367
        %v1486 = vpop.f32.mrb[0].mxu0
        %v1487 = vadd.f32 0.0, %v1486
        %v1488 = vpop.f32.mrb[0].mxu0
        %1489 = vmatprep.mubr.f32.mxu0 0.0
        %1490 = vmatmul.mubr.f32.gmra.mrb[0].mxu0 %v1368
        %v1491 = vpop.f32.mrb[0].mxu0
        %v1492 = vadd.f32 0.0, %v1491
        %v1493 = vpop.f32.mrb[0].mxu0
        %1494 = vmatprep.mubr.f32.mxu0 0.0
        %1495 = vmatmul.mubr.f32.gmra.mrb[0].mxu0 %v1369
        %v1496 = vpop.f32.mrb[0].mxu0
        %v1497 = vadd.f32 0.0, %v1496
        %v1498 = vpop.f32.mrb[0].mxu0
        %1499 = vmatprep.mubr.f32.mxu0 0.0
        %1500 = vmatmul.mubr.f32.gmra.mrb[0].mxu0 %v1370
        %v1501 = vpop.f32.mrb[0].mxu0
        %v1502 = vadd.f32 0.0, %v1501
        %v1503 = vpop.f32.mrb[0].mxu0
        %1504 = vmatprep.mubr.f32.mxu0 0.0
        %1505 = vmatmul.mubr.f32.gmra.mrb[0].mxu0 %v1371
        %v1506 = vpop.f32.mrb[0].mxu0
        %v1507 = vadd.f32 0.0, %v1506
        %v1508 = vpop.f32.mrb[0].mxu0
        %1509 = vmatprep.mubr.f32.mxu0 0.0
        %1510 = vmatmul.mubr.f32.gmra.mrb[0].mxu0 %v1372
        %v1511 = vpop.f32.mrb[0].mxu0
        %v1512 = vadd.f32 0.0, %v1511
        %v1513 = vpop.f32.mrb[0].mxu0
        %1514 = vmatprep.mubr.f32.mxu0 0.0
        %1515 = vmatmul.mubr.f32.gmra.mrb[0].mxu0 %v1373
        %v1516 = vpop.f32.mrb[0].mxu0
        %v1517 = vadd.f32 0.0, %v1516
        %v1518 = vpop.f32.mrb[0].mxu0
        %1519 = vmatprep.mubr.f32.mxu0 0.0
        %1520 = vmatmul.mubr.f32.gmra.mrb[0].mxu0 %v1374
        %v1521 = vpop.f32.mrb[0].mxu0
        %v1522 = vadd.f32 0.0, %v1521
        %v1523 = vpop.f32.mrb[0].mxu0
        %1524 = vmatprep.mubr.f32.mxu0 0.0
        %1525 = vmatmul.mubr.f32.gmra.mrb[0].mxu0 %v1375
        %v1526 = vpop.f32.mrb[0].mxu0
        %v1527 = vadd.f32 0.0, %v1526
        %v1528 = vpop.f32.mrb[0].mxu0
        %1529 = vmatprep.mubr.f32.mxu0 0.0
        %1530 = vmatmul.mubr.f32.gmra.mrb[0].mxu0 %v1376
        %v1531 = vpop.f32.mrb[0].mxu0
        %v1532 = vadd.f32 0.0, %v1531
        %v1533 = vpop.f32.mrb[0].mxu0
        %1534 = vmatprep.mubr.f32.mxu0 0.0
        %1535 = vmatmul.mubr.f32.gmra.mrb[0].mxu0 %v1377
        %v1536 = vpop.f32.mrb[0].mxu0
        %v1537 = vadd.f32 0.0, %v1536
        %v1538 = vpop.f32.mrb[0].mxu0
        %1539 = vdwg.mxu0
        %v1540 = vld [vmem:[#allocation3] sm:$0xff]
        %v1541 = vld [vmem:[#allocation3 + $0x8] sm:$0xff]
        %v1542 = vld [vmem:[#allocation3 + $0x10] sm:$0xff]
        %v1543 = vld [vmem:[#allocation3 + $0x18] sm:$0xff]
        %v1544 = vld [vmem:[#allocation3 + $0x20] sm:$0xff]
        %v1545 = vld [vmem:[#allocation3 + $0x28] sm:$0xff]
        %v1546 = vld [vmem:[#allocation3 + $0x30] sm:$0xff]
        %v1547 = vld [vmem:[#allocation3 + $0x38] sm:$0xff]
        %v1548 = vld [vmem:[#allocation3 + $0x40] sm:$0xff]
        %v1549 = vld [vmem:[#allocation3 + $0x48] sm:$0xff]
        %v1550 = vld [vmem:[#allocation3 + $0x50] sm:$0xff]
        %v1551 = vld [vmem:[#allocation3 + $0x58] sm:$0xff]
        %v1552 = vld [vmem:[#allocation3 + $0x60] sm:$0xff]
        %v1553 = vld [vmem:[#allocation3 + $0x68] sm:$0xff]
        %v1554 = vld [vmem:[#allocation3 + $0x70] sm:$0xff]
        %v1555 = vld [vmem:[#allocation3 + $0x78] sm:$0xff]
        %v1556 = vadd.f32 %v1540, %v1462
        %v1557 = vadd.f32 %v1541, %v1467
        %v1558 = vadd.f32 %v1542, %v1472
        %v1559 = vadd.f32 %v1543, %v1477
        %v1560 = vadd.f32 %v1544, %v1482
        %v1561 = vadd.f32 %v1545, %v1487
        %v1562 = vadd.f32 %v1546, %v1492
        %v1563 = vadd.f32 %v1547, %v1497
        %v1564 = vadd.f32 %v1548, %v1502
        %v1565 = vadd.f32 %v1549, %v1507
        %v1566 = vadd.f32 %v1550, %v1512
        %v1567 = vadd.f32 %v1551, %v1517
        %v1568 = vadd.f32 %v1552, %v1522
        %v1569 = vadd.f32 %v1553, %v1527
        %v1570 = vadd.f32 %v1554, %v1532
        %v1571 = vadd.f32 %v1555, %v1537
        %1572 = vst [vmem:[#allocation3] sm:$0xff] %v1556
        %1573 = vst [vmem:[#allocation3 + $0x8] sm:$0xff] %v1557
        %1574 = vst [vmem:[#allocation3 + $0x10] sm:$0xff] %v1558
        %1575 = vst [vmem:[#allocation3 + $0x18] sm:$0xff] %v1559
        %1576 = vst [vmem:[#allocation3 + $0x20] sm:$0xff] %v1560
        %1577 = vst [vmem:[#allocation3 + $0x28] sm:$0xff] %v1561
        %1578 = vst [vmem:[#allocation3 + $0x30] sm:$0xff] %v1562
        %1579 = vst [vmem:[#allocation3 + $0x38] sm:$0xff] %v1563
        %1580 = vst [vmem:[#allocation3 + $0x40] sm:$0xff] %v1564
        %1581 = vst [vmem:[#allocation3 + $0x48] sm:$0xff] %v1565
        %1582 = vst [vmem:[#allocation3 + $0x50] sm:$0xff] %v1566
        %1583 = vst [vmem:[#allocation3 + $0x58] sm:$0xff] %v1567
        %1584 = vst [vmem:[#allocation3 + $0x60] sm:$0xff] %v1568
        %1585 = vst [vmem:[#allocation3 + $0x68] sm:$0xff] %v1569
        %1586 = vst [vmem:[#allocation3 + $0x70] sm:$0xff] %v1570
        %1587 = vst [vmem:[#allocation3 + $0x78] sm:$0xff] %v1571
        %s1588 = sadd.s32 %s251, 2
        %s1589 = smul.u32 %s1588, 16
        %s1590 = scalar_lea.vmem [#allocation2], %s1589
        %v1591 = vld [vmem:[%s1590] sm:$0xff]
        %v1592 = vld [vmem:[%s1590 + $0x8] sm:$0xff]
        %v1593 = vld [vmem:[%s1590 + $0x10] sm:$0xff]
        %v1594 = vld [vmem:[%s1590 + $0x18] sm:$0xff]
        %v1595 = vld [vmem:[%s1590 + $0x20] sm:$0xff]
        %v1596 = vld [vmem:[%s1590 + $0x28] sm:$0xff]
        %v1597 = vld [vmem:[%s1590 + $0x30] sm:$0xff]
        %v1598 = vld [vmem:[%s1590 + $0x38] sm:$0xff]
        %v1599 = vld [vmem:[%s1590 + $0x40] sm:$0xff]
        %v1600 = vld [vmem:[%s1590 + $0x48] sm:$0xff]
        %v1601 = vld [vmem:[%s1590 + $0x50] sm:$0xff]
        %v1602 = vld [vmem:[%s1590 + $0x58] sm:$0xff]
        %v1603 = vld [vmem:[%s1590 + $0x60] sm:$0xff]
        %v1604 = vld [vmem:[%s1590 + $0x68] sm:$0xff]
        %v1605 = vld [vmem:[%s1590 + $0x70] sm:$0xff]
        %v1606 = vld [vmem:[%s1590 + $0x78] sm:$0xff]
        %s1607 = scalar_lea.vmem %s131, 768 [#allocation5]
        %v1608 = vld [vmem:[%s1607] sm:$0xff]
        %v1609 = vld [vmem:[%s1607 + $0x8] sm:$0xff]
        %v1610 = vld [vmem:[%s1607 + $0x10] sm:$0xff]
        %v1611 = vld [vmem:[%s1607 + $0x18] sm:$0xff]
        %v1612 = vld [vmem:[%s1607 + $0x20] sm:$0xff]
        %v1613 = vld [vmem:[%s1607 + $0x28] sm:$0xff]
        %v1614 = vld [vmem:[%s1607 + $0x30] sm:$0xff]
        %v1615 = vld [vmem:[%s1607 + $0x38] sm:$0xff]
        %v1616 = vld [vmem:[%s1607 + $0x40] sm:$0xff]
        %v1617 = vld [vmem:[%s1607 + $0x48] sm:$0xff]
        %v1618 = vld [vmem:[%s1607 + $0x50] sm:$0xff]
        %v1619 = vld [vmem:[%s1607 + $0x58] sm:$0xff]
        %v1620 = vld [vmem:[%s1607 + $0x60] sm:$0xff]
        %v1621 = vld [vmem:[%s1607 + $0x68] sm:$0xff]
        %v1622 = vld [vmem:[%s1607 + $0x70] sm:$0xff]
        %v1623 = vld [vmem:[%s1607 + $0x78] sm:$0xff]
        %1624 = vmatprep.subr.mxu0 0.0
        %1625 = vmatpush1.msra.mxu0 %v1608
        %1626 = vmatprep.subr.mxu0 0.0
        %1627 = vmatpush1.msra.mxu0 %v1609
        %1628 = vmatprep.subr.mxu0 0.0
        %1629 = vmatpush1.msra.mxu0 %v1610
        %1630 = vmatprep.subr.mxu0 0.0
        %1631 = vmatpush1.msra.mxu0 %v1611
        %1632 = vmatprep.subr.mxu0 0.0
        %1633 = vmatpush1.msra.mxu0 %v1612
        %1634 = vmatprep.subr.mxu0 0.0
        %1635 = vmatpush1.msra.mxu0 %v1613
        %1636 = vmatprep.subr.mxu0 0.0
        %1637 = vmatpush1.msra.mxu0 %v1614
        %1638 = vmatprep.subr.mxu0 0.0
        %1639 = vmatpush1.msra.mxu0 %v1615
        %1640 = vmatprep.subr.mxu0 0.0
        %1641 = vmatpush1.msra.mxu0 %v1616
        %1642 = vmatprep.subr.mxu0 0.0
        %1643 = vmatpush1.msra.mxu0 %v1617
        %1644 = vmatprep.subr.mxu0 0.0
        %1645 = vmatpush1.msra.mxu0 %v1618
        %1646 = vmatprep.subr.mxu0 0.0
        %1647 = vmatpush1.msra.mxu0 %v1619
        %1648 = vmatprep.subr.mxu0 0.0
        %1649 = vmatpush1.msra.mxu0 %v1620
        %1650 = vmatprep.subr.mxu0 0.0
        %1651 = vmatpush1.msra.mxu0 %v1621
        %1652 = vmatprep.subr.mxu0 0.0
        %1653 = vmatpush1.msra.mxu0 %v1622
        %1654 = vmatprep.subr.mxu0 0.0
        %1655 = vmatpush1.msra.mxu0 %v1623
        %1656 = vmatprep.subr.mxu0 0.0
        %1657 = vmatpush1.msra.mxu0 0.0
        %1658 = vmatprep.subr.mxu0 0.0
        %1659 = vmatpush1.msra.mxu0 0.0
        %1660 = vmatprep.subr.mxu0 0.0
        %1661 = vmatpush1.msra.mxu0 0.0
        %1662 = vmatprep.subr.mxu0 0.0
        %1663 = vmatpush1.msra.mxu0 0.0
        %1664 = vmatprep.subr.mxu0 0.0
        %1665 = vmatpush1.msra.mxu0 0.0
        %1666 = vmatprep.subr.mxu0 0.0
        %1667 = vmatpush1.msra.mxu0 0.0
        %1668 = vmatprep.subr.mxu0 0.0
        %1669 = vmatpush1.msra.mxu0 0.0
        %1670 = vmatprep.subr.mxu0 0.0
        %1671 = vmatpush1.msra.mxu0 0.0
        %1672 = vmatprep.subr.mxu0 0.0
        %1673 = vmatpush1.msra.mxu0 0.0
        %1674 = vmatprep.subr.mxu0 0.0
        %1675 = vmatpush1.msra.mxu0 0.0
        %1676 = vmatprep.subr.mxu0 0.0
        %1677 = vmatpush1.msra.mxu0 0.0
        %1678 = vmatprep.subr.mxu0 0.0
        %1679 = vmatpush1.msra.mxu0 0.0
        %1680 = vmatprep.subr.mxu0 0.0
        %1681 = vmatpush1.msra.mxu0 0.0
        %1682 = vmatprep.subr.mxu0 0.0
        %1683 = vmatpush1.msra.mxu0 0.0
        %1684 = vmatprep.subr.mxu0 0.0
        %1685 = vmatpush1.msra.mxu0 0.0
        %1686 = vmatprep.subr.mxu0 0.0
        %1687 = vmatpush1.msra.mxu0 0.0
        %1688 = vmatprep.mubr.f32.mxu0 0.0
        %1689 = vmatmul.mubr.f32.gmra.mrb[0].mxu0 %v1591
        %v1690 = vpop.f32.mrb[0].mxu0
        %v1691 = vadd.f32 0.0, %v1690
        %v1692 = vpop.f32.mrb[0].mxu0
        %1693 = vmatprep.mubr.f32.mxu0 0.0
        %1694 = vmatmul.mubr.f32.gmra.mrb[0].mxu0 %v1592
        %v1695 = vpop.f32.mrb[0].mxu0
        %v1696 = vadd.f32 0.0, %v1695
        %v1697 = vpop.f32.mrb[0].mxu0
        %1698 = vmatprep.mubr.f32.mxu0 0.0
        %1699 = vmatmul.mubr.f32.gmra.mrb[0].mxu0 %v1593
        %v1700 = vpop.f32.mrb[0].mxu0
        %v1701 = vadd.f32 0.0, %v1700
        %v1702 = vpop.f32.mrb[0].mxu0
        %1703 = vmatprep.mubr.f32.mxu0 0.0
        %1704 = vmatmul.mubr.f32.gmra.mrb[0].mxu0 %v1594
        %v1705 = vpop.f32.mrb[0].mxu0
        %v1706 = vadd.f32 0.0, %v1705
        %v1707 = vpop.f32.mrb[0].mxu0
        %1708 = vmatprep.mubr.f32.mxu0 0.0
        %1709 = vmatmul.mubr.f32.gmra.mrb[0].mxu0 %v1595
        %v1710 = vpop.f32.mrb[0].mxu0
        %v1711 = vadd.f32 0.0, %v1710
        %v1712 = vpop.f32.mrb[0].mxu0
        %1713 = vmatprep.mubr.f32.mxu0 0.0
        %1714 = vmatmul.mubr.f32.gmra.mrb[0].mxu0 %v1596
        %v1715 = vpop.f32.mrb[0].mxu0
        %v1716 = vadd.f32 0.0, %v1715
        %v1717 = vpop.f32.mrb[0].mxu0
        %1718 = vmatprep.mubr.f32.mxu0 0.0
        %1719 = vmatmul.mubr.f32.gmra.mrb[0].mxu0 %v1597
        %v1720 = vpop.f32.mrb[0].mxu0
        %v1721 = vadd.f32 0.0, %v1720
        %v1722 = vpop.f32.mrb[0].mxu0
        %1723 = vmatprep.mubr.f32.mxu0 0.0
        %1724 = vmatmul.mubr.f32.gmra.mrb[0].mxu0 %v1598
        %v1725 = vpop.f32.mrb[0].mxu0
        %v1726 = vadd.f32 0.0, %v1725
        %v1727 = vpop.f32.mrb[0].mxu0
        %1728 = vmatprep.mubr.f32.mxu0 0.0
        %1729 = vmatmul.mubr.f32.gmra.mrb[0].mxu0 %v1599
        %v1730 = vpop.f32.mrb[0].mxu0
        %v1731 = vadd.f32 0.0, %v1730
        %v1732 = vpop.f32.mrb[0].mxu0
        %1733 = vmatprep.mubr.f32.mxu0 0.0
        %1734 = vmatmul.mubr.f32.gmra.mrb[0].mxu0 %v1600
        %v1735 = vpop.f32.mrb[0].mxu0
        %v1736 = vadd.f32 0.0, %v1735
        %v1737 = vpop.f32.mrb[0].mxu0
        %1738 = vmatprep.mubr.f32.mxu0 0.0
        %1739 = vmatmul.mubr.f32.gmra.mrb[0].mxu0 %v1601
        %v1740 = vpop.f32.mrb[0].mxu0
        %v1741 = vadd.f32 0.0, %v1740
        %v1742 = vpop.f32.mrb[0].mxu0
        %1743 = vmatprep.mubr.f32.mxu0 0.0
        %1744 = vmatmul.mubr.f32.gmra.mrb[0].mxu0 %v1602
        %v1745 = vpop.f32.mrb[0].mxu0
        %v1746 = vadd.f32 0.0, %v1745
        %v1747 = vpop.f32.mrb[0].mxu0
        %1748 = vmatprep.mubr.f32.mxu0 0.0
        %1749 = vmatmul.mubr.f32.gmra.mrb[0].mxu0 %v1603
        %v1750 = vpop.f32.mrb[0].mxu0
        %v1751 = vadd.f32 0.0, %v1750
        %v1752 = vpop.f32.mrb[0].mxu0
        %1753 = vmatprep.mubr.f32.mxu0 0.0
        %1754 = vmatmul.mubr.f32.gmra.mrb[0].mxu0 %v1604
        %v1755 = vpop.f32.mrb[0].mxu0
        %v1756 = vadd.f32 0.0, %v1755
        %v1757 = vpop.f32.mrb[0].mxu0
        %1758 = vmatprep.mubr.f32.mxu0 0.0
        %1759 = vmatmul.mubr.f32.gmra.mrb[0].mxu0 %v1605
        %v1760 = vpop.f32.mrb[0].mxu0
        %v1761 = vadd.f32 0.0, %v1760
        %v1762 = vpop.f32.mrb[0].mxu0
        %1763 = vmatprep.mubr.f32.mxu0 0.0
        %1764 = vmatmul.mubr.f32.gmra.mrb[0].mxu0 %v1606
        %v1765 = vpop.f32.mrb[0].mxu0
        %v1766 = vadd.f32 0.0, %v1765
        %v1767 = vpop.f32.mrb[0].mxu0
        %1768 = vdwg.mxu0
        %v1769 = vld [vmem:[#allocation3] sm:$0xff]
        %v1770 = vld [vmem:[#allocation3 + $0x8] sm:$0xff]
        %v1771 = vld [vmem:[#allocation3 + $0x10] sm:$0xff]
        %v1772 = vld [vmem:[#allocation3 + $0x18] sm:$0xff]
        %v1773 = vld [vmem:[#allocation3 + $0x20] sm:$0xff]
        %v1774 = vld [vmem:[#allocation3 + $0x28] sm:$0xff]
        %v1775 = vld [vmem:[#allocation3 + $0x30] sm:$0xff]
        %v1776 = vld [vmem:[#allocation3 + $0x38] sm:$0xff]
        %v1777 = vld [vmem:[#allocation3 + $0x40] sm:$0xff]
        %v1778 = vld [vmem:[#allocation3 + $0x48] sm:$0xff]
        %v1779 = vld [vmem:[#allocation3 + $0x50] sm:$0xff]
        %v1780 = vld [vmem:[#allocation3 + $0x58] sm:$0xff]
        %v1781 = vld [vmem:[#allocation3 + $0x60] sm:$0xff]
        %v1782 = vld [vmem:[#allocation3 + $0x68] sm:$0xff]
        %v1783 = vld [vmem:[#allocation3 + $0x70] sm:$0xff]
        %v1784 = vld [vmem:[#allocation3 + $0x78] sm:$0xff]
        %v1785 = vadd.f32 %v1769, %v1691
        %v1786 = vadd.f32 %v1770, %v1696
        %v1787 = vadd.f32 %v1771, %v1701
        %v1788 = vadd.f32 %v1772, %v1706
        %v1789 = vadd.f32 %v1773, %v1711
        %v1790 = vadd.f32 %v1774, %v1716
        %v1791 = vadd.f32 %v1775, %v1721
        %v1792 = vadd.f32 %v1776, %v1726
        %v1793 = vadd.f32 %v1777, %v1731
        %v1794 = vadd.f32 %v1778, %v1736
        %v1795 = vadd.f32 %v1779, %v1741
        %v1796 = vadd.f32 %v1780, %v1746
        %v1797 = vadd.f32 %v1781, %v1751
        %v1798 = vadd.f32 %v1782, %v1756
        %v1799 = vadd.f32 %v1783, %v1761
        %v1800 = vadd.f32 %v1784, %v1766
        %1801 = vst [vmem:[#allocation3] sm:$0xff] %v1785
        %1802 = vst [vmem:[#allocation3 + $0x8] sm:$0xff] %v1786
        %1803 = vst [vmem:[#allocation3 + $0x10] sm:$0xff] %v1787
        %1804 = vst [vmem:[#allocation3 + $0x18] sm:$0xff] %v1788
        %1805 = vst [vmem:[#allocation3 + $0x20] sm:$0xff] %v1789
        %1806 = vst [vmem:[#allocation3 + $0x28] sm:$0xff] %v1790
        %1807 = vst [vmem:[#allocation3 + $0x30] sm:$0xff] %v1791
        %1808 = vst [vmem:[#allocation3 + $0x38] sm:$0xff] %v1792
        %1809 = vst [vmem:[#allocation3 + $0x40] sm:$0xff] %v1793
        %1810 = vst [vmem:[#allocation3 + $0x48] sm:$0xff] %v1794
        %1811 = vst [vmem:[#allocation3 + $0x50] sm:$0xff] %v1795
        %1812 = vst [vmem:[#allocation3 + $0x58] sm:$0xff] %v1796
        %1813 = vst [vmem:[#allocation3 + $0x60] sm:$0xff] %v1797
        %1814 = vst [vmem:[#allocation3 + $0x68] sm:$0xff] %v1798
        %1815 = vst [vmem:[#allocation3 + $0x70] sm:$0xff] %v1799
        %1816 = vst [vmem:[#allocation3 + $0x78] sm:$0xff] %v1800
        %s1817 = sadd.s32 %s1589, 288
        %s1818 = scalar_lea.vmem [#allocation2], %s1817
        %v1819 = vld [vmem:[%s1818] sm:$0xff]
        %v1820 = vld [vmem:[%s1818 + $0x8] sm:$0xff]
        %v1821 = vld [vmem:[%s1818 + $0x10] sm:$0xff]
        %v1822 = vld [vmem:[%s1818 + $0x18] sm:$0xff]
        %v1823 = vld [vmem:[%s1818 + $0x20] sm:$0xff]
        %v1824 = vld [vmem:[%s1818 + $0x28] sm:$0xff]
        %v1825 = vld [vmem:[%s1818 + $0x30] sm:$0xff]
        %v1826 = vld [vmem:[%s1818 + $0x38] sm:$0xff]
        %v1827 = vld [vmem:[%s1818 + $0x40] sm:$0xff]
        %v1828 = vld [vmem:[%s1818 + $0x48] sm:$0xff]
        %v1829 = vld [vmem:[%s1818 + $0x50] sm:$0xff]
        %v1830 = vld [vmem:[%s1818 + $0x58] sm:$0xff]
        %v1831 = vld [vmem:[%s1818 + $0x60] sm:$0xff]
        %v1832 = vld [vmem:[%s1818 + $0x68] sm:$0xff]
        %v1833 = vld [vmem:[%s1818 + $0x70] sm:$0xff]
        %v1834 = vld [vmem:[%s1818 + $0x78] sm:$0xff]
        %s1835 = scalar_lea.vmem %s131, 896 [#allocation5]
        %v1836 = vld [vmem:[%s1835] sm:$0xff]
        %v1837 = vld [vmem:[%s1835 + $0x8] sm:$0xff]
        %v1838 = vld [vmem:[%s1835 + $0x10] sm:$0xff]
        %v1839 = vld [vmem:[%s1835 + $0x18] sm:$0xff]
        %v1840 = vld [vmem:[%s1835 + $0x20] sm:$0xff]
        %v1841 = vld [vmem:[%s1835 + $0x28] sm:$0xff]
        %v1842 = vld [vmem:[%s1835 + $0x30] sm:$0xff]
        %v1843 = vld [vmem:[%s1835 + $0x38] sm:$0xff]
        %v1844 = vld [vmem:[%s1835 + $0x40] sm:$0xff]
        %v1845 = vld [vmem:[%s1835 + $0x48] sm:$0xff]
        %v1846 = vld [vmem:[%s1835 + $0x50] sm:$0xff]
        %v1847 = vld [vmem:[%s1835 + $0x58] sm:$0xff]
        %v1848 = vld [vmem:[%s1835 + $0x60] sm:$0xff]
        %v1849 = vld [vmem:[%s1835 + $0x68] sm:$0xff]
        %v1850 = vld [vmem:[%s1835 + $0x70] sm:$0xff]
        %v1851 = vld [vmem:[%s1835 + $0x78] sm:$0xff]
        %1852 = vmatprep.subr.mxu0 0.0
        %1853 = vmatpush1.msra.mxu0 %v1836
        %1854 = vmatprep.subr.mxu0 0.0
        %1855 = vmatpush1.msra.mxu0 %v1837
        %1856 = vmatprep.subr.mxu0 0.0
        %1857 = vmatpush1.msra.mxu0 %v1838
        %1858 = vmatprep.subr.mxu0 0.0
        %1859 = vmatpush1.msra.mxu0 %v1839
        %1860 = vmatprep.subr.mxu0 0.0
        %1861 = vmatpush1.msra.mxu0 %v1840
        %1862 = vmatprep.subr.mxu0 0.0
        %1863 = vmatpush1.msra.mxu0 %v1841
        %1864 = vmatprep.subr.mxu0 0.0
        %1865 = vmatpush1.msra.mxu0 %v1842
        %1866 = vmatprep.subr.mxu0 0.0
        %1867 = vmatpush1.msra.mxu0 %v1843
        %1868 = vmatprep.subr.mxu0 0.0
        %1869 = vmatpush1.msra.mxu0 %v1844
        %1870 = vmatprep.subr.mxu0 0.0
        %1871 = vmatpush1.msra.mxu0 %v1845
        %1872 = vmatprep.subr.mxu0 0.0
        %1873 = vmatpush1.msra.mxu0 %v1846
        %1874 = vmatprep.subr.mxu0 0.0
        %1875 = vmatpush1.msra.mxu0 %v1847
        %1876 = vmatprep.subr.mxu0 0.0
        %1877 = vmatpush1.msra.mxu0 %v1848
        %1878 = vmatprep.subr.mxu0 0.0
        %1879 = vmatpush1.msra.mxu0 %v1849
        %1880 = vmatprep.subr.mxu0 0.0
        %1881 = vmatpush1.msra.mxu0 %v1850
        %1882 = vmatprep.subr.mxu0 0.0
        %1883 = vmatpush1.msra.mxu0 %v1851
        %1884 = vmatprep.subr.mxu0 0.0
        %1885 = vmatpush1.msra.mxu0 0.0
        %1886 = vmatprep.subr.mxu0 0.0
        %1887 = vmatpush1.msra.mxu0 0.0
        %1888 = vmatprep.subr.mxu0 0.0
        %1889 = vmatpush1.msra.mxu0 0.0
        %1890 = vmatprep.subr.mxu0 0.0
        %1891 = vmatpush1.msra.mxu0 0.0
        %1892 = vmatprep.subr.mxu0 0.0
        %1893 = vmatpush1.msra.mxu0 0.0
        %1894 = vmatprep.subr.mxu0 0.0
        %1895 = vmatpush1.msra.mxu0 0.0
        %1896 = vmatprep.subr.mxu0 0.0
        %1897 = vmatpush1.msra.mxu0 0.0
        %1898 = vmatprep.subr.mxu0 0.0
        %1899 = vmatpush1.msra.mxu0 0.0
        %1900 = vmatprep.subr.mxu0 0.0
        %1901 = vmatpush1.msra.mxu0 0.0
        %1902 = vmatprep.subr.mxu0 0.0
        %1903 = vmatpush1.msra.mxu0 0.0
        %1904 = vmatprep.subr.mxu0 0.0
        %1905 = vmatpush1.msra.mxu0 0.0
        %1906 = vmatprep.subr.mxu0 0.0
        %1907 = vmatpush1.msra.mxu0 0.0
        %1908 = vmatprep.subr.mxu0 0.0
        %1909 = vmatpush1.msra.mxu0 0.0
        %1910 = vmatprep.subr.mxu0 0.0
        %1911 = vmatpush1.msra.mxu0 0.0
        %1912 = vmatprep.subr.mxu0 0.0
        %1913 = vmatpush1.msra.mxu0 0.0
        %1914 = vmatprep.subr.mxu0 0.0
        %1915 = vmatpush1.msra.mxu0 0.0
        %1916 = vmatprep.mubr.f32.mxu0 0.0
        %1917 = vmatmul.mubr.f32.gmra.mrb[0].mxu0 %v1819
        %v1918 = vpop.f32.mrb[0].mxu0
        %v1919 = vadd.f32 0.0, %v1918
        %v1920 = vpop.f32.mrb[0].mxu0
        %1921 = vmatprep.mubr.f32.mxu0 0.0
        %1922 = vmatmul.mubr.f32.gmra.mrb[0].mxu0 %v1820
        %v1923 = vpop.f32.mrb[0].mxu0
        %v1924 = vadd.f32 0.0, %v1923
        %v1925 = vpop.f32.mrb[0].mxu0
        %1926 = vmatprep.mubr.f32.mxu0 0.0
        %1927 = vmatmul.mubr.f32.gmra.mrb[0].mxu0 %v1821
        %v1928 = vpop.f32.mrb[0].mxu0
        %v1929 = vadd.f32 0.0, %v1928
        %v1930 = vpop.f32.mrb[0].mxu0
        %1931 = vmatprep.mubr.f32.mxu0 0.0
        %1932 = vmatmul.mubr.f32.gmra.mrb[0].mxu0 %v1822
        %v1933 = vpop.f32.mrb[0].mxu0
        %v1934 = vadd.f32 0.0, %v1933
        %v1935 = vpop.f32.mrb[0].mxu0
        %1936 = vmatprep.mubr.f32.mxu0 0.0
        %1937 = vmatmul.mubr.f32.gmra.mrb[0].mxu0 %v1823
        %v1938 = vpop.f32.mrb[0].mxu0
        %v1939 = vadd.f32 0.0, %v1938
        %v1940 = vpop.f32.mrb[0].mxu0
        %1941 = vmatprep.mubr.f32.mxu0 0.0
        %1942 = vmatmul.mubr.f32.gmra.mrb[0].mxu0 %v1824
        %v1943 = vpop.f32.mrb[0].mxu0
        %v1944 = vadd.f32 0.0, %v1943
        %v1945 = vpop.f32.mrb[0].mxu0
        %1946 = vmatprep.mubr.f32.mxu0 0.0
        %1947 = vmatmul.mubr.f32.gmra.mrb[0].mxu0 %v1825
        %v1948 = vpop.f32.mrb[0].mxu0
        %v1949 = vadd.f32 0.0, %v1948
        %v1950 = vpop.f32.mrb[0].mxu0
        %1951 = vmatprep.mubr.f32.mxu0 0.0
        %1952 = vmatmul.mubr.f32.gmra.mrb[0].mxu0 %v1826
        %v1953 = vpop.f32.mrb[0].mxu0
        %v1954 = vadd.f32 0.0, %v1953
        %v1955 = vpop.f32.mrb[0].mxu0
        %1956 = vmatprep.mubr.f32.mxu0 0.0
        %1957 = vmatmul.mubr.f32.gmra.mrb[0].mxu0 %v1827
        %v1958 = vpop.f32.mrb[0].mxu0
        %v1959 = vadd.f32 0.0, %v1958
        %v1960 = vpop.f32.mrb[0].mxu0
        %1961 = vmatprep.mubr.f32.mxu0 0.0
        %1962 = vmatmul.mubr.f32.gmra.mrb[0].mxu0 %v1828
        %v1963 = vpop.f32.mrb[0].mxu0
        %v1964 = vadd.f32 0.0, %v1963
        %v1965 = vpop.f32.mrb[0].mxu0
        %1966 = vmatprep.mubr.f32.mxu0 0.0
        %1967 = vmatmul.mubr.f32.gmra.mrb[0].mxu0 %v1829
        %v1968 = vpop.f32.mrb[0].mxu0
        %v1969 = vadd.f32 0.0, %v1968
        %v1970 = vpop.f32.mrb[0].mxu0
        %1971 = vmatprep.mubr.f32.mxu0 0.0
        %1972 = vmatmul.mubr.f32.gmra.mrb[0].mxu0 %v1830
        %v1973 = vpop.f32.mrb[0].mxu0
        %v1974 = vadd.f32 0.0, %v1973
        %v1975 = vpop.f32.mrb[0].mxu0
        %1976 = vmatprep.mubr.f32.mxu0 0.0
        %1977 = vmatmul.mubr.f32.gmra.mrb[0].mxu0 %v1831
        %v1978 = vpop.f32.mrb[0].mxu0
        %v1979 = vadd.f32 0.0, %v1978
        %v1980 = vpop.f32.mrb[0].mxu0
        %1981 = vmatprep.mubr.f32.mxu0 0.0
        %1982 = vmatmul.mubr.f32.gmra.mrb[0].mxu0 %v1832
        %v1983 = vpop.f32.mrb[0].mxu0
        %v1984 = vadd.f32 0.0, %v1983
        %v1985 = vpop.f32.mrb[0].mxu0
        %1986 = vmatprep.mubr.f32.mxu0 0.0
        %1987 = vmatmul.mubr.f32.gmra.mrb[0].mxu0 %v1833
        %v1988 = vpop.f32.mrb[0].mxu0
        %v1989 = vadd.f32 0.0, %v1988
        %v1990 = vpop.f32.mrb[0].mxu0
        %1991 = vmatprep.mubr.f32.mxu0 0.0
        %1992 = vmatmul.mubr.f32.gmra.mrb[0].mxu0 %v1834
        %v1993 = vpop.f32.mrb[0].mxu0
        %v1994 = vadd.f32 0.0, %v1993
        %v1995 = vpop.f32.mrb[0].mxu0
        %1996 = vdwg.mxu0
        %v1997 = vld [vmem:[#allocation3] sm:$0xff]
        %v1998 = vld [vmem:[#allocation3 + $0x8] sm:$0xff]
        %v1999 = vld [vmem:[#allocation3 + $0x10] sm:$0xff]
        %v2000 = vld [vmem:[#allocation3 + $0x18] sm:$0xff]
        %v2001 = vld [vmem:[#allocation3 + $0x20] sm:$0xff]
        %v2002 = vld [vmem:[#allocation3 + $0x28] sm:$0xff]
        %v2003 = vld [vmem:[#allocation3 + $0x30] sm:$0xff]
        %v2004 = vld [vmem:[#allocation3 + $0x38] sm:$0xff]
        %v2005 = vld [vmem:[#allocation3 + $0x40] sm:$0xff]
        %v2006 = vld [vmem:[#allocation3 + $0x48] sm:$0xff]
        %v2007 = vld [vmem:[#allocation3 + $0x50] sm:$0xff]
        %v2008 = vld [vmem:[#allocation3 + $0x58] sm:$0xff]
        %v2009 = vld [vmem:[#allocation3 + $0x60] sm:$0xff]
        %v2010 = vld [vmem:[#allocation3 + $0x68] sm:$0xff]
        %v2011 = vld [vmem:[#allocation3 + $0x70] sm:$0xff]
        %v2012 = vld [vmem:[#allocation3 + $0x78] sm:$0xff]
        %v2013 = vadd.f32 %v1997, %v1919
        %v2014 = vadd.f32 %v1998, %v1924
        %v2015 = vadd.f32 %v1999, %v1929
        %v2016 = vadd.f32 %v2000, %v1934
        %v2017 = vadd.f32 %v2001, %v1939
        %v2018 = vadd.f32 %v2002, %v1944
        %v2019 = vadd.f32 %v2003, %v1949
        %v2020 = vadd.f32 %v2004, %v1954
        %v2021 = vadd.f32 %v2005, %v1959
        %v2022 = vadd.f32 %v2006, %v1964
        %v2023 = vadd.f32 %v2007, %v1969
        %v2024 = vadd.f32 %v2008, %v1974
        %v2025 = vadd.f32 %v2009, %v1979
        %v2026 = vadd.f32 %v2010, %v1984
        %v2027 = vadd.f32 %v2011, %v1989
        %v2028 = vadd.f32 %v2012, %v1994
        %2029 = vst [vmem:[#allocation3] sm:$0xff] %v2013
        %2030 = vst [vmem:[#allocation3 + $0x8] sm:$0xff] %v2014
        %2031 = vst [vmem:[#allocation3 + $0x10] sm:$0xff] %v2015
        %2032 = vst [vmem:[#allocation3 + $0x18] sm:$0xff] %v2016
        %2033 = vst [vmem:[#allocation3 + $0x20] sm:$0xff] %v2017
        %2034 = vst [vmem:[#allocation3 + $0x28] sm:$0xff] %v2018
        %2035 = vst [vmem:[#allocation3 + $0x30] sm:$0xff] %v2019
        %2036 = vst [vmem:[#allocation3 + $0x38] sm:$0xff] %v2020
        %2037 = vst [vmem:[#allocation3 + $0x40] sm:$0xff] %v2021
        %2038 = vst [vmem:[#allocation3 + $0x48] sm:$0xff] %v2022
        %2039 = vst [vmem:[#allocation3 + $0x50] sm:$0xff] %v2023
        %2040 = vst [vmem:[#allocation3 + $0x58] sm:$0xff] %v2024
        %2041 = vst [vmem:[#allocation3 + $0x60] sm:$0xff] %v2025
        %2042 = vst [vmem:[#allocation3 + $0x68] sm:$0xff] %v2026
        %2043 = vst [vmem:[#allocation3 + $0x70] sm:$0xff] %v2027
        %2044 = vst [vmem:[#allocation3 + $0x78] sm:$0xff] %v2028
        %s2045 = sadd.s32 %s1589, 576
        %s2046 = scalar_lea.vmem [#allocation2], %s2045
        %v2047 = vld [vmem:[%s2046] sm:$0xff]
        %v2048 = vld [vmem:[%s2046 + $0x8] sm:$0xff]
        %v2049 = vld [vmem:[%s2046 + $0x10] sm:$0xff]
        %v2050 = vld [vmem:[%s2046 + $0x18] sm:$0xff]
        %v2051 = vld [vmem:[%s2046 + $0x20] sm:$0xff]
        %v2052 = vld [vmem:[%s2046 + $0x28] sm:$0xff]
        %v2053 = vld [vmem:[%s2046 + $0x30] sm:$0xff]
        %v2054 = vld [vmem:[%s2046 + $0x38] sm:$0xff]
        %v2055 = vld [vmem:[%s2046 + $0x40] sm:$0xff]
        %v2056 = vld [vmem:[%s2046 + $0x48] sm:$0xff]
        %v2057 = vld [vmem:[%s2046 + $0x50] sm:$0xff]
        %v2058 = vld [vmem:[%s2046 + $0x58] sm:$0xff]
        %v2059 = vld [vmem:[%s2046 + $0x60] sm:$0xff]
        %v2060 = vld [vmem:[%s2046 + $0x68] sm:$0xff]
        %v2061 = vld [vmem:[%s2046 + $0x70] sm:$0xff]
        %v2062 = vld [vmem:[%s2046 + $0x78] sm:$0xff]
        %s2063 = scalar_lea.vmem %s131, 1024 [#allocation5]
        %v2064 = vld [vmem:[%s2063] sm:$0xff]
        %v2065 = vld [vmem:[%s2063 + $0x8] sm:$0xff]
        %v2066 = vld [vmem:[%s2063 + $0x10] sm:$0xff]
        %v2067 = vld [vmem:[%s2063 + $0x18] sm:$0xff]
        %v2068 = vld [vmem:[%s2063 + $0x20] sm:$0xff]
        %v2069 = vld [vmem:[%s2063 + $0x28] sm:$0xff]
        %v2070 = vld [vmem:[%s2063 + $0x30] sm:$0xff]
        %v2071 = vld [vmem:[%s2063 + $0x38] sm:$0xff]
        %v2072 = vld [vmem:[%s2063 + $0x40] sm:$0xff]
        %v2073 = vld [vmem:[%s2063 + $0x48] sm:$0xff]
        %v2074 = vld [vmem:[%s2063 + $0x50] sm:$0xff]
        %v2075 = vld [vmem:[%s2063 + $0x58] sm:$0xff]
        %v2076 = vld [vmem:[%s2063 + $0x60] sm:$0xff]
        %v2077 = vld [vmem:[%s2063 + $0x68] sm:$0xff]
        %v2078 = vld [vmem:[%s2063 + $0x70] sm:$0xff]
        %v2079 = vld [vmem:[%s2063 + $0x78] sm:$0xff]
        %2080 = vmatprep.subr.mxu0 0.0
        %2081 = vmatpush1.msra.mxu0 %v2064
        %2082 = vmatprep.subr.mxu0 0.0
        %2083 = vmatpush1.msra.mxu0 %v2065
        %2084 = vmatprep.subr.mxu0 0.0
        %2085 = vmatpush1.msra.mxu0 %v2066
        %2086 = vmatprep.subr.mxu0 0.0
        %2087 = vmatpush1.msra.mxu0 %v2067
        %2088 = vmatprep.subr.mxu0 0.0
        %2089 = vmatpush1.msra.mxu0 %v2068
        %2090 = vmatprep.subr.mxu0 0.0
        %2091 = vmatpush1.msra.mxu0 %v2069
        %2092 = vmatprep.subr.mxu0 0.0
        %2093 = vmatpush1.msra.mxu0 %v2070
        %2094 = vmatprep.subr.mxu0 0.0
        %2095 = vmatpush1.msra.mxu0 %v2071
        %2096 = vmatprep.subr.mxu0 0.0
        %2097 = vmatpush1.msra.mxu0 %v2072
        %2098 = vmatprep.subr.mxu0 0.0
        %2099 = vmatpush1.msra.mxu0 %v2073
        %2100 = vmatprep.subr.mxu0 0.0
        %2101 = vmatpush1.msra.mxu0 %v2074
        %2102 = vmatprep.subr.mxu0 0.0
        %2103 = vmatpush1.msra.mxu0 %v2075
        %2104 = vmatprep.subr.mxu0 0.0
        %2105 = vmatpush1.msra.mxu0 %v2076
        %2106 = vmatprep.subr.mxu0 0.0
        %2107 = vmatpush1.msra.mxu0 %v2077
        %2108 = vmatprep.subr.mxu0 0.0
        %2109 = vmatpush1.msra.mxu0 %v2078
        %2110 = vmatprep.subr.mxu0 0.0
        %2111 = vmatpush1.msra.mxu0 %v2079
        %2112 = vmatprep.subr.mxu0 0.0
        %2113 = vmatpush1.msra.mxu0 0.0
        %2114 = vmatprep.subr.mxu0 0.0
        %2115 = vmatpush1.msra.mxu0 0.0
        %2116 = vmatprep.subr.mxu0 0.0
        %2117 = vmatpush1.msra.mxu0 0.0
        %2118 = vmatprep.subr.mxu0 0.0
        %2119 = vmatpush1.msra.mxu0 0.0
        %2120 = vmatprep.subr.mxu0 0.0
        %2121 = vmatpush1.msra.mxu0 0.0
        %2122 = vmatprep.subr.mxu0 0.0
        %2123 = vmatpush1.msra.mxu0 0.0
        %2124 = vmatprep.subr.mxu0 0.0
        %2125 = vmatpush1.msra.mxu0 0.0
        %2126 = vmatprep.subr.mxu0 0.0
        %2127 = vmatpush1.msra.mxu0 0.0
        %2128 = vmatprep.subr.mxu0 0.0
        %2129 = vmatpush1.msra.mxu0 0.0
        %2130 = vmatprep.subr.mxu0 0.0
        %2131 = vmatpush1.msra.mxu0 0.0
        %2132 = vmatprep.subr.mxu0 0.0
        %2133 = vmatpush1.msra.mxu0 0.0
        %2134 = vmatprep.subr.mxu0 0.0
        %2135 = vmatpush1.msra.mxu0 0.0
        %2136 = vmatprep.subr.mxu0 0.0
        %2137 = vmatpush1.msra.mxu0 0.0
        %2138 = vmatprep.subr.mxu0 0.0
        %2139 = vmatpush1.msra.mxu0 0.0
        %2140 = vmatprep.subr.mxu0 0.0
        %2141 = vmatpush1.msra.mxu0 0.0
        %2142 = vmatprep.subr.mxu0 0.0
        %2143 = vmatpush1.msra.mxu0 0.0
        %2144 = vmatprep.mubr.f32.mxu0 0.0
        %2145 = vmatmul.mubr.f32.gmra.mrb[0].mxu0 %v2047
        %v2146 = vpop.f32.mrb[0].mxu0
        %v2147 = vadd.f32 0.0, %v2146
        %v2148 = vpop.f32.mrb[0].mxu0
        %2149 = vmatprep.mubr.f32.mxu0 0.0
        %2150 = vmatmul.mubr.f32.gmra.mrb[0].mxu0 %v2048
        %v2151 = vpop.f32.mrb[0].mxu0
        %v2152 = vadd.f32 0.0, %v2151
        %v2153 = vpop.f32.mrb[0].mxu0
        %2154 = vmatprep.mubr.f32.mxu0 0.0
        %2155 = vmatmul.mubr.f32.gmra.mrb[0].mxu0 %v2049
        %v2156 = vpop.f32.mrb[0].mxu0
        %v2157 = vadd.f32 0.0, %v2156
        %v2158 = vpop.f32.mrb[0].mxu0
        %2159 = vmatprep.mubr.f32.mxu0 0.0
        %2160 = vmatmul.mubr.f32.gmra.mrb[0].mxu0 %v2050
        %v2161 = vpop.f32.mrb[0].mxu0
        %v2162 = vadd.f32 0.0, %v2161
        %v2163 = vpop.f32.mrb[0].mxu0
        %2164 = vmatprep.mubr.f32.mxu0 0.0
        %2165 = vmatmul.mubr.f32.gmra.mrb[0].mxu0 %v2051
        %v2166 = vpop.f32.mrb[0].mxu0
        %v2167 = vadd.f32 0.0, %v2166
        %v2168 = vpop.f32.mrb[0].mxu0
        %2169 = vmatprep.mubr.f32.mxu0 0.0
        %2170 = vmatmul.mubr.f32.gmra.mrb[0].mxu0 %v2052
        %v2171 = vpop.f32.mrb[0].mxu0
        %v2172 = vadd.f32 0.0, %v2171
        %v2173 = vpop.f32.mrb[0].mxu0
        %2174 = vmatprep.mubr.f32.mxu0 0.0
        %2175 = vmatmul.mubr.f32.gmra.mrb[0].mxu0 %v2053
        %v2176 = vpop.f32.mrb[0].mxu0
        %v2177 = vadd.f32 0.0, %v2176
        %v2178 = vpop.f32.mrb[0].mxu0
        %2179 = vmatprep.mubr.f32.mxu0 0.0
        %2180 = vmatmul.mubr.f32.gmra.mrb[0].mxu0 %v2054
        %v2181 = vpop.f32.mrb[0].mxu0
        %v2182 = vadd.f32 0.0, %v2181
        %v2183 = vpop.f32.mrb[0].mxu0
        %2184 = vmatprep.mubr.f32.mxu0 0.0
        %2185 = vmatmul.mubr.f32.gmra.mrb[0].mxu0 %v2055
        %v2186 = vpop.f32.mrb[0].mxu0
        %v2187 = vadd.f32 0.0, %v2186
        %v2188 = vpop.f32.mrb[0].mxu0
        %2189 = vmatprep.mubr.f32.mxu0 0.0
        %2190 = vmatmul.mubr.f32.gmra.mrb[0].mxu0 %v2056
        %v2191 = vpop.f32.mrb[0].mxu0
        %v2192 = vadd.f32 0.0, %v2191
        %v2193 = vpop.f32.mrb[0].mxu0
        %2194 = vmatprep.mubr.f32.mxu0 0.0
        %2195 = vmatmul.mubr.f32.gmra.mrb[0].mxu0 %v2057
        %v2196 = vpop.f32.mrb[0].mxu0
        %v2197 = vadd.f32 0.0, %v2196
        %v2198 = vpop.f32.mrb[0].mxu0
        %2199 = vmatprep.mubr.f32.mxu0 0.0
        %2200 = vmatmul.mubr.f32.gmra.mrb[0].mxu0 %v2058
        %v2201 = vpop.f32.mrb[0].mxu0
        %v2202 = vadd.f32 0.0, %v2201
        %v2203 = vpop.f32.mrb[0].mxu0
        %2204 = vmatprep.mubr.f32.mxu0 0.0
        %2205 = vmatmul.mubr.f32.gmra.mrb[0].mxu0 %v2059
        %v2206 = vpop.f32.mrb[0].mxu0
        %v2207 = vadd.f32 0.0, %v2206
        %v2208 = vpop.f32.mrb[0].mxu0
        %2209 = vmatprep.mubr.f32.mxu0 0.0
        %2210 = vmatmul.mubr.f32.gmra.mrb[0].mxu0 %v2060
        %v2211 = vpop.f32.mrb[0].mxu0
        %v2212 = vadd.f32 0.0, %v2211
        %v2213 = vpop.f32.mrb[0].mxu0
        %2214 = vmatprep.mubr.f32.mxu0 0.0
        %2215 = vmatmul.mubr.f32.gmra.mrb[0].mxu0 %v2061
        %v2216 = vpop.f32.mrb[0].mxu0
        %v2217 = vadd.f32 0.0, %v2216
        %v2218 = vpop.f32.mrb[0].mxu0
        %2219 = vmatprep.mubr.f32.mxu0 0.0
        %2220 = vmatmul.mubr.f32.gmra.mrb[0].mxu0 %v2062
        %v2221 = vpop.f32.mrb[0].mxu0
        %v2222 = vadd.f32 0.0, %v2221
        %v2223 = vpop.f32.mrb[0].mxu0
        %2224 = vdwg.mxu0
        %v2225 = vld [vmem:[#allocation3] sm:$0xff]
        %v2226 = vld [vmem:[#allocation3 + $0x8] sm:$0xff]
        %v2227 = vld [vmem:[#allocation3 + $0x10] sm:$0xff]
        %v2228 = vld [vmem:[#allocation3 + $0x18] sm:$0xff]
        %v2229 = vld [vmem:[#allocation3 + $0x20] sm:$0xff]
        %v2230 = vld [vmem:[#allocation3 + $0x28] sm:$0xff]
        %v2231 = vld [vmem:[#allocation3 + $0x30] sm:$0xff]
        %v2232 = vld [vmem:[#allocation3 + $0x38] sm:$0xff]
        %v2233 = vld [vmem:[#allocation3 + $0x40] sm:$0xff]
        %v2234 = vld [vmem:[#allocation3 + $0x48] sm:$0xff]
        %v2235 = vld [vmem:[#allocation3 + $0x50] sm:$0xff]
        %v2236 = vld [vmem:[#allocation3 + $0x58] sm:$0xff]
        %v2237 = vld [vmem:[#allocation3 + $0x60] sm:$0xff]
        %v2238 = vld [vmem:[#allocation3 + $0x68] sm:$0xff]
        %v2239 = vld [vmem:[#allocation3 + $0x70] sm:$0xff]
        %v2240 = vld [vmem:[#allocation3 + $0x78] sm:$0xff]
        %v2241 = vadd.f32 %v2225, %v2147
        %v2242 = vadd.f32 %v2226, %v2152
        %v2243 = vadd.f32 %v2227, %v2157
        %v2244 = vadd.f32 %v2228, %v2162
        %v2245 = vadd.f32 %v2229, %v2167
        %v2246 = vadd.f32 %v2230, %v2172
        %v2247 = vadd.f32 %v2231, %v2177
        %v2248 = vadd.f32 %v2232, %v2182
        %v2249 = vadd.f32 %v2233, %v2187
        %v2250 = vadd.f32 %v2234, %v2192
        %v2251 = vadd.f32 %v2235, %v2197
        %v2252 = vadd.f32 %v2236, %v2202
        %v2253 = vadd.f32 %v2237, %v2207
        %v2254 = vadd.f32 %v2238, %v2212
        %v2255 = vadd.f32 %v2239, %v2217
        %v2256 = vadd.f32 %v2240, %v2222
        %2257 = vst [vmem:[#allocation3] sm:$0xff] %v2241
        %2258 = vst [vmem:[#allocation3 + $0x8] sm:$0xff] %v2242
        %2259 = vst [vmem:[#allocation3 + $0x10] sm:$0xff] %v2243
        %2260 = vst [vmem:[#allocation3 + $0x18] sm:$0xff] %v2244
        %2261 = vst [vmem:[#allocation3 + $0x20] sm:$0xff] %v2245
        %2262 = vst [vmem:[#allocation3 + $0x28] sm:$0xff] %v2246
        %2263 = vst [vmem:[#allocation3 + $0x30] sm:$0xff] %v2247
        %2264 = vst [vmem:[#allocation3 + $0x38] sm:$0xff] %v2248
        %2265 = vst [vmem:[#allocation3 + $0x40] sm:$0xff] %v2249
        %2266 = vst [vmem:[#allocation3 + $0x48] sm:$0xff] %v2250
        %2267 = vst [vmem:[#allocation3 + $0x50] sm:$0xff] %v2251
        %2268 = vst [vmem:[#allocation3 + $0x58] sm:$0xff] %v2252
        %2269 = vst [vmem:[#allocation3 + $0x60] sm:$0xff] %v2253
        %2270 = vst [vmem:[#allocation3 + $0x68] sm:$0xff] %v2254
        %2271 = vst [vmem:[#allocation3 + $0x70] sm:$0xff] %v2255
        %2272 = vst [vmem:[#allocation3 + $0x78] sm:$0xff] %v2256
        %v2273 = vld [vmem:[#allocation3] sm:$0xff]
        %v2274 = vld [vmem:[#allocation3 + $0x8] sm:$0xff]
        %v2275 = vld [vmem:[#allocation3 + $0x10] sm:$0xff]
        %v2276 = vld [vmem:[#allocation3 + $0x18] sm:$0xff]
        %v2277 = vld [vmem:[#allocation3 + $0x20] sm:$0xff]
        %v2278 = vld [vmem:[#allocation3 + $0x28] sm:$0xff]
        %v2279 = vld [vmem:[#allocation3 + $0x30] sm:$0xff]
        %v2280 = vld [vmem:[#allocation3 + $0x38] sm:$0xff]
        %v2281 = vld [vmem:[#allocation3 + $0x40] sm:$0xff]
        %v2282 = vld [vmem:[#allocation3 + $0x48] sm:$0xff]
        %v2283 = vld [vmem:[#allocation3 + $0x50] sm:$0xff]
        %v2284 = vld [vmem:[#allocation3 + $0x58] sm:$0xff]
        %v2285 = vld [vmem:[#allocation3 + $0x60] sm:$0xff]
        %v2286 = vld [vmem:[#allocation3 + $0x68] sm:$0xff]
        %v2287 = vld [vmem:[#allocation3 + $0x70] sm:$0xff]
        %v2288 = vld [vmem:[#allocation3 + $0x78] sm:$0xff]
        %2289 = vst [vmem:[%s149] sm:$0xff] %v2273
        %2290 = vst [vmem:[%s149 + $0x8] sm:$0xff] %v2274
        %2291 = vst [vmem:[%s149 + $0x10] sm:$0xff] %v2275
        %2292 = vst [vmem:[%s149 + $0x18] sm:$0xff] %v2276
        %2293 = vst [vmem:[%s149 + $0x20] sm:$0xff] %v2277
        %2294 = vst [vmem:[%s149 + $0x28] sm:$0xff] %v2278
        %2295 = vst [vmem:[%s149 + $0x30] sm:$0xff] %v2279
        %2296 = vst [vmem:[%s149 + $0x38] sm:$0xff] %v2280
        %2297 = vst [vmem:[%s149 + $0x40] sm:$0xff] %v2281
        %2298 = vst [vmem:[%s149 + $0x48] sm:$0xff] %v2282
        %2299 = vst [vmem:[%s149 + $0x50] sm:$0xff] %v2283
        %2300 = vst [vmem:[%s149 + $0x58] sm:$0xff] %v2284
        %2301 = vst [vmem:[%s149 + $0x60] sm:$0xff] %v2285
        %2302 = vst [vmem:[%s149 + $0x68] sm:$0xff] %v2286
        %2303 = vst [vmem:[%s149 + $0x70] sm:$0xff] %v2287
        %2304 = vst [vmem:[%s149 + $0x78] sm:$0xff] %v2288
        %s2305 = sand.u32 %s67, 1
        %s2306 = scalar_lea.sflag [#allocation7], %s2305
        %s2307 = sand.u32 %s67, 1
        %s2308 = smul.addr %s2307, 128
        %s2309 = scalar_lea.vmem [#allocation8], %s2308
        // Predicated region
        $region37: #{tpu_custom_call.1} parent=23 // pred_check
          %p2310 = pneg %p77
        $region38: #{tpu_custom_call.1} parent=23 // pred_check_branch
          %2312 = sbr.rel (%p2310) target = $region40
        $region39: #{tpu_custom_call.1} parent=23 // pred_region
          %s2313 = smul.u32 8, %s24
          %s2315 = ssub.s32 2048, 2048
          %2316 = vsyncadd %s2306, %s2315
          %s2317 = smul.addr %s2313, 2
          %s2318 = smul.addr %s23, 32
          %s2319 = sadd.s32 %s2317, %s2318
          %s2320 = smul.addr %s2319, 128
          %s2321 = scalar_lea.hbm %s2, %s2320
          %s2322 = sshll.u32 %s2309, 4
          %s2323 = int_to_ptr.vmem [resolvable:$true] %s2322
          %2328 = dma.vmem_to_hbm [thread:$0]  %s2323, 2048, %s2321, %s2306, 128, 128, 8
        $region40: #{tpu_custom_call.1} parent=23 // pred_fallthru
          _
      $region24: #{tpu_custom_call.1} parent=5 // pred_fallthru
        _
      %p2329 = scmp.le.s32.totalorder 2, %s14
      // Predicated region
      $region41: #{tpu_custom_call.1} parent=5 // pred_check
        %p2330 = pneg %p2329
      $region42: #{tpu_custom_call.1} parent=5 // pred_check_branch
        %2332 = sbr.rel (%p2330) target = $region44
      $region43: #{tpu_custom_call.1} parent=5 // pred_region
        %s2333 = ssub.s32 %s14, 2
        // Predicated region
        $region45: #{tpu_custom_call.1} parent=43 // pred_check
          %p2334 = pneg %p83
        $region46: #{tpu_custom_call.1} parent=43 // pred_check_branch
          %2336 = sbr.rel (%p2334) target = $region48
        $region47: #{tpu_custom_call.1} parent=43 // pred_region
          %s2337 = sand.u32 %s68, 1
          %s2338 = scalar_lea.sflag [#allocation7], %s2337
          %s2339 = sand.u32 %s68, 1
          %s2340 = smul.addr %s2339, 128
          %s2341 = scalar_lea.vmem [#allocation8], %s2340
          %2342 = dma.done %s2338, 2048
        $region48: #{tpu_custom_call.1} parent=43 // pred_fallthru
          _
      $region44: #{tpu_custom_call.1} parent=5 // pred_fallthru
        _
    $region6: #{tpu_custom_call.1} parent=1 // loop_footer
      %s18 = sadd.s32 1, %s14
    $region7: #{tpu_custom_call.1} parent=1 // loop_footer_branch
      %13 = sbr.rel target = $region3
    $region8: #{tpu_custom_call.1} parent=1 // loop_exit
      _
    %2343 = vsyncpa [#allocation6], 1
    %s2344 = scalar_lea.sflag [#allocation6], 1
    %2345 = vsyncpa %s2344, 1
    %2346 = vsyncpa [#allocation7], 1
    %s2347 = scalar_lea.sflag [#allocation7], 1
    %2348 = vsyncpa %s2347, 1
  %2349 = vsyncmov [#allocation4]
  %s2350 = vpop.sfrf %2349
  %p2351 = scmp.eq.s32.totalorder %s2350, 0
  %p2352 = pneg %p2351
  %2354 = shalt.err (%p2352)
  %s2355 = scalar_lea.sflag [#allocation4], 1
  %2356 = vsyncmov %s2355
  %s2357 = vpop.sfrf %2356
  %p2358 = scmp.eq.s32.totalorder %s2357, 0
  %p2359 = pneg %p2358
  %2361 = shalt.err (%p2359)
  %s2362 = scalar_lea.sflag [#allocation4], 2
  %2363 = vsyncmov %s2362
  %s2364 = vpop.sfrf %2363
  %p2365 = scmp.eq.s32.totalorder %s2364, 0
  %p2366 = pneg %p2365
  %2368 = shalt.err (%p2366)

</llo_original>
